<compile_context>
chip_gen: v5e
topology: v5e:2x2
jax: 0.10.0
libtpu: 0.0.40
codegen_flags: <defaults>
</compile_context>

<pallas_src>
import jax
import jax.numpy as jnp
from jax.experimental import pallas as pl
from jax.experimental.pallas import tpu as pltpu


# --------------------------------------------------------------------------
# Fused kernel: B_TILE batch elements per grid step, all layers in VMEM/vregs.
# --------------------------------------------------------------------------
def _fused_kernel(x_ref, g1_ref, t1_ref, b1_ref, g2_ref, t2_ref, b2_ref,
                  g3_ref, t3_ref, b3_ref, o_ref):
    """x_ref: (B, H0, W0*C0) bf16.  Per layer:
         g: (K*Hout, Hin) bf16          -- stacked shifted zero-insert/pad matrices
         t: (K*Win*Cin, Wout*Cout) bf16 -- all kh slab weights stacked on contraction
         b: (1, Wout*Cout) f32
       o_ref: (B, Hf, Wf*Cc) f32.  Lane layout everywhere: lane = w*C + c."""
    B = x_ref.shape[0]

    def deconv_relu(h_samples, g_ref, t_ref, b_ref):
        # h_samples: B per-sample (Hin, Win*Cin) bf16 arrays.
        wc = h_samples[0].shape[1]
        k = t_ref.shape[0] // wc
        hout = g_ref.shape[0] // k
        g = g_ref[...]
        t = t_ref[...]
        # Per-sample H zero-insertion / padding via the 0/1 matrix G (exact in
        # bf16).  Slab slices start at kh*hout (multiple of 8) -> aligned views.
        # TODO(synk): could move this selection off the MXU via stride-2 stores
        # into a VMEM scratch (review item 7); modest win, structural items first.
        slabs = []
        for hb in h_samples:
            p = jnp.dot(g, hb, preferred_element_type=jnp.float32)
            p = p.astype(jnp.bfloat16)                         # (k*hout, wc)
            slabs.append(jnp.concatenate(
                [p[kh * hout:(kh + 1) * hout, :] for kh in range(k)], axis=1))
        s = jnp.concatenate(slabs, axis=0)                     # (B*hout, k*wc) bf16
        # Single deep MXU matmul per layer, batch folded into the M dimension.
        acc = jnp.dot(s, t, preferred_element_type=jnp.float32)
        return jnp.maximum(acc + b_ref[...], 0.0), hout        # f32 bias + ReLU

    h1, n1 = deconv_relu([x_ref[b] for b in range(B)], g1_ref, t1_ref, b1_ref)
    h1 = h1.astype(jnp.bfloat16)
    h2, n2 = deconv_relu([h1[b * n1:(b + 1) * n1, :] for b in range(B)],
                         g2_ref, t2_ref, b2_ref)
    h2 = h2.astype(jnp.bfloat16)
    h3, n3 = deconv_relu([h2[b * n2:(b + 1) * n2, :] for b in range(B)],
                         g3_ref, t3_ref, b3_ref)               # (B*Hf, Wf*Cc) f32
    for b in range(B):                                         # lane-dense stores
        o_ref[b] = h3[b * n3:(b + 1) * n3, :]
    # TODO(synk): in-kernel NHWC->NCHW permute of h3 skipped (Mosaic reshape that
    # changes the lane dim is lowering-fragile); final transpose stays in XLA.


# --------------------------------------------------------------------------
# One-time weight preparation (hoisted out of the per-forward path).
# --------------------------------------------------------------------------
def _deconv_mats(w, b, *, stride, padding, output_padding, Hin, Win):
    """Build G (K*Hout, Hin), T_big (K*Win*Cin, Wout*Cout), tiled bias.

    w: PyTorch ConvTranspose2d weight, shape (Cin, Cout, K, K).
    """
    Cin, Cout, K, _ = w.shape
    lo = K - 1 - padding
    assert lo >= 0, "supported configs require padding <= kernel_size - 1"
    Hout = (Hin - 1) * stride - 2 * padding + K + output_padding
    Wout = (Win - 1) * stride - 2 * padding + K + output_padding
    Hp = Hout + K - 1

    # Spatially-flipped weights: wf[kh, kw, ci, co] = w[ci, co, K-1-kh, K-1-kw]
    wf = jnp.transpose(w[:, :, ::-1, ::-1], (2, 3, 0, 1))        # (K, K, Cin, Cout)

    # T[kh, w*Cin+ci, q*Cout+co] = wf[kh, lo+stride*w-q, ci, co] (if tap valid);
    # stacked along the contraction dim into one matrix per layer.
    w_idx = jnp.arange(Win)[:, None]
    q_idx = jnp.arange(Wout)[None, :]
    kw = lo + stride * w_idx - q_idx                             # (Win, Wout)
    valid = (kw >= 0) & (kw < K)
    kw_c = jnp.clip(kw, 0, K - 1)
    T = wf[:, kw_c, :, :]                                        # (K, Win, Wout, Cin, Cout)
    T = jnp.where(valid[None, :, :, None, None], T, 0.0)
    T = jnp.transpose(T, (0, 1, 3, 2, 4)).reshape(K, Win * Cin, Wout * Cout)
    T_big = T.reshape(K * Win * Cin, Wout * Cout)

    # F[lo + stride*i, i] = 1 (zero-insertion + padding along H);
    # G stacks the K shifted windows so G@h yields all slabs at aligned offsets.
    F = jnp.zeros((Hp, Hin), jnp.float32)
    F = F.at[lo + stride * jnp.arange(Hin), jnp.arange(Hin)].set(1.0)
    G = jnp.concatenate([F[kh:kh + Hout, :] for kh in range(K)], axis=0)

    bt = jnp.tile(b.astype(jnp.float32), (Wout,)).reshape(1, Wout * Cout)
    return {"G": G.astype(jnp.bfloat16), "T": T_big.astype(jnp.bfloat16),
            "b": bt, "Hout": Hout, "Wout": Wout, "Cout": Cout}


def _pick_b_tile(n, target=8):
    # Batch samples per grid step, keeping >=2 grid steps when possible (v7x has
    # 2 TensorCores) and requiring B_TILE | N.
    cap = max(1, min(target, n // 2 if n >= 2 else 1))
    for bt in range(cap, 0, -1):
        if n % bt == 0:
            return bt
    return 1


def make_hyper_synthesis(params, in_hw, b_tile=8):
    """Precompute all constant matrices once; return a jitted forward fn."""
    H0, W0 = in_hw
    C0 = params["w1"].shape[0]
    l1 = _deconv_mats(params["w1"], params["b1"], stride=2, padding=2,
                      output_padding=1, Hin=H0, Win=W0)
    l2 = _deconv_mats(params["w2"], params["b2"], stride=2, padding=2,
                      output_padding=1, Hin=l1["Hout"], Win=l1["Wout"])
    l3 = _deconv_mats(params["w3"], params["b3"], stride=1, padding=1,
                      output_padding=0, Hin=l2["Hout"], Win=l2["Wout"])
    Hf, Wf, Cc = l3["Hout"], l3["Wout"], l3["Cout"]

    def apply(x_nchw):
        N = x_nchw.shape[0]
        B = _pick_b_tile(N, b_tile)
        # NCHW -> (N, H, W*C) channel-fastest lane layout; bf16 halves input DMA
        # and feeds the bf16-native MXU (accumulation stays f32 in-kernel).
        x = jnp.transpose(x_nchw, (0, 2, 3, 1)).reshape(N, H0, W0 * C0)
        x = x.astype(jnp.bfloat16)

        def const_spec(a):
            return pl.BlockSpec(a.shape, lambda n: (0, 0))

        out = pl.pallas_call(
            _fused_kernel,
            out_shape=jax.ShapeDtypeStruct((N, Hf, Wf * Cc), jnp.float32),
            grid=(N // B,),
            in_specs=[
                pl.BlockSpec((B, H0, W0 * C0), lambda n: (n, 0, 0)),
                const_spec(l1["G"]), const_spec(l1["T"]), const_spec(l1["b"]),
                const_spec(l2["G"]), const_spec(l2["T"]), const_spec(l2["b"]),
                const_spec(l3["G"]), const_spec(l3["T"]), const_spec(l3["b"]),
            ],
            out_specs=pl.BlockSpec((B, Hf, Wf * Cc), lambda n: (n, 0, 0)),
            compiler_params=pltpu.CompilerParams(
                dimension_semantics=("parallel",)),
        )(x, l1["G"], l1["T"], l1["b"],
          l2["G"], l2["T"], l2["b"],
          l3["G"], l3["T"], l3["b"])

        # (N, Hf, Wf*Cc) -> NCHW (single small XLA transpose on the output)
        y = out.reshape(N, Hf, Wf, Cc)
        return jnp.transpose(y, (0, 3, 1, 2))

    return jax.jit(apply)


# --------------------------------------------------------------------------
# Parameter init (PyTorch ConvTranspose2d weight layout: (Cin, Cout, K, K)).
# --------------------------------------------------------------------------
def init_params(key, network_channels, compression_channels):
    ks = jax.random.split(key, 6)

    def w(k, cin, cout, ksz):
        return 0.1 * jax.random.normal(k, (cin, cout, ksz, ksz), jnp.float32)

    def bias(k, cout):
        return 0.05 * jax.random.normal(k, (cout,), jnp.float32)

    nc, cc = network_channels, compression_channels
    return {
        "w1": w(ks[0], nc, nc, 5), "b1": bias(ks[1], nc),
        "w2": w(ks[2], nc, nc, 5), "b2": bias(ks[3], nc),
        "w3": w(ks[4], nc, cc, 3), "b3": bias(ks[5], cc),
    }


# --------------------------------------------------------------------------
# Pure-JAX reference (XLA transposed conv, f32) for validation.
# --------------------------------------------------------------------------
def _deconv_relu_ref(x_nhwc, w, b, *, stride, padding, output_padding):
    K = w.shape[2]
    wf = jnp.transpose(w[:, :, ::-1, ::-1], (2, 3, 0, 1))
    lo = K - 1 - padding
    hi = K - 1 - padding + output_padding
    y = jax.lax.conv_general_dilated(
        x_nhwc, wf, window_strides=(1, 1),
        padding=((lo, hi), (lo, hi)),
        lhs_dilation=(stride, stride),
        dimension_numbers=("NHWC", "HWIO", "NHWC"))
    return jax.nn.relu(y + b[None, None, None, :])


def hyper_synthesis_ref(params, x_nchw):
    x = jnp.transpose(x_nchw, (0, 2, 3, 1))
    x = _deconv_relu_ref(x, params["w1"], params["b1"],
                         stride=2, padding=2, output_padding=1)
    x = _deconv_relu_ref(x, params["w2"], params["b2"],
                         stride=2, padding=2, output_padding=1)
    x = _deconv_relu_ref(x, params["w3"], params["b3"],
                         stride=1, padding=1, output_padding=0)
    return jnp.transpose(x, (0, 3, 1, 2))


if __name__ == "__main__":
    key = jax.random.PRNGKey(0)
    kp, kx = jax.random.split(key)
    network_channels, compression_channels = 4, 8
    params = init_params(kp, network_channels, compression_channels)
    x = jax.random.normal(kx, (8, network_channels, 8, 8), jnp.float32)  # NCHW

    forward = make_hyper_synthesis(params, in_hw=(8, 8))  # constants hoisted once
    out = jax.block_until_ready(forward(x))               # B_TILE=4, grid=(2,)
    ref = jax.block_until_ready(hyper_synthesis_ref(params, x))

    assert out.shape == (8, compression_channels, 32, 32), out.shape
    err = float(jnp.max(jnp.abs(out - ref)))
    scale = float(jnp.max(jnp.abs(ref)))
    assert err <= 5e-2 * max(1.0, scale), (err, scale)     # bf16 MXU tolerance
    print("KERNEL_OK")
</pallas_src>

<mosaic_0001>
module attributes {stable_mosaic.version = 11 : i64} {
  func.func @_fused_kernel(%arg0: i32, %arg1: memref<4x8x32xbf16, #tpu.memory_space<vmem>>, %arg2: memref<80x8xbf16, #tpu.memory_space<vmem>>, %arg3: memref<160x64xbf16, #tpu.memory_space<vmem>>, %arg4: memref<1x64xf32, #tpu.memory_space<vmem>>, %arg5: memref<160x16xbf16, #tpu.memory_space<vmem>>, %arg6: memref<320x128xbf16, #tpu.memory_space<vmem>>, %arg7: memref<1x128xf32, #tpu.memory_space<vmem>>, %arg8: memref<96x32xbf16, #tpu.memory_space<vmem>>, %arg9: memref<384x256xbf16, #tpu.memory_space<vmem>>, %arg10: memref<1x256xf32, #tpu.memory_space<vmem>>, %arg11: memref<4x32x256xf32, #tpu.memory_space<vmem>>) attributes {dimension_semantics = [#tpu.dimension_semantics<parallel>], iteration_bounds = array<i64: 2>, scalar_prefetch = 0 : i64, scratch_operands = 0 : i64, tpu.core_type = #tpu.core_type<tc>, window_params = [{transform_indices = @transform_0, window_bounds = array<i64: 4, 8, 32>}, {pipeline_mode = #tpu.pipeline_mode<synchronous>, transform_indices = @transform_1, window_bounds = array<i64: 80, 8>}, {pipeline_mode = #tpu.pipeline_mode<synchronous>, transform_indices = @transform_2, window_bounds = array<i64: 160, 64>}, {pipeline_mode = #tpu.pipeline_mode<synchronous>, transform_indices = @transform_3, window_bounds = array<i64: 1, 64>}, {pipeline_mode = #tpu.pipeline_mode<synchronous>, transform_indices = @transform_4, window_bounds = array<i64: 160, 16>}, {pipeline_mode = #tpu.pipeline_mode<synchronous>, transform_indices = @transform_5, window_bounds = array<i64: 320, 128>}, {pipeline_mode = #tpu.pipeline_mode<synchronous>, transform_indices = @transform_6, window_bounds = array<i64: 1, 128>}, {pipeline_mode = #tpu.pipeline_mode<synchronous>, transform_indices = @transform_7, window_bounds = array<i64: 96, 32>}, {pipeline_mode = #tpu.pipeline_mode<synchronous>, transform_indices = @transform_8, window_bounds = array<i64: 384, 256>}, {pipeline_mode = #tpu.pipeline_mode<synchronous>, transform_indices = @transform_9, window_bounds = array<i64: 1, 256>}, {transform_indices = @transform_10, window_bounds = array<i64: 4, 32, 256>}]} {
    %c0 = arith.constant 0 : index
    %c0_0 = arith.constant 0 : index
    %c0_1 = arith.constant 0 : index
    %0 = vector.load %arg1[%c0, %c0_0, %c0_1] : memref<4x8x32xbf16, #tpu.memory_space<vmem>>, vector<1x8x32xbf16>
    %1 = vector.shape_cast %0 : vector<1x8x32xbf16> to vector<8x32xbf16>
    %c1 = arith.constant 1 : index
    %c0_2 = arith.constant 0 : index
    %c0_3 = arith.constant 0 : index
    %2 = vector.load %arg1[%c1, %c0_2, %c0_3] : memref<4x8x32xbf16, #tpu.memory_space<vmem>>, vector<1x8x32xbf16>
    %3 = vector.shape_cast %2 : vector<1x8x32xbf16> to vector<8x32xbf16>
    %c2 = arith.constant 2 : index
    %c0_4 = arith.constant 0 : index
    %c0_5 = arith.constant 0 : index
    %4 = vector.load %arg1[%c2, %c0_4, %c0_5] : memref<4x8x32xbf16, #tpu.memory_space<vmem>>, vector<1x8x32xbf16>
    %5 = vector.shape_cast %4 : vector<1x8x32xbf16> to vector<8x32xbf16>
    %c3 = arith.constant 3 : index
    %c0_6 = arith.constant 0 : index
    %c0_7 = arith.constant 0 : index
    %6 = vector.load %arg1[%c3, %c0_6, %c0_7] : memref<4x8x32xbf16, #tpu.memory_space<vmem>>, vector<1x8x32xbf16>
    %7 = vector.shape_cast %6 : vector<1x8x32xbf16> to vector<8x32xbf16>
    %c0_8 = arith.constant 0 : index
    %c0_9 = arith.constant 0 : index
    %8 = vector.load %arg2[%c0_8, %c0_9] : memref<80x8xbf16, #tpu.memory_space<vmem>>, vector<80x8xbf16>
    %c0_10 = arith.constant 0 : index
    %c0_11 = arith.constant 0 : index
    %9 = vector.load %arg3[%c0_10, %c0_11] : memref<160x64xbf16, #tpu.memory_space<vmem>>, vector<160x64xbf16>
    %cst = arith.constant dense<0.000000e+00> : vector<80x32xf32>
    %10 = tpu.matmul %8, %1, %cst {dimension_numbers = #tpu.dot_dimension_numbers<[1], [0], [0], [1], [0, 0, 1, 1], [], []>} : vector<80x8xbf16>, vector<8x32xbf16>, vector<80x32xf32> -> vector<80x32xf32>
    %11 = arith.truncf %10 : vector<80x32xf32> to vector<80x32xbf16>
    %12 = vector.extract_strided_slice %11 {offsets = [0, 0], sizes = [16, 32], strides = [1, 1]} : vector<80x32xbf16> to vector<16x32xbf16>
    %13 = vector.extract_strided_slice %11 {offsets = [16, 0], sizes = [16, 32], strides = [1, 1]} : vector<80x32xbf16> to vector<16x32xbf16>
    %14 = vector.extract_strided_slice %11 {offsets = [32, 0], sizes = [16, 32], strides = [1, 1]} : vector<80x32xbf16> to vector<16x32xbf16>
    %15 = vector.extract_strided_slice %11 {offsets = [48, 0], sizes = [16, 32], strides = [1, 1]} : vector<80x32xbf16> to vector<16x32xbf16>
    %16 = vector.extract_strided_slice %11 {offsets = [64, 0], sizes = [16, 32], strides = [1, 1]} : vector<80x32xbf16> to vector<16x32xbf16>
    %17 = tpu.concatenate %12, %13, %14, %15, %16 in 1 : vector<16x32xbf16>, vector<16x32xbf16>, vector<16x32xbf16>, vector<16x32xbf16>, vector<16x32xbf16> -> vector<16x160xbf16>
    %cst_12 = arith.constant dense<0.000000e+00> : vector<80x32xf32>
    %18 = tpu.matmul %8, %3, %cst_12 {dimension_numbers = #tpu.dot_dimension_numbers<[1], [0], [0], [1], [0, 0, 1, 1], [], []>} : vector<80x8xbf16>, vector<8x32xbf16>, vector<80x32xf32> -> vector<80x32xf32>
    %19 = arith.truncf %18 : vector<80x32xf32> to vector<80x32xbf16>
    %20 = vector.extract_strided_slice %19 {offsets = [0, 0], sizes = [16, 32], strides = [1, 1]} : vector<80x32xbf16> to vector<16x32xbf16>
    %21 = vector.extract_strided_slice %19 {offsets = [16, 0], sizes = [16, 32], strides = [1, 1]} : vector<80x32xbf16> to vector<16x32xbf16>
    %22 = vector.extract_strided_slice %19 {offsets = [32, 0], sizes = [16, 32], strides = [1, 1]} : vector<80x32xbf16> to vector<16x32xbf16>
    %23 = vector.extract_strided_slice %19 {offsets = [48, 0], sizes = [16, 32], strides = [1, 1]} : vector<80x32xbf16> to vector<16x32xbf16>
    %24 = vector.extract_strided_slice %19 {offsets = [64, 0], sizes = [16, 32], strides = [1, 1]} : vector<80x32xbf16> to vector<16x32xbf16>
    %25 = tpu.concatenate %20, %21, %22, %23, %24 in 1 : vector<16x32xbf16>, vector<16x32xbf16>, vector<16x32xbf16>, vector<16x32xbf16>, vector<16x32xbf16> -> vector<16x160xbf16>
    %cst_13 = arith.constant dense<0.000000e+00> : vector<80x32xf32>
    %26 = tpu.matmul %8, %5, %cst_13 {dimension_numbers = #tpu.dot_dimension_numbers<[1], [0], [0], [1], [0, 0, 1, 1], [], []>} : vector<80x8xbf16>, vector<8x32xbf16>, vector<80x32xf32> -> vector<80x32xf32>
    %27 = arith.truncf %26 : vector<80x32xf32> to vector<80x32xbf16>
    %28 = vector.extract_strided_slice %27 {offsets = [0, 0], sizes = [16, 32], strides = [1, 1]} : vector<80x32xbf16> to vector<16x32xbf16>
    %29 = vector.extract_strided_slice %27 {offsets = [16, 0], sizes = [16, 32], strides = [1, 1]} : vector<80x32xbf16> to vector<16x32xbf16>
    %30 = vector.extract_strided_slice %27 {offsets = [32, 0], sizes = [16, 32], strides = [1, 1]} : vector<80x32xbf16> to vector<16x32xbf16>
    %31 = vector.extract_strided_slice %27 {offsets = [48, 0], sizes = [16, 32], strides = [1, 1]} : vector<80x32xbf16> to vector<16x32xbf16>
    %32 = vector.extract_strided_slice %27 {offsets = [64, 0], sizes = [16, 32], strides = [1, 1]} : vector<80x32xbf16> to vector<16x32xbf16>
    %33 = tpu.concatenate %28, %29, %30, %31, %32 in 1 : vector<16x32xbf16>, vector<16x32xbf16>, vector<16x32xbf16>, vector<16x32xbf16>, vector<16x32xbf16> -> vector<16x160xbf16>
    %cst_14 = arith.constant dense<0.000000e+00> : vector<80x32xf32>
    %34 = tpu.matmul %8, %7, %cst_14 {dimension_numbers = #tpu.dot_dimension_numbers<[1], [0], [0], [1], [0, 0, 1, 1], [], []>} : vector<80x8xbf16>, vector<8x32xbf16>, vector<80x32xf32> -> vector<80x32xf32>
    %35 = arith.truncf %34 : vector<80x32xf32> to vector<80x32xbf16>
    %36 = vector.extract_strided_slice %35 {offsets = [0, 0], sizes = [16, 32], strides = [1, 1]} : vector<80x32xbf16> to vector<16x32xbf16>
    %37 = vector.extract_strided_slice %35 {offsets = [16, 0], sizes = [16, 32], strides = [1, 1]} : vector<80x32xbf16> to vector<16x32xbf16>
    %38 = vector.extract_strided_slice %35 {offsets = [32, 0], sizes = [16, 32], strides = [1, 1]} : vector<80x32xbf16> to vector<16x32xbf16>
    %39 = vector.extract_strided_slice %35 {offsets = [48, 0], sizes = [16, 32], strides = [1, 1]} : vector<80x32xbf16> to vector<16x32xbf16>
    %40 = vector.extract_strided_slice %35 {offsets = [64, 0], sizes = [16, 32], strides = [1, 1]} : vector<80x32xbf16> to vector<16x32xbf16>
    %41 = tpu.concatenate %36, %37, %38, %39, %40 in 1 : vector<16x32xbf16>, vector<16x32xbf16>, vector<16x32xbf16>, vector<16x32xbf16>, vector<16x32xbf16> -> vector<16x160xbf16>
    %42 = tpu.concatenate %17, %25, %33, %41 in 0 : vector<16x160xbf16>, vector<16x160xbf16>, vector<16x160xbf16>, vector<16x160xbf16> -> vector<64x160xbf16>
    %cst_15 = arith.constant dense<0.000000e+00> : vector<64x64xf32>
    %43 = tpu.matmul %42, %9, %cst_15 {dimension_numbers = #tpu.dot_dimension_numbers<[1], [0], [0], [1], [0, 0, 1, 1], [], []>} : vector<64x160xbf16>, vector<160x64xbf16>, vector<64x64xf32> -> vector<64x64xf32>
    %c0_16 = arith.constant 0 : index
    %c0_17 = arith.constant 0 : index
    %44 = vector.load %arg4[%c0_16, %c0_17] : memref<1x64xf32, #tpu.memory_space<vmem>>, vector<1x64xf32>
    %45 = vector.broadcast %44 : vector<1x64xf32> to vector<64x64xf32>
    %46 = arith.addf %43, %45 : vector<64x64xf32>
    %cst_18 = arith.constant 0.000000e+00 : f32
    %47 = vector.broadcast %cst_18 : f32 to vector<64x64xf32>
    %48 = arith.maximumf %46, %47 : vector<64x64xf32>
    %49 = arith.truncf %48 : vector<64x64xf32> to vector<64x64xbf16>
    %50 = vector.extract_strided_slice %49 {offsets = [0, 0], sizes = [16, 64], strides = [1, 1]} : vector<64x64xbf16> to vector<16x64xbf16>
    %51 = vector.extract_strided_slice %49 {offsets = [16, 0], sizes = [16, 64], strides = [1, 1]} : vector<64x64xbf16> to vector<16x64xbf16>
    %52 = vector.extract_strided_slice %49 {offsets = [32, 0], sizes = [16, 64], strides = [1, 1]} : vector<64x64xbf16> to vector<16x64xbf16>
    %53 = vector.extract_strided_slice %49 {offsets = [48, 0], sizes = [16, 64], strides = [1, 1]} : vector<64x64xbf16> to vector<16x64xbf16>
    %c0_19 = arith.constant 0 : index
    %c0_20 = arith.constant 0 : index
    %54 = vector.load %arg5[%c0_19, %c0_20] : memref<160x16xbf16, #tpu.memory_space<vmem>>, vector<160x16xbf16>
    %c0_21 = arith.constant 0 : index
    %c0_22 = arith.constant 0 : index
    %55 = vector.load %arg6[%c0_21, %c0_22] : memref<320x128xbf16, #tpu.memory_space<vmem>>, vector<320x128xbf16>
    %cst_23 = arith.constant dense<0.000000e+00> : vector<160x64xf32>
    %56 = tpu.matmul %54, %50, %cst_23 {dimension_numbers = #tpu.dot_dimension_numbers<[1], [0], [0], [1], [0, 0, 1, 1], [], []>} : vector<160x16xbf16>, vector<16x64xbf16>, vector<160x64xf32> -> vector<160x64xf32>
    %57 = arith.truncf %56 : vector<160x64xf32> to vector<160x64xbf16>
    %58 = vector.extract_strided_slice %57 {offsets = [0, 0], sizes = [32, 64], strides = [1, 1]} : vector<160x64xbf16> to vector<32x64xbf16>
    %59 = vector.extract_strided_slice %57 {offsets = [32, 0], sizes = [32, 64], strides = [1, 1]} : vector<160x64xbf16> to vector<32x64xbf16>
    %60 = vector.extract_strided_slice %57 {offsets = [64, 0], sizes = [32, 64], strides = [1, 1]} : vector<160x64xbf16> to vector<32x64xbf16>
    %61 = vector.extract_strided_slice %57 {offsets = [96, 0], sizes = [32, 64], strides = [1, 1]} : vector<160x64xbf16> to vector<32x64xbf16>
    %62 = vector.extract_strided_slice %57 {offsets = [128, 0], sizes = [32, 64], strides = [1, 1]} : vector<160x64xbf16> to vector<32x64xbf16>
    %63 = tpu.concatenate %58, %59, %60, %61, %62 in 1 : vector<32x64xbf16>, vector<32x64xbf16>, vector<32x64xbf16>, vector<32x64xbf16>, vector<32x64xbf16> -> vector<32x320xbf16>
    %cst_24 = arith.constant dense<0.000000e+00> : vector<160x64xf32>
    %64 = tpu.matmul %54, %51, %cst_24 {dimension_numbers = #tpu.dot_dimension_numbers<[1], [0], [0], [1], [0, 0, 1, 1], [], []>} : vector<160x16xbf16>, vector<16x64xbf16>, vector<160x64xf32> -> vector<160x64xf32>
    %65 = arith.truncf %64 : vector<160x64xf32> to vector<160x64xbf16>
    %66 = vector.extract_strided_slice %65 {offsets = [0, 0], sizes = [32, 64], strides = [1, 1]} : vector<160x64xbf16> to vector<32x64xbf16>
    %67 = vector.extract_strided_slice %65 {offsets = [32, 0], sizes = [32, 64], strides = [1, 1]} : vector<160x64xbf16> to vector<32x64xbf16>
    %68 = vector.extract_strided_slice %65 {offsets = [64, 0], sizes = [32, 64], strides = [1, 1]} : vector<160x64xbf16> to vector<32x64xbf16>
    %69 = vector.extract_strided_slice %65 {offsets = [96, 0], sizes = [32, 64], strides = [1, 1]} : vector<160x64xbf16> to vector<32x64xbf16>
    %70 = vector.extract_strided_slice %65 {offsets = [128, 0], sizes = [32, 64], strides = [1, 1]} : vector<160x64xbf16> to vector<32x64xbf16>
    %71 = tpu.concatenate %66, %67, %68, %69, %70 in 1 : vector<32x64xbf16>, vector<32x64xbf16>, vector<32x64xbf16>, vector<32x64xbf16>, vector<32x64xbf16> -> vector<32x320xbf16>
    %cst_25 = arith.constant dense<0.000000e+00> : vector<160x64xf32>
    %72 = tpu.matmul %54, %52, %cst_25 {dimension_numbers = #tpu.dot_dimension_numbers<[1], [0], [0], [1], [0, 0, 1, 1], [], []>} : vector<160x16xbf16>, vector<16x64xbf16>, vector<160x64xf32> -> vector<160x64xf32>
    %73 = arith.truncf %72 : vector<160x64xf32> to vector<160x64xbf16>
    %74 = vector.extract_strided_slice %73 {offsets = [0, 0], sizes = [32, 64], strides = [1, 1]} : vector<160x64xbf16> to vector<32x64xbf16>
    %75 = vector.extract_strided_slice %73 {offsets = [32, 0], sizes = [32, 64], strides = [1, 1]} : vector<160x64xbf16> to vector<32x64xbf16>
    %76 = vector.extract_strided_slice %73 {offsets = [64, 0], sizes = [32, 64], strides = [1, 1]} : vector<160x64xbf16> to vector<32x64xbf16>
    %77 = vector.extract_strided_slice %73 {offsets = [96, 0], sizes = [32, 64], strides = [1, 1]} : vector<160x64xbf16> to vector<32x64xbf16>
    %78 = vector.extract_strided_slice %73 {offsets = [128, 0], sizes = [32, 64], strides = [1, 1]} : vector<160x64xbf16> to vector<32x64xbf16>
    %79 = tpu.concatenate %74, %75, %76, %77, %78 in 1 : vector<32x64xbf16>, vector<32x64xbf16>, vector<32x64xbf16>, vector<32x64xbf16>, vector<32x64xbf16> -> vector<32x320xbf16>
    %cst_26 = arith.constant dense<0.000000e+00> : vector<160x64xf32>
    %80 = tpu.matmul %54, %53, %cst_26 {dimension_numbers = #tpu.dot_dimension_numbers<[1], [0], [0], [1], [0, 0, 1, 1], [], []>} : vector<160x16xbf16>, vector<16x64xbf16>, vector<160x64xf32> -> vector<160x64xf32>
    %81 = arith.truncf %80 : vector<160x64xf32> to vector<160x64xbf16>
    %82 = vector.extract_strided_slice %81 {offsets = [0, 0], sizes = [32, 64], strides = [1, 1]} : vector<160x64xbf16> to vector<32x64xbf16>
    %83 = vector.extract_strided_slice %81 {offsets = [32, 0], sizes = [32, 64], strides = [1, 1]} : vector<160x64xbf16> to vector<32x64xbf16>
    %84 = vector.extract_strided_slice %81 {offsets = [64, 0], sizes = [32, 64], strides = [1, 1]} : vector<160x64xbf16> to vector<32x64xbf16>
    %85 = vector.extract_strided_slice %81 {offsets = [96, 0], sizes = [32, 64], strides = [1, 1]} : vector<160x64xbf16> to vector<32x64xbf16>
    %86 = vector.extract_strided_slice %81 {offsets = [128, 0], sizes = [32, 64], strides = [1, 1]} : vector<160x64xbf16> to vector<32x64xbf16>
    %87 = tpu.concatenate %82, %83, %84, %85, %86 in 1 : vector<32x64xbf16>, vector<32x64xbf16>, vector<32x64xbf16>, vector<32x64xbf16>, vector<32x64xbf16> -> vector<32x320xbf16>
    %88 = tpu.concatenate %63, %71, %79, %87 in 0 : vector<32x320xbf16>, vector<32x320xbf16>, vector<32x320xbf16>, vector<32x320xbf16> -> vector<128x320xbf16>
    %cst_27 = arith.constant dense<0.000000e+00> : vector<128x128xf32>
    %89 = tpu.matmul %88, %55, %cst_27 {dimension_numbers = #tpu.dot_dimension_numbers<[1], [0], [0], [1], [0, 0, 1, 1], [], []>} : vector<128x320xbf16>, vector<320x128xbf16>, vector<128x128xf32> -> vector<128x128xf32>
    %c0_28 = arith.constant 0 : index
    %c0_29 = arith.constant 0 : index
    %90 = vector.load %arg7[%c0_28, %c0_29] : memref<1x128xf32, #tpu.memory_space<vmem>>, vector<1x128xf32>
    %91 = vector.broadcast %90 : vector<1x128xf32> to vector<128x128xf32>
    %92 = arith.addf %89, %91 : vector<128x128xf32>
    %cst_30 = arith.constant 0.000000e+00 : f32
    %93 = vector.broadcast %cst_30 : f32 to vector<128x128xf32>
    %94 = arith.maximumf %92, %93 : vector<128x128xf32>
    %95 = arith.truncf %94 : vector<128x128xf32> to vector<128x128xbf16>
    %96 = vector.extract_strided_slice %95 {offsets = [0, 0], sizes = [32, 128], strides = [1, 1]} : vector<128x128xbf16> to vector<32x128xbf16>
    %97 = vector.extract_strided_slice %95 {offsets = [32, 0], sizes = [32, 128], strides = [1, 1]} : vector<128x128xbf16> to vector<32x128xbf16>
    %98 = vector.extract_strided_slice %95 {offsets = [64, 0], sizes = [32, 128], strides = [1, 1]} : vector<128x128xbf16> to vector<32x128xbf16>
    %99 = vector.extract_strided_slice %95 {offsets = [96, 0], sizes = [32, 128], strides = [1, 1]} : vector<128x128xbf16> to vector<32x128xbf16>
    %c0_31 = arith.constant 0 : index
    %c0_32 = arith.constant 0 : index
    %100 = vector.load %arg8[%c0_31, %c0_32] : memref<96x32xbf16, #tpu.memory_space<vmem>>, vector<96x32xbf16>
    %c0_33 = arith.constant 0 : index
    %c0_34 = arith.constant 0 : index
    %101 = vector.load %arg9[%c0_33, %c0_34] : memref<384x256xbf16, #tpu.memory_space<vmem>>, vector<384x256xbf16>
    %cst_35 = arith.constant dense<0.000000e+00> : vector<96x128xf32>
    %102 = tpu.matmul %100, %96, %cst_35 {dimension_numbers = #tpu.dot_dimension_numbers<[1], [0], [0], [1], [0, 0, 1, 1], [], []>} : vector<96x32xbf16>, vector<32x128xbf16>, vector<96x128xf32> -> vector<96x128xf32>
    %103 = arith.truncf %102 : vector<96x128xf32> to vector<96x128xbf16>
    %104 = vector.extract_strided_slice %103 {offsets = [0, 0], sizes = [32, 128], strides = [1, 1]} : vector<96x128xbf16> to vector<32x128xbf16>
    %105 = vector.extract_strided_slice %103 {offsets = [32, 0], sizes = [32, 128], strides = [1, 1]} : vector<96x128xbf16> to vector<32x128xbf16>
    %106 = vector.extract_strided_slice %103 {offsets = [64, 0], sizes = [32, 128], strides = [1, 1]} : vector<96x128xbf16> to vector<32x128xbf16>
    %107 = tpu.concatenate %104, %105, %106 in 1 : vector<32x128xbf16>, vector<32x128xbf16>, vector<32x128xbf16> -> vector<32x384xbf16>
    %cst_36 = arith.constant dense<0.000000e+00> : vector<96x128xf32>
    %108 = tpu.matmul %100, %97, %cst_36 {dimension_numbers = #tpu.dot_dimension_numbers<[1], [0], [0], [1], [0, 0, 1, 1], [], []>} : vector<96x32xbf16>, vector<32x128xbf16>, vector<96x128xf32> -> vector<96x128xf32>
    %109 = arith.truncf %108 : vector<96x128xf32> to vector<96x128xbf16>
    %110 = vector.extract_strided_slice %109 {offsets = [0, 0], sizes = [32, 128], strides = [1, 1]} : vector<96x128xbf16> to vector<32x128xbf16>
    %111 = vector.extract_strided_slice %109 {offsets = [32, 0], sizes = [32, 128], strides = [1, 1]} : vector<96x128xbf16> to vector<32x128xbf16>
    %112 = vector.extract_strided_slice %109 {offsets = [64, 0], sizes = [32, 128], strides = [1, 1]} : vector<96x128xbf16> to vector<32x128xbf16>
    %113 = tpu.concatenate %110, %111, %112 in 1 : vector<32x128xbf16>, vector<32x128xbf16>, vector<32x128xbf16> -> vector<32x384xbf16>
    %cst_37 = arith.constant dense<0.000000e+00> : vector<96x128xf32>
    %114 = tpu.matmul %100, %98, %cst_37 {dimension_numbers = #tpu.dot_dimension_numbers<[1], [0], [0], [1], [0, 0, 1, 1], [], []>} : vector<96x32xbf16>, vector<32x128xbf16>, vector<96x128xf32> -> vector<96x128xf32>
    %115 = arith.truncf %114 : vector<96x128xf32> to vector<96x128xbf16>
    %116 = vector.extract_strided_slice %115 {offsets = [0, 0], sizes = [32, 128], strides = [1, 1]} : vector<96x128xbf16> to vector<32x128xbf16>
    %117 = vector.extract_strided_slice %115 {offsets = [32, 0], sizes = [32, 128], strides = [1, 1]} : vector<96x128xbf16> to vector<32x128xbf16>
    %118 = vector.extract_strided_slice %115 {offsets = [64, 0], sizes = [32, 128], strides = [1, 1]} : vector<96x128xbf16> to vector<32x128xbf16>
    %119 = tpu.concatenate %116, %117, %118 in 1 : vector<32x128xbf16>, vector<32x128xbf16>, vector<32x128xbf16> -> vector<32x384xbf16>
    %cst_38 = arith.constant dense<0.000000e+00> : vector<96x128xf32>
    %120 = tpu.matmul %100, %99, %cst_38 {dimension_numbers = #tpu.dot_dimension_numbers<[1], [0], [0], [1], [0, 0, 1, 1], [], []>} : vector<96x32xbf16>, vector<32x128xbf16>, vector<96x128xf32> -> vector<96x128xf32>
    %121 = arith.truncf %120 : vector<96x128xf32> to vector<96x128xbf16>
    %122 = vector.extract_strided_slice %121 {offsets = [0, 0], sizes = [32, 128], strides = [1, 1]} : vector<96x128xbf16> to vector<32x128xbf16>
    %123 = vector.extract_strided_slice %121 {offsets = [32, 0], sizes = [32, 128], strides = [1, 1]} : vector<96x128xbf16> to vector<32x128xbf16>
    %124 = vector.extract_strided_slice %121 {offsets = [64, 0], sizes = [32, 128], strides = [1, 1]} : vector<96x128xbf16> to vector<32x128xbf16>
    %125 = tpu.concatenate %122, %123, %124 in 1 : vector<32x128xbf16>, vector<32x128xbf16>, vector<32x128xbf16> -> vector<32x384xbf16>
    %126 = tpu.concatenate %107, %113, %119, %125 in 0 : vector<32x384xbf16>, vector<32x384xbf16>, vector<32x384xbf16>, vector<32x384xbf16> -> vector<128x384xbf16>
    %cst_39 = arith.constant dense<0.000000e+00> : vector<128x256xf32>
    %127 = tpu.matmul %126, %101, %cst_39 {dimension_numbers = #tpu.dot_dimension_numbers<[1], [0], [0], [1], [0, 0, 1, 1], [], []>} : vector<128x384xbf16>, vector<384x256xbf16>, vector<128x256xf32> -> vector<128x256xf32>
    %c0_40 = arith.constant 0 : index
    %c0_41 = arith.constant 0 : index
    %128 = vector.load %arg10[%c0_40, %c0_41] : memref<1x256xf32, #tpu.memory_space<vmem>>, vector<1x256xf32>
    %129 = vector.broadcast %128 : vector<1x256xf32> to vector<128x256xf32>
    %130 = arith.addf %127, %129 : vector<128x256xf32>
    %cst_42 = arith.constant 0.000000e+00 : f32
    %131 = vector.broadcast %cst_42 : f32 to vector<128x256xf32>
    %132 = arith.maximumf %130, %131 : vector<128x256xf32>
    %133 = vector.extract_strided_slice %132 {offsets = [0, 0], sizes = [32, 256], strides = [1, 1]} : vector<128x256xf32> to vector<32x256xf32>
    %c0_43 = arith.constant 0 : index
    %c0_44 = arith.constant 0 : index
    %c0_45 = arith.constant 0 : index
    %134 = vector.load %arg11[%c0_43, %c0_44, %c0_45] : memref<4x32x256xf32, #tpu.memory_space<vmem>>, vector<1x32x256xf32>
    %135 = vector.shape_cast %134 : vector<1x32x256xf32> to vector<32x256xf32>
    %136 = vector.shape_cast %133 : vector<32x256xf32> to vector<1x32x256xf32>
    tpu.vector_store %arg11[%c0_43, %c0_44, %c0_45], %136 {strides = array<i32>} : memref<4x32x256xf32, #tpu.memory_space<vmem>>, vector<1x32x256xf32>,
    %137 = vector.extract_strided_slice %132 {offsets = [32, 0], sizes = [32, 256], strides = [1, 1]} : vector<128x256xf32> to vector<32x256xf32>
    %c1_46 = arith.constant 1 : index
    %c0_47 = arith.constant 0 : index
    %c0_48 = arith.constant 0 : index
    %138 = vector.load %arg11[%c1_46, %c0_47, %c0_48] : memref<4x32x256xf32, #tpu.memory_space<vmem>>, vector<1x32x256xf32>
    %139 = vector.shape_cast %138 : vector<1x32x256xf32> to vector<32x256xf32>
    %140 = vector.shape_cast %137 : vector<32x256xf32> to vector<1x32x256xf32>
    tpu.vector_store %arg11[%c1_46, %c0_47, %c0_48], %140 {strides = array<i32>} : memref<4x32x256xf32, #tpu.memory_space<vmem>>, vector<1x32x256xf32>,
    %141 = vector.extract_strided_slice %132 {offsets = [64, 0], sizes = [32, 256], strides = [1, 1]} : vector<128x256xf32> to vector<32x256xf32>
    %c2_49 = arith.constant 2 : index
    %c0_50 = arith.constant 0 : index
    %c0_51 = arith.constant 0 : index
    %142 = vector.load %arg11[%c2_49, %c0_50, %c0_51] : memref<4x32x256xf32, #tpu.memory_space<vmem>>, vector<1x32x256xf32>
    %143 = vector.shape_cast %142 : vector<1x32x256xf32> to vector<32x256xf32>
    %144 = vector.shape_cast %141 : vector<32x256xf32> to vector<1x32x256xf32>
    tpu.vector_store %arg11[%c2_49, %c0_50, %c0_51], %144 {strides = array<i32>} : memref<4x32x256xf32, #tpu.memory_space<vmem>>, vector<1x32x256xf32>,
    %145 = vector.extract_strided_slice %132 {offsets = [96, 0], sizes = [32, 256], strides = [1, 1]} : vector<128x256xf32> to vector<32x256xf32>
    %c3_52 = arith.constant 3 : index
    %c0_53 = arith.constant 0 : index
    %c0_54 = arith.constant 0 : index
    %146 = vector.load %arg11[%c3_52, %c0_53, %c0_54] : memref<4x32x256xf32, #tpu.memory_space<vmem>>, vector<1x32x256xf32>
    %147 = vector.shape_cast %146 : vector<1x32x256xf32> to vector<32x256xf32>
    %148 = vector.shape_cast %145 : vector<32x256xf32> to vector<1x32x256xf32>
    tpu.vector_store %arg11[%c3_52, %c0_53, %c0_54], %148 {strides = array<i32>} : memref<4x32x256xf32, #tpu.memory_space<vmem>>, vector<1x32x256xf32>,
    return
  }
  func.func @transform_0(%arg0: i32) -> (i32, i32, i32) {
    %c0_i32 = arith.constant 0 : i32
    %c0_i32_0 = arith.constant 0 : i32
    %c0_i32_1 = arith.constant 0 : i32
    return %arg0, %c0_i32, %c0_i32_0 : i32, i32, i32
  }
  func.func @transform_1(%arg0: i32) -> (i32, i32) {
    %c0_i32 = arith.constant 0 : i32
    %c0_i32_0 = arith.constant 0 : i32
    %c0_i32_1 = arith.constant 0 : i32
    return %c0_i32, %c0_i32_0 : i32, i32
  }
  func.func @transform_2(%arg0: i32) -> (i32, i32) {
    %c0_i32 = arith.constant 0 : i32
    %c0_i32_0 = arith.constant 0 : i32
    %c0_i32_1 = arith.constant 0 : i32
    return %c0_i32, %c0_i32_0 : i32, i32
  }
  func.func @transform_3(%arg0: i32) -> (i32, i32) {
    %c0_i32 = arith.constant 0 : i32
    %c0_i32_0 = arith.constant 0 : i32
    %c0_i32_1 = arith.constant 0 : i32
    return %c0_i32, %c0_i32_0 : i32, i32
  }
  func.func @transform_4(%arg0: i32) -> (i32, i32) {
    %c0_i32 = arith.constant 0 : i32
    %c0_i32_0 = arith.constant 0 : i32
    %c0_i32_1 = arith.constant 0 : i32
    return %c0_i32, %c0_i32_0 : i32, i32
  }
  func.func @transform_5(%arg0: i32) -> (i32, i32) {
    %c0_i32 = arith.constant 0 : i32
    %c0_i32_0 = arith.constant 0 : i32
    %c0_i32_1 = arith.constant 0 : i32
    return %c0_i32, %c0_i32_0 : i32, i32
  }
  func.func @transform_6(%arg0: i32) -> (i32, i32) {
    %c0_i32 = arith.constant 0 : i32
    %c0_i32_0 = arith.constant 0 : i32
    %c0_i32_1 = arith.constant 0 : i32
    return %c0_i32, %c0_i32_0 : i32, i32
  }
  func.func @transform_7(%arg0: i32) -> (i32, i32) {
    %c0_i32 = arith.constant 0 : i32
    %c0_i32_0 = arith.constant 0 : i32
    %c0_i32_1 = arith.constant 0 : i32
    return %c0_i32, %c0_i32_0 : i32, i32
  }
  func.func @transform_8(%arg0: i32) -> (i32, i32) {
    %c0_i32 = arith.constant 0 : i32
    %c0_i32_0 = arith.constant 0 : i32
    %c0_i32_1 = arith.constant 0 : i32
    return %c0_i32, %c0_i32_0 : i32, i32
  }
  func.func @transform_9(%arg0: i32) -> (i32, i32) {
    %c0_i32 = arith.constant 0 : i32
    %c0_i32_0 = arith.constant 0 : i32
    %c0_i32_1 = arith.constant 0 : i32
    return %c0_i32, %c0_i32_0 : i32, i32
  }
  func.func @transform_10(%arg0: i32) -> (i32, i32, i32) {
    %c0_i32 = arith.constant 0 : i32
    %c0_i32_0 = arith.constant 0 : i32
    %c0_i32_1 = arith.constant 0 : i32
    return %arg0, %c0_i32, %c0_i32_0 : i32, i32, i32
  }
}

</mosaic_0001>

<llo_original>
// kernel: apply.1
$region0: #{apply.1}
  #allocation0 [shape = 'u32[]', space=smem, size = 0x4, offset = 0x4, fixed_abs, tag = 'smem constant byte address 0x4 - core index']
  #allocation1 [shape = 'u32[72,128]{1,0:T(1,128)}', space=vmem, size = 0x9000, scoped, tag = 'internal scratch']
  %s0 = inlined_call_operand.vmem [shape: bf16[8,8,32], index: 0, kind: input, shape index: {}]
  %s1 = inlined_call_operand.vmem [shape: bf16[80,8], index: 1, kind: input, shape index: {}]
  %s2 = inlined_call_operand.vmem [shape: bf16[160,64], index: 2, kind: input, shape index: {}]
  %s3 = inlined_call_operand.vmem [shape: f32[1,64], index: 3, kind: input, shape index: {}]
  %s4 = inlined_call_operand.vmem [shape: bf16[160,16], index: 4, kind: input, shape index: {}]
  %s5 = inlined_call_operand.vmem [shape: bf16[320,128], index: 5, kind: input, shape index: {}]
  %s6 = inlined_call_operand.vmem [shape: f32[1,128], index: 6, kind: input, shape index: {}]
  %s7 = inlined_call_operand.vmem [shape: bf16[96,32], index: 7, kind: input, shape index: {}]
  %s8 = inlined_call_operand.vmem [shape: bf16[384,256], index: 8, kind: input, shape index: {}]
  %s9 = inlined_call_operand.vmem [shape: f32[1,256], index: 9, kind: input, shape index: {}]
  %s10 = inlined_call_operand.vmem [shape: f32[8,32,256], index: 10, kind: output, shape index: {}]
  %s11 = sld [smem:[#allocation0]]
  $region73: #{apply.1} parent=0
    _
  %s13 = ssub.s32 1, %s11
  %s14 = scalar_select 0, %s13, %s11
  loop: start=0, step=1, limit=4
  $region2: #{apply.1} parent=0 // loop_pre_header
    _
  $region3: #{apply.1} parent=0 // loop_header
    %s16 = sphi 0, %s20
    %p17 = scmp.ge.s32.totalorder %s16, 4
    %s26 = sphi 0, %s28
    %s29 = sphi 0, %s26
    %s30 = sphi 0, %s29
    %s46 = sphi 0, %s30
    %s50 = sphi 0, %s50
    %s52 = sphi 0, %s50
    %s53 = sphi 0, %s52
    %s67 = sphi 0, %s53
    %s71 = sphi 0, %s71
    %s73 = sphi 0, %s71
    %s74 = sphi 0, %s73
    %s88 = sphi 0, %s74
    %s92 = sphi 0, %s92
    %s94 = sphi 0, %s92
    %s95 = sphi 0, %s94
    %s109 = sphi 0, %s95
    %s113 = sphi 0, %s113
    %s115 = sphi 0, %s113
    %s116 = sphi 0, %s115
    %s130 = sphi 0, %s116
    %s134 = sphi 0, %s134
    %s136 = sphi 0, %s134
    %s137 = sphi 0, %s136
    %s151 = sphi 0, %s137
    %s155 = sphi 0, %s155
    %s157 = sphi 0, %s155
    %s158 = sphi 0, %s157
    %s172 = sphi 0, %s158
    %s176 = sphi 0, %s176
    %s178 = sphi 0, %s176
    %s179 = sphi 0, %s178
    %s193 = sphi 0, %s179
    %s197 = sphi 0, %s197
    %s199 = sphi 0, %s197
    %s200 = sphi 0, %s199
    %s214 = sphi 0, %s200
    %s218 = sphi 0, %s218
    %s220 = sphi 0, %s218
    %s221 = sphi 0, %s220
    %s235 = sphi 0, %s221
    %s241 = sphi 0, %s243
    %s244 = sphi 0, %s241
    %s245 = sphi 0, %s244
    %s261 = sphi 0, %s245
  $region4: #{apply.1} parent=0 // loop_header_branch
    %19 = sbr.rel (%p17) target = $region8
  $region5: #{apply.1} parent=0 // loop_body
    %s21 = ssub.s32 %s16, 1
    %s22 = ssub.s32 %s16, 2
    %s23 = sadd.s32 %s16, 1
    %s24 = ssub.s32 %s16, %s23
    %p25 = scmp.eq.s32.totalorder %s24, 0
    %s27 = sadd.s32 %s26, 1
    %s28 = scalar_select %p25, %s26, %s27
    %p31 = pneg %p25
    %p32 = scmp.eq.s32.totalorder %s16, 1
    %p33 = por %p31, %p32
    %p34 = scmp.ne.s32.totalorder %s26, %s29
    %p35 = scmp.eq.s32.totalorder %s16, 0
    %p36 = por %p34, %p35
    %p37 = scmp.ne.s32.totalorder %s26, %s29
    %p38 = scmp.eq.s32.totalorder %s21, 1
    %p39 = por %p37, %p38
    %p40 = scmp.ne.s32.totalorder %s29, %s30
    %p41 = scmp.eq.s32.totalorder %s21, 0
    %p42 = por %p40, %p41
    %p43 = scmp.ne.s32.totalorder %s29, %s30
    %p44 = scmp.eq.s32.totalorder %s22, 1
    %p45 = por %p43, %p44
    %p47 = scmp.ne.s32.totalorder %s30, %s46
    %p48 = scmp.eq.s32.totalorder %s22, 0
    %p49 = por %p47, %p48
    %s51 = sadd.s32 %s50, 1
    %p54 = scmp.eq.s32.totalorder %s16, 1
    %p55 = scmp.ne.s32.totalorder %s50, %s52
    %p56 = scmp.eq.s32.totalorder %s16, 0
    %p57 = por %p55, %p56
    %p58 = scmp.ne.s32.totalorder %s50, %s52
    %p59 = scmp.eq.s32.totalorder %s21, 1
    %p60 = por %p58, %p59
    %p61 = scmp.ne.s32.totalorder %s52, %s53
    %p62 = scmp.eq.s32.totalorder %s21, 0
    %p63 = por %p61, %p62
    %p64 = scmp.ne.s32.totalorder %s52, %s53
    %p65 = scmp.eq.s32.totalorder %s22, 1
    %p66 = por %p64, %p65
    %p68 = scmp.ne.s32.totalorder %s53, %s67
    %p69 = scmp.eq.s32.totalorder %s22, 0
    %p70 = por %p68, %p69
    %s72 = sadd.s32 %s71, 1
    %p75 = scmp.eq.s32.totalorder %s16, 1
    %p76 = scmp.ne.s32.totalorder %s71, %s73
    %p77 = scmp.eq.s32.totalorder %s16, 0
    %p78 = por %p76, %p77
    %p79 = scmp.ne.s32.totalorder %s71, %s73
    %p80 = scmp.eq.s32.totalorder %s21, 1
    %p81 = por %p79, %p80
    %p82 = scmp.ne.s32.totalorder %s73, %s74
    %p83 = scmp.eq.s32.totalorder %s21, 0
    %p84 = por %p82, %p83
    %p85 = scmp.ne.s32.totalorder %s73, %s74
    %p86 = scmp.eq.s32.totalorder %s22, 1
    %p87 = por %p85, %p86
    %p89 = scmp.ne.s32.totalorder %s74, %s88
    %p90 = scmp.eq.s32.totalorder %s22, 0
    %p91 = por %p89, %p90
    %s93 = sadd.s32 %s92, 1
    %p96 = scmp.eq.s32.totalorder %s16, 1
    %p97 = scmp.ne.s32.totalorder %s92, %s94
    %p98 = scmp.eq.s32.totalorder %s16, 0
    %p99 = por %p97, %p98
    %p100 = scmp.ne.s32.totalorder %s92, %s94
    %p101 = scmp.eq.s32.totalorder %s21, 1
    %p102 = por %p100, %p101
    %p103 = scmp.ne.s32.totalorder %s94, %s95
    %p104 = scmp.eq.s32.totalorder %s21, 0
    %p105 = por %p103, %p104
    %p106 = scmp.ne.s32.totalorder %s94, %s95
    %p107 = scmp.eq.s32.totalorder %s22, 1
    %p108 = por %p106, %p107
    %p110 = scmp.ne.s32.totalorder %s95, %s109
    %p111 = scmp.eq.s32.totalorder %s22, 0
    %p112 = por %p110, %p111
    %s114 = sadd.s32 %s113, 1
    %p117 = scmp.eq.s32.totalorder %s16, 1
    %p118 = scmp.ne.s32.totalorder %s113, %s115
    %p119 = scmp.eq.s32.totalorder %s16, 0
    %p120 = por %p118, %p119
    %p121 = scmp.ne.s32.totalorder %s113, %s115
    %p122 = scmp.eq.s32.totalorder %s21, 1
    %p123 = por %p121, %p122
    %p124 = scmp.ne.s32.totalorder %s115, %s116
    %p125 = scmp.eq.s32.totalorder %s21, 0
    %p126 = por %p124, %p125
    %p127 = scmp.ne.s32.totalorder %s115, %s116
    %p128 = scmp.eq.s32.totalorder %s22, 1
    %p129 = por %p127, %p128
    %p131 = scmp.ne.s32.totalorder %s116, %s130
    %p132 = scmp.eq.s32.totalorder %s22, 0
    %p133 = por %p131, %p132
    %s135 = sadd.s32 %s134, 1
    %p138 = scmp.eq.s32.totalorder %s16, 1
    %p139 = scmp.ne.s32.totalorder %s134, %s136
    %p140 = scmp.eq.s32.totalorder %s16, 0
    %p141 = por %p139, %p140
    %p142 = scmp.ne.s32.totalorder %s134, %s136
    %p143 = scmp.eq.s32.totalorder %s21, 1
    %p144 = por %p142, %p143
    %p145 = scmp.ne.s32.totalorder %s136, %s137
    %p146 = scmp.eq.s32.totalorder %s21, 0
    %p147 = por %p145, %p146
    %p148 = scmp.ne.s32.totalorder %s136, %s137
    %p149 = scmp.eq.s32.totalorder %s22, 1
    %p150 = por %p148, %p149
    %p152 = scmp.ne.s32.totalorder %s137, %s151
    %p153 = scmp.eq.s32.totalorder %s22, 0
    %p154 = por %p152, %p153
    %s156 = sadd.s32 %s155, 1
    %p159 = scmp.eq.s32.totalorder %s16, 1
    %p160 = scmp.ne.s32.totalorder %s155, %s157
    %p161 = scmp.eq.s32.totalorder %s16, 0
    %p162 = por %p160, %p161
    %p163 = scmp.ne.s32.totalorder %s155, %s157
    %p164 = scmp.eq.s32.totalorder %s21, 1
    %p165 = por %p163, %p164
    %p166 = scmp.ne.s32.totalorder %s157, %s158
    %p167 = scmp.eq.s32.totalorder %s21, 0
    %p168 = por %p166, %p167
    %p169 = scmp.ne.s32.totalorder %s157, %s158
    %p170 = scmp.eq.s32.totalorder %s22, 1
    %p171 = por %p169, %p170
    %p173 = scmp.ne.s32.totalorder %s158, %s172
    %p174 = scmp.eq.s32.totalorder %s22, 0
    %p175 = por %p173, %p174
    %s177 = sadd.s32 %s176, 1
    %p180 = scmp.eq.s32.totalorder %s16, 1
    %p181 = scmp.ne.s32.totalorder %s176, %s178
    %p182 = scmp.eq.s32.totalorder %s16, 0
    %p183 = por %p181, %p182
    %p184 = scmp.ne.s32.totalorder %s176, %s178
    %p185 = scmp.eq.s32.totalorder %s21, 1
    %p186 = por %p184, %p185
    %p187 = scmp.ne.s32.totalorder %s178, %s179
    %p188 = scmp.eq.s32.totalorder %s21, 0
    %p189 = por %p187, %p188
    %p190 = scmp.ne.s32.totalorder %s178, %s179
    %p191 = scmp.eq.s32.totalorder %s22, 1
    %p192 = por %p190, %p191
    %p194 = scmp.ne.s32.totalorder %s179, %s193
    %p195 = scmp.eq.s32.totalorder %s22, 0
    %p196 = por %p194, %p195
    %s198 = sadd.s32 %s197, 1
    %p201 = scmp.eq.s32.totalorder %s16, 1
    %p202 = scmp.ne.s32.totalorder %s197, %s199
    %p203 = scmp.eq.s32.totalorder %s16, 0
    %p204 = por %p202, %p203
    %p205 = scmp.ne.s32.totalorder %s197, %s199
    %p206 = scmp.eq.s32.totalorder %s21, 1
    %p207 = por %p205, %p206
    %p208 = scmp.ne.s32.totalorder %s199, %s200
    %p209 = scmp.eq.s32.totalorder %s21, 0
    %p210 = por %p208, %p209
    %p211 = scmp.ne.s32.totalorder %s199, %s200
    %p212 = scmp.eq.s32.totalorder %s22, 1
    %p213 = por %p211, %p212
    %p215 = scmp.ne.s32.totalorder %s200, %s214
    %p216 = scmp.eq.s32.totalorder %s22, 0
    %p217 = por %p215, %p216
    %s219 = sadd.s32 %s218, 1
    %p222 = scmp.eq.s32.totalorder %s16, 1
    %p223 = scmp.ne.s32.totalorder %s218, %s220
    %p224 = scmp.eq.s32.totalorder %s16, 0
    %p225 = por %p223, %p224
    %p226 = scmp.ne.s32.totalorder %s218, %s220
    %p227 = scmp.eq.s32.totalorder %s21, 1
    %p228 = por %p226, %p227
    %p229 = scmp.ne.s32.totalorder %s220, %s221
    %p230 = scmp.eq.s32.totalorder %s21, 0
    %p231 = por %p229, %p230
    %p232 = scmp.ne.s32.totalorder %s220, %s221
    %p233 = scmp.eq.s32.totalorder %s22, 1
    %p234 = por %p232, %p233
    %p236 = scmp.ne.s32.totalorder %s221, %s235
    %p237 = scmp.eq.s32.totalorder %s22, 0
    %p238 = por %p236, %p237
    %s239 = ssub.s32 %s16, %s23
    %p240 = scmp.eq.s32.totalorder %s239, 0
    %s242 = sadd.s32 %s241, 1
    %s243 = scalar_select %p240, %s241, %s242
    %p246 = pneg %p240
    %p247 = scmp.eq.s32.totalorder %s16, 1
    %p248 = por %p246, %p247
    %p249 = scmp.ne.s32.totalorder %s241, %s244
    %p250 = scmp.eq.s32.totalorder %s16, 0
    %p251 = por %p249, %p250
    %p252 = scmp.ne.s32.totalorder %s241, %s244
    %p253 = scmp.eq.s32.totalorder %s21, 1
    %p254 = por %p252, %p253
    %p255 = scmp.ne.s32.totalorder %s244, %s245
    %p256 = scmp.eq.s32.totalorder %s21, 0
    %p257 = por %p255, %p256
    %p258 = scmp.ne.s32.totalorder %s244, %s245
    %p259 = scmp.eq.s32.totalorder %s22, 1
    %p260 = por %p258, %p259
    %p262 = scmp.ne.s32.totalorder %s245, %s261
    %p263 = scmp.eq.s32.totalorder %s22, 0
    %p264 = por %p262, %p263
    %p265 = scmp.le.s32.totalorder 1, %s16
    %p266 = scmp.lt.s32.totalorder %s16, 3
    %p267 = pnand %p265, %p266
    %p268 = pneg %p267
    // Predicated region
    $region9: #{apply.1} parent=5 // pred_check
      _
    $region10: #{apply.1} parent=5 // pred_check_branch
      %270 = sbr.rel (%p267) target = $region12
    $region11: #{apply.1} parent=5 // pred_region
      %s271 = ssub.s32 %s16, 1
      // Predicated region
      $region13: #{apply.1} parent=11 // pred_check
        %p272 = pneg %p63
      $region14: #{apply.1} parent=11 // pred_check_branch
        %274 = sbr.rel (%p272) target = $region16
      $region15: #{apply.1} parent=11 // pred_region
        _
      $region16: #{apply.1} parent=11 // pred_fallthru
        _
      // Predicated region
      $region17: #{apply.1} parent=11 // pred_check
        %p275 = pneg %p84
      $region18: #{apply.1} parent=11 // pred_check_branch
        %277 = sbr.rel (%p275) target = $region20
      $region19: #{apply.1} parent=11 // pred_region
        _
      $region20: #{apply.1} parent=11 // pred_fallthru
        _
      // Predicated region
      $region21: #{apply.1} parent=11 // pred_check
        %p278 = pneg %p105
      $region22: #{apply.1} parent=11 // pred_check_branch
        %280 = sbr.rel (%p278) target = $region24
      $region23: #{apply.1} parent=11 // pred_region
        _
      $region24: #{apply.1} parent=11 // pred_fallthru
        _
      // Predicated region
      $region25: #{apply.1} parent=11 // pred_check
        %p281 = pneg %p126
      $region26: #{apply.1} parent=11 // pred_check_branch
        %283 = sbr.rel (%p281) target = $region28
      $region27: #{apply.1} parent=11 // pred_region
        _
      $region28: #{apply.1} parent=11 // pred_fallthru
        _
      // Predicated region
      $region29: #{apply.1} parent=11 // pred_check
        %p284 = pneg %p147
      $region30: #{apply.1} parent=11 // pred_check_branch
        %286 = sbr.rel (%p284) target = $region32
      $region31: #{apply.1} parent=11 // pred_region
        _
      $region32: #{apply.1} parent=11 // pred_fallthru
        _
      // Predicated region
      $region33: #{apply.1} parent=11 // pred_check
        %p287 = pneg %p168
      $region34: #{apply.1} parent=11 // pred_check_branch
        %289 = sbr.rel (%p287) target = $region36
      $region35: #{apply.1} parent=11 // pred_region
        _
      $region36: #{apply.1} parent=11 // pred_fallthru
        _
      // Predicated region
      $region37: #{apply.1} parent=11 // pred_check
        %p290 = pneg %p189
      $region38: #{apply.1} parent=11 // pred_check_branch
        %292 = sbr.rel (%p290) target = $region40
      $region39: #{apply.1} parent=11 // pred_region
        _
      $region40: #{apply.1} parent=11 // pred_fallthru
        _
      // Predicated region
      $region41: #{apply.1} parent=11 // pred_check
        %p293 = pneg %p210
      $region42: #{apply.1} parent=11 // pred_check_branch
        %295 = sbr.rel (%p293) target = $region44
      $region43: #{apply.1} parent=11 // pred_region
        _
      $region44: #{apply.1} parent=11 // pred_fallthru
        _
      // Predicated region
      $region45: #{apply.1} parent=11 // pred_check
        %p296 = pneg %p231
      $region46: #{apply.1} parent=11 // pred_check_branch
        %298 = sbr.rel (%p296) target = $region48
      $region47: #{apply.1} parent=11 // pred_region
        _
      $region48: #{apply.1} parent=11 // pred_fallthru
        _
    $region12: #{apply.1} parent=5 // pred_fallthru
      _
    %p299 = scmp.lt.s32.totalorder %s16, 2
    // Predicated region
    $region49: #{apply.1} parent=5 // pred_check
      %p300 = pneg %p299
    $region50: #{apply.1} parent=5 // pred_check_branch
      %302 = sbr.rel (%p300) target = $region52
    $region51: #{apply.1} parent=5 // pred_region
      // Predicated region
      $region53: #{apply.1} parent=51 // pred_check
        %p303 = pneg %p36
      $region54: #{apply.1} parent=51 // pred_check_branch
        %305 = sbr.rel (%p303) target = $region56
      $region55: #{apply.1} parent=51 // pred_region
        %s306 = smul.u32 4, %s16
        %p307 = scmp.lt.s32.totalorder %s306, 7
        %s308 = scalar_select %p307, %s306, 7
        %s309 = smul.addr %s308, 4
        %s310 = scalar_lea.vmem %s0, %s309
        %s311 = smul.u32 4, %s16
      $region56: #{apply.1} parent=51 // pred_fallthru
        _
    $region52: #{apply.1} parent=5 // pred_fallthru
      _
    %p312 = scmp.le.s32.totalorder 1, %s16
    %p313 = scmp.lt.s32.totalorder %s16, 3
    %p314 = pnand %p312, %p313
    %p315 = pneg %p314
    // Predicated region
    $region57: #{apply.1} parent=5 // pred_check
      _
    $region58: #{apply.1} parent=5 // pred_check_branch
      %317 = sbr.rel (%p314) target = $region60
    $region59: #{apply.1} parent=5 // pred_region
      %s318 = ssub.s32 %s16, 1
      %s319 = smul.u32 4, %s21
      %p320 = scmp.lt.s32.totalorder %s319, 7
      %s321 = scalar_select %p320, %s319, 7
      %s322 = smul.addr %s321, 4
      %s323 = scalar_lea.vmem %s0, %s322
      %p324 = pneg %p42
      %p325 = pneg %p39
      %p326 = pneg %p63
      %p327 = pneg %p60
      %p328 = pneg %p84
      %p329 = pneg %p81
      %p330 = pneg %p105
      %p331 = pneg %p102
      %p332 = pneg %p126
      %p333 = pneg %p123
      %p334 = pneg %p147
      %p335 = pneg %p144
      %p336 = pneg %p168
      %p337 = pneg %p165
      %p338 = pneg %p189
      %p339 = pneg %p186
      %p340 = pneg %p210
      %p341 = pneg %p207
      %p342 = pneg %p231
      %p343 = pneg %p228
      %p344 = pneg %p257
      %p345 = pneg %p254
      %s346 = smul.u32 4, %s21
      %p347 = scmp.lt.s32.totalorder %s346, 7
      %s348 = scalar_select %p347, %s346, 7
      %s349 = smul.addr %s348, 8
      %s350 = smul.addr %s349, 8
      %s351 = scalar_lea.vmem %s10, %s350
      %s352 = smul.u32 4, %s21
      %p353 = scmp.lt.s32.totalorder %s352, 7
      %s354 = scalar_select %p353, %s352, 7
      %s355 = smul.addr %s354, 4
      %s356 = scalar_lea.vmem %s0, %s355
      %s357 = smul.u32 4, %s21
      %s358 = smul.u32 4, %s21
      %p359 = scmp.lt.s32.totalorder %s358, 7
      %s360 = scalar_select %p359, %s358, 7
      %s361 = smul.addr %s360, 8
      %s362 = smul.addr %s361, 8
      %s363 = scalar_lea.vmem %s10, %s362
      %s364 = smul.u32 4, %s21
      %v366 = vld [vmem:[%s356] sm:$0xf]
      %s367 = scalar_lea.vmem %s356, 4
      %v368 = vld [vmem:[%s367] sm:$0xf]
      %s369 = scalar_lea.vmem %s356, 8
      %v370 = vld [vmem:[%s369] sm:$0xf]
      %s371 = scalar_lea.vmem %s356, 12
      %v372 = vld [vmem:[%s371] sm:$0xf]
      %v373 = vld [vmem:[%s1] sm:$0xf]
      %v374 = vld [vmem:[%s1 + $0x4] sm:$0xf]
      %v375 = vld [vmem:[%s1 + $0x8] sm:$0xf]
      %v376 = vld [vmem:[%s1 + $0xc] sm:$0xf]
      %v377 = vld [vmem:[%s1 + $0x10] sm:$0xf]
      %v378 = vld [vmem:[%s1 + $0x14] sm:$0xf]
      %v379 = vld [vmem:[%s1 + $0x18] sm:$0xf]
      %v380 = vld [vmem:[%s1 + $0x1c] sm:$0xf]
      %v381 = vld [vmem:[%s1 + $0x20] sm:$0xf]
      %v382 = vld [vmem:[%s1 + $0x24] sm:$0xf]
      %v383 = vld [vmem:[%s2] sm:$0xf]
      %v384 = vld [vmem:[%s2 + $0x4] sm:$0xf]
      %v385 = vld [vmem:[%s2 + $0x8] sm:$0xf]
      %v386 = vld [vmem:[%s2 + $0xc] sm:$0xf]
      %v387 = vld [vmem:[%s2 + $0x10] sm:$0xf]
      %v388 = vld [vmem:[%s2 + $0x14] sm:$0xf]
      %v389 = vld [vmem:[%s2 + $0x18] sm:$0xf]
      %v390 = vld [vmem:[%s2 + $0x1c] sm:$0xf]
      %v391 = vld [vmem:[%s2 + $0x20] sm:$0xf]
      %v392 = vld [vmem:[%s2 + $0x24] sm:$0xf]
      %v393 = vld [vmem:[%s2 + $0x28] sm:$0xf]
      %v394 = vld [vmem:[%s2 + $0x2c] sm:$0xf]
      %v395 = vld [vmem:[%s2 + $0x30] sm:$0xf]
      %v396 = vld [vmem:[%s2 + $0x34] sm:$0xf]
      %v397 = vld [vmem:[%s2 + $0x38] sm:$0xf]
      %v398 = vld [vmem:[%s2 + $0x3c] sm:$0xf]
      %v399 = vld [vmem:[%s2 + $0x40] sm:$0xf]
      %v400 = vld [vmem:[%s2 + $0x44] sm:$0xf]
      %v401 = vld [vmem:[%s2 + $0x48] sm:$0xf]
      %v402 = vld [vmem:[%s2 + $0x4c] sm:$0xf]
      %v413 = vunpack.c.l.b16 %v373
      %v414 = vunpack.c.l.b16 %v374
      %v415 = vunpack.c.l.b16 %v375
      %v416 = vunpack.c.l.b16 %v376
      %v417 = vunpack.c.l.b16 %v377
      %v418 = vunpack.c.l.b16 %v378
      %v419 = vunpack.c.l.b16 %v379
      %v420 = vunpack.c.l.b16 %v380
      %v421 = vunpack.c.l.b16 %v381
      %v422 = vunpack.c.l.b16 %v382
      %v423 = vpack.c.b16 %v414, %v413
      %v424 = vpack.c.b16 %v416, %v415
      %v425 = vpack.c.b16 %v418, %v417
      %v426 = vpack.c.b16 %v420, %v419
      %v427 = vpack.c.b16 %v422, %v421
      %vm428 = vcmask 64512
      %v430 = vsel %vm428, %v423, 0
      %v433 = vsel %vm428, %v424, 0
      %v436 = vsel %vm428, %v425, 0
      %v439 = vsel %vm428, %v426, 0
      %v442 = vsel %vm428, %v427, 0
      %vm444 = vcmask 1043456
      %v446 = vsel %vm444, %v366, 0
      %448 = vmatpush.bf16.msra.mxu0 0
      %449 = vmatpush.bf16.msra.mxu0 0
      %450 = vmatpush.bf16.msra.mxu0 0
      %451 = vmatpush.bf16.msra.mxu0 0
      %452 = vmatpush.bf16.msra.mxu0 0
      %453 = vmatpush.bf16.msra.mxu0 0
      %454 = vmatpush.bf16.msra.mxu0 0
      %455 = vmatpush.bf16.msra.mxu0 %v446
      %456 = vmatmul.bf16.gmra.mxu0 %v430
      %v457 = vpop.f32.mrf.mxu0
      %v458 = vadd.f32 0.0, %v457
      %v459 = vpop.f32.mrf.mxu0
      %v460 = vadd.f32 0.0, %v459
      %461 = vmatmul.bf16.gmra.mxu0 %v433
      %v462 = vpop.f32.mrf.mxu0
      %v463 = vadd.f32 0.0, %v462
      %v464 = vpop.f32.mrf.mxu0
      %v465 = vadd.f32 0.0, %v464
      %466 = vmatmul.bf16.gmra.mxu0 %v436
      %v467 = vpop.f32.mrf.mxu0
      %v468 = vadd.f32 0.0, %v467
      %v469 = vpop.f32.mrf.mxu0
      %v470 = vadd.f32 0.0, %v469
      %471 = vmatmul.bf16.gmra.mxu0 %v439
      %v472 = vpop.f32.mrf.mxu0
      %v473 = vadd.f32 0.0, %v472
      %v474 = vpop.f32.mrf.mxu0
      %v475 = vadd.f32 0.0, %v474
      %476 = vmatmul.bf16.gmra.mxu0 %v442
      %v477 = vpop.f32.mrf.mxu0
      %v478 = vadd.f32 0.0, %v477
      %v479 = vpop.f32.mrf.mxu0
      %v480 = vadd.f32 0.0, %v479
      %481 = vdwg.mxu0
      %v482 = vpack.c.bf16 %v458, %v458
      %v483 = vpack.c.bf16 %v460, %v460
      %v484 = vpack.c.bf16 %v463, %v463
      %v485 = vpack.c.bf16 %v465, %v465
      %v486 = vpack.c.bf16 %v468, %v468
      %v487 = vpack.c.bf16 %v470, %v470
      %v488 = vpack.c.bf16 %v473, %v473
      %v489 = vpack.c.bf16 %v475, %v475
      %v490 = vpack.c.bf16 %v478, %v478
      %v491 = vpack.c.bf16 %v480, %v480
      %v494 = vunpack.c.l.b16 %v482
      %v495 = vunpack.c.l.b16 %v483
      %v496 = vpack.c.b16 %v495, %v494
      %v499 = vunpack.c.l.b16 %v484
      %v500 = vunpack.c.l.b16 %v485
      %v501 = vpack.c.b16 %v500, %v499
      %502 = vrot.lane.b32.xlu0 %v501, 32
      %v503 = vpop.permute.xlu0 %502
      %v506 = vunpack.c.l.b16 %v486
      %v507 = vunpack.c.l.b16 %v487
      %v508 = vpack.c.b16 %v507, %v506
      %509 = vrot.lane.b32.xlu0 %v508, 64
      %v510 = vpop.permute.xlu0 %509
      %v513 = vunpack.c.l.b16 %v488
      %v514 = vunpack.c.l.b16 %v489
      %v515 = vpack.c.b16 %v514, %v513
      %516 = vrot.lane.b32.xlu0 %v515, 96
      %v517 = vpop.permute.xlu0 %516
      %v520 = vunpack.c.l.b16 %v490
      %v521 = vunpack.c.l.b16 %v491
      %v522 = vpack.c.b16 %v521, %v520
      %vm523 = vcmask 261120
      %v526 = vsel %vm523, %v496, %v503
      %vm527 = vcmask 523264
      %v529 = vsel %vm527, %v526, %v510
      %vm530 = vcmask 785408
      %v532 = vsel %vm530, %v529, %v517
      %v535 = vsel %vm444, %v368, 0
      %537 = vmatpush.bf16.msra.mxu0 0
      %538 = vmatpush.bf16.msra.mxu0 0
      %539 = vmatpush.bf16.msra.mxu0 0
      %540 = vmatpush.bf16.msra.mxu0 0
      %541 = vmatpush.bf16.msra.mxu0 0
      %542 = vmatpush.bf16.msra.mxu0 0
      %543 = vmatpush.bf16.msra.mxu0 0
      %544 = vmatpush.bf16.msra.mxu0 %v535
      %545 = vmatmul.bf16.gmra.mxu0 %v430
      %v546 = vpop.f32.mrf.mxu0
      %v547 = vadd.f32 0.0, %v546
      %v548 = vpop.f32.mrf.mxu0
      %v549 = vadd.f32 0.0, %v548
      %550 = vmatmul.bf16.gmra.mxu0 %v433
      %v551 = vpop.f32.mrf.mxu0
      %v552 = vadd.f32 0.0, %v551
      %v553 = vpop.f32.mrf.mxu0
      %v554 = vadd.f32 0.0, %v553
      %555 = vmatmul.bf16.gmra.mxu0 %v436
      %v556 = vpop.f32.mrf.mxu0
      %v557 = vadd.f32 0.0, %v556
      %v558 = vpop.f32.mrf.mxu0
      %v559 = vadd.f32 0.0, %v558
      %560 = vmatmul.bf16.gmra.mxu0 %v439
      %v561 = vpop.f32.mrf.mxu0
      %v562 = vadd.f32 0.0, %v561
      %v563 = vpop.f32.mrf.mxu0
      %v564 = vadd.f32 0.0, %v563
      %565 = vmatmul.bf16.gmra.mxu0 %v442
      %v566 = vpop.f32.mrf.mxu0
      %v567 = vadd.f32 0.0, %v566
      %v568 = vpop.f32.mrf.mxu0
      %v569 = vadd.f32 0.0, %v568
      %570 = vdwg.mxu0
      %v571 = vpack.c.bf16 %v547, %v547
      %v572 = vpack.c.bf16 %v549, %v549
      %v573 = vpack.c.bf16 %v552, %v552
      %v574 = vpack.c.bf16 %v554, %v554
      %v575 = vpack.c.bf16 %v557, %v557
      %v576 = vpack.c.bf16 %v559, %v559
      %v577 = vpack.c.bf16 %v562, %v562
      %v578 = vpack.c.bf16 %v564, %v564
      %v579 = vpack.c.bf16 %v567, %v567
      %v580 = vpack.c.bf16 %v569, %v569
      %v583 = vunpack.c.l.b16 %v571
      %v584 = vunpack.c.l.b16 %v572
      %v585 = vpack.c.b16 %v584, %v583
      %v588 = vunpack.c.l.b16 %v573
      %v589 = vunpack.c.l.b16 %v574
      %v590 = vpack.c.b16 %v589, %v588
      %591 = vrot.lane.b32.xlu0 %v590, 32
      %v592 = vpop.permute.xlu0 %591
      %v595 = vunpack.c.l.b16 %v575
      %v596 = vunpack.c.l.b16 %v576
      %v597 = vpack.c.b16 %v596, %v595
      %598 = vrot.lane.b32.xlu0 %v597, 64
      %v599 = vpop.permute.xlu0 %598
      %v602 = vunpack.c.l.b16 %v577
      %v603 = vunpack.c.l.b16 %v578
      %v604 = vpack.c.b16 %v603, %v602
      %605 = vrot.lane.b32.xlu0 %v604, 96
      %v606 = vpop.permute.xlu0 %605
      %v609 = vunpack.c.l.b16 %v579
      %v610 = vunpack.c.l.b16 %v580
      %v611 = vpack.c.b16 %v610, %v609
      %v614 = vsel %vm523, %v585, %v592
      %v616 = vsel %vm527, %v614, %v599
      %v618 = vsel %vm530, %v616, %v606
      %v621 = vsel %vm444, %v370, 0
      %623 = vmatpush.bf16.msra.mxu0 0
      %624 = vmatpush.bf16.msra.mxu0 0
      %625 = vmatpush.bf16.msra.mxu0 0
      %626 = vmatpush.bf16.msra.mxu0 0
      %627 = vmatpush.bf16.msra.mxu0 0
      %628 = vmatpush.bf16.msra.mxu0 0
      %629 = vmatpush.bf16.msra.mxu0 0
      %630 = vmatpush.bf16.msra.mxu0 %v621
      %631 = vmatmul.bf16.gmra.mxu0 %v430
      %v632 = vpop.f32.mrf.mxu0
      %v633 = vadd.f32 0.0, %v632
      %v634 = vpop.f32.mrf.mxu0
      %v635 = vadd.f32 0.0, %v634
      %636 = vmatmul.bf16.gmra.mxu0 %v433
      %v637 = vpop.f32.mrf.mxu0
      %v638 = vadd.f32 0.0, %v637
      %v639 = vpop.f32.mrf.mxu0
      %v640 = vadd.f32 0.0, %v639
      %641 = vmatmul.bf16.gmra.mxu0 %v436
      %v642 = vpop.f32.mrf.mxu0
      %v643 = vadd.f32 0.0, %v642
      %v644 = vpop.f32.mrf.mxu0
      %v645 = vadd.f32 0.0, %v644
      %646 = vmatmul.bf16.gmra.mxu0 %v439
      %v647 = vpop.f32.mrf.mxu0
      %v648 = vadd.f32 0.0, %v647
      %v649 = vpop.f32.mrf.mxu0
      %v650 = vadd.f32 0.0, %v649
      %651 = vmatmul.bf16.gmra.mxu0 %v442
      %v652 = vpop.f32.mrf.mxu0
      %v653 = vadd.f32 0.0, %v652
      %v654 = vpop.f32.mrf.mxu0
      %v655 = vadd.f32 0.0, %v654
      %656 = vdwg.mxu0
      %v657 = vpack.c.bf16 %v633, %v633
      %v658 = vpack.c.bf16 %v635, %v635
      %v659 = vpack.c.bf16 %v638, %v638
      %v660 = vpack.c.bf16 %v640, %v640
      %v661 = vpack.c.bf16 %v643, %v643
      %v662 = vpack.c.bf16 %v645, %v645
      %v663 = vpack.c.bf16 %v648, %v648
      %v664 = vpack.c.bf16 %v650, %v650
      %v665 = vpack.c.bf16 %v653, %v653
      %v666 = vpack.c.bf16 %v655, %v655
      %v669 = vunpack.c.l.b16 %v657
      %v670 = vunpack.c.l.b16 %v658
      %v671 = vpack.c.b16 %v670, %v669
      %v674 = vunpack.c.l.b16 %v659
      %v675 = vunpack.c.l.b16 %v660
      %v676 = vpack.c.b16 %v675, %v674
      %677 = vrot.lane.b32.xlu0 %v676, 32
      %v678 = vpop.permute.xlu0 %677
      %v681 = vunpack.c.l.b16 %v661
      %v682 = vunpack.c.l.b16 %v662
      %v683 = vpack.c.b16 %v682, %v681
      %684 = vrot.lane.b32.xlu0 %v683, 64
      %v685 = vpop.permute.xlu0 %684
      %v688 = vunpack.c.l.b16 %v663
      %v689 = vunpack.c.l.b16 %v664
      %v690 = vpack.c.b16 %v689, %v688
      %691 = vrot.lane.b32.xlu0 %v690, 96
      %v692 = vpop.permute.xlu0 %691
      %v695 = vunpack.c.l.b16 %v665
      %v696 = vunpack.c.l.b16 %v666
      %v697 = vpack.c.b16 %v696, %v695
      %v700 = vsel %vm523, %v671, %v678
      %v702 = vsel %vm527, %v700, %v685
      %v704 = vsel %vm530, %v702, %v692
      %v707 = vsel %vm444, %v372, 0
      %709 = vmatpush.bf16.msra.mxu0 0
      %710 = vmatpush.bf16.msra.mxu0 0
      %711 = vmatpush.bf16.msra.mxu0 0
      %712 = vmatpush.bf16.msra.mxu0 0
      %713 = vmatpush.bf16.msra.mxu0 0
      %714 = vmatpush.bf16.msra.mxu0 0
      %715 = vmatpush.bf16.msra.mxu0 0
      %716 = vmatpush.bf16.msra.mxu0 %v707
      %717 = vmatmul.bf16.gmra.mxu0 %v430
      %v718 = vpop.f32.mrf.mxu0
      %v719 = vadd.f32 0.0, %v718
      %v720 = vpop.f32.mrf.mxu0
      %v721 = vadd.f32 0.0, %v720
      %722 = vmatmul.bf16.gmra.mxu0 %v433
      %v723 = vpop.f32.mrf.mxu0
      %v724 = vadd.f32 0.0, %v723
      %v725 = vpop.f32.mrf.mxu0
      %v726 = vadd.f32 0.0, %v725
      %727 = vmatmul.bf16.gmra.mxu0 %v436
      %v728 = vpop.f32.mrf.mxu0
      %v729 = vadd.f32 0.0, %v728
      %v730 = vpop.f32.mrf.mxu0
      %v731 = vadd.f32 0.0, %v730
      %732 = vmatmul.bf16.gmra.mxu0 %v439
      %v733 = vpop.f32.mrf.mxu0
      %v734 = vadd.f32 0.0, %v733
      %v735 = vpop.f32.mrf.mxu0
      %v736 = vadd.f32 0.0, %v735
      %737 = vmatmul.bf16.gmra.mxu0 %v442
      %v738 = vpop.f32.mrf.mxu0
      %v739 = vadd.f32 0.0, %v738
      %v740 = vpop.f32.mrf.mxu0
      %v741 = vadd.f32 0.0, %v740
      %742 = vdwg.mxu0
      %v743 = vpack.c.bf16 %v719, %v719
      %v744 = vpack.c.bf16 %v721, %v721
      %v745 = vpack.c.bf16 %v724, %v724
      %v746 = vpack.c.bf16 %v726, %v726
      %v747 = vpack.c.bf16 %v729, %v729
      %v748 = vpack.c.bf16 %v731, %v731
      %v749 = vpack.c.bf16 %v734, %v734
      %v750 = vpack.c.bf16 %v736, %v736
      %v751 = vpack.c.bf16 %v739, %v739
      %v752 = vpack.c.bf16 %v741, %v741
      %v755 = vunpack.c.l.b16 %v743
      %v756 = vunpack.c.l.b16 %v744
      %v757 = vpack.c.b16 %v756, %v755
      %v760 = vunpack.c.l.b16 %v745
      %v761 = vunpack.c.l.b16 %v746
      %v762 = vpack.c.b16 %v761, %v760
      %763 = vrot.lane.b32.xlu0 %v762, 32
      %v764 = vpop.permute.xlu0 %763
      %v767 = vunpack.c.l.b16 %v747
      %v768 = vunpack.c.l.b16 %v748
      %v769 = vpack.c.b16 %v768, %v767
      %770 = vrot.lane.b32.xlu0 %v769, 64
      %v771 = vpop.permute.xlu0 %770
      %v774 = vunpack.c.l.b16 %v749
      %v775 = vunpack.c.l.b16 %v750
      %v776 = vpack.c.b16 %v775, %v774
      %777 = vrot.lane.b32.xlu0 %v776, 96
      %v778 = vpop.permute.xlu0 %777
      %v781 = vunpack.c.l.b16 %v751
      %v782 = vunpack.c.l.b16 %v752
      %v783 = vpack.c.b16 %v782, %v781
      %v786 = vsel %vm523, %v757, %v764
      %v788 = vsel %vm527, %v786, %v771
      %v790 = vsel %vm530, %v788, %v778
      %v792 = vld [vmem:[%s3] sm:$0x1]
      %v794 = vperm.slane %v792, 0
      %v816 = vunpack.c.l.b16 %v383
      %v817 = vunpack.c.l.b16 %v384
      %v818 = vunpack.c.l.b16 %v385
      %v819 = vunpack.c.l.b16 %v386
      %v820 = vunpack.c.l.b16 %v387
      %v821 = vunpack.c.l.b16 %v388
      %v822 = vunpack.c.l.b16 %v389
      %v823 = vunpack.c.l.b16 %v390
      %v824 = vunpack.c.l.b16 %v391
      %v825 = vunpack.c.l.b16 %v392
      %v826 = vunpack.c.l.b16 %v393
      %v827 = vunpack.c.l.b16 %v394
      %v828 = vunpack.c.l.b16 %v395
      %v829 = vunpack.c.l.b16 %v396
      %v830 = vunpack.c.l.b16 %v397
      %v831 = vunpack.c.l.b16 %v398
      %v832 = vunpack.c.l.b16 %v399
      %v833 = vunpack.c.l.b16 %v400
      %v834 = vunpack.c.l.b16 %v401
      %v835 = vunpack.c.l.b16 %v402
      %v836 = vpack.c.b16 %v817, %v816
      %v837 = vpack.c.b16 %v819, %v818
      %v838 = vpack.c.b16 %v821, %v820
      %v839 = vpack.c.b16 %v823, %v822
      %v840 = vpack.c.b16 %v825, %v824
      %v841 = vpack.c.b16 %v827, %v826
      %v842 = vpack.c.b16 %v829, %v828
      %v843 = vpack.c.b16 %v831, %v830
      %v844 = vpack.c.b16 %v833, %v832
      %v845 = vpack.c.b16 %v835, %v834
      %v857 = vsel %vm523, %v522, 0
      %v860 = vsel %vm523, %v611, 0
      %v863 = vsel %vm523, %v697, 0
      %v866 = vsel %vm523, %v783, 0
      %868 = vmatpush.bf16.msra.mxu0 %v843
      %869 = vmatpush.bf16.msra.mxu0 %v842
      %870 = vmatpush.bf16.msra.mxu0 %v841
      %871 = vmatpush.bf16.msra.mxu0 %v840
      %872 = vmatpush.bf16.msra.mxu0 %v839
      %873 = vmatpush.bf16.msra.mxu0 %v838
      %874 = vmatpush.bf16.msra.mxu0 %v837
      %875 = vmatpush.bf16.msra.mxu0 %v836
      %876 = vmatmul.bf16.gmra.mxu0 %v532
      %v877 = vpop.f32.mrf.mxu0
      %v878 = vadd.f32 %v794, %v877
      %v879 = vpop.f32.mrf.mxu0
      %v880 = vadd.f32 %v794, %v879
      %881 = vmatmul.bf16.gmra.mxu0 %v618
      %v882 = vpop.f32.mrf.mxu0
      %v883 = vadd.f32 %v794, %v882
      %v884 = vpop.f32.mrf.mxu0
      %v885 = vadd.f32 %v794, %v884
      %886 = vmatmul.bf16.gmra.mxu0 %v704
      %v887 = vpop.f32.mrf.mxu0
      %v888 = vadd.f32 %v794, %v887
      %v889 = vpop.f32.mrf.mxu0
      %v890 = vadd.f32 %v794, %v889
      %891 = vmatmul.bf16.gmra.mxu0 %v790
      %v892 = vpop.f32.mrf.mxu0
      %v893 = vadd.f32 %v794, %v892
      %v894 = vpop.f32.mrf.mxu0
      %v895 = vadd.f32 %v794, %v894
      %896 = vdwg.mxu0
      %897 = vmatpush.bf16.msra.mxu0 0
      %898 = vmatpush.bf16.msra.mxu0 0
      %899 = vmatpush.bf16.msra.mxu0 0
      %900 = vmatpush.bf16.msra.mxu0 0
      %901 = vmatpush.bf16.msra.mxu0 0
      %902 = vmatpush.bf16.msra.mxu0 0
      %903 = vmatpush.bf16.msra.mxu0 %v845
      %904 = vmatpush.bf16.msra.mxu0 %v844
      %905 = vmatmul.bf16.gmra.mxu0 %v857
      %v906 = vpop.f32.mrf.mxu0
      %v907 = vadd.f32 %v878, %v906
      %v908 = vpop.f32.mrf.mxu0
      %v909 = vadd.f32 %v880, %v908
      %910 = vmatmul.bf16.gmra.mxu0 %v860
      %v911 = vpop.f32.mrf.mxu0
      %v912 = vadd.f32 %v883, %v911
      %v913 = vpop.f32.mrf.mxu0
      %v914 = vadd.f32 %v885, %v913
      %915 = vmatmul.bf16.gmra.mxu0 %v863
      %v916 = vpop.f32.mrf.mxu0
      %v917 = vadd.f32 %v888, %v916
      %v918 = vpop.f32.mrf.mxu0
      %v919 = vadd.f32 %v890, %v918
      %920 = vmatmul.bf16.gmra.mxu0 %v866
      %v921 = vpop.f32.mrf.mxu0
      %v922 = vadd.f32 %v893, %v921
      %v923 = vpop.f32.mrf.mxu0
      %v924 = vadd.f32 %v895, %v923
      %925 = vdwg.mxu0
      %v926 = vmax.f32 %v907, 0.0
      %v927 = vmax.f32 %v909, 0.0
      %v928 = vmax.f32 %v912, 0.0
      %v929 = vmax.f32 %v914, 0.0
      %v930 = vmax.f32 %v917, 0.0
      %v931 = vmax.f32 %v919, 0.0
      %v932 = vmax.f32 %v922, 0.0
      %v933 = vmax.f32 %v924, 0.0
      %v934 = vpack.c.bf16 %v926, %v926
      %v935 = vpack.c.bf16 %v927, %v927
      %v936 = vpack.c.bf16 %v928, %v928
      %v937 = vpack.c.bf16 %v929, %v929
      %v938 = vpack.c.bf16 %v930, %v930
      %v939 = vpack.c.bf16 %v931, %v931
      %v940 = vpack.c.bf16 %v932, %v932
      %v941 = vpack.c.bf16 %v933, %v933
      %v942 = vld [vmem:[%s4] sm:$0xf]
      %v943 = vld [vmem:[%s4 + $0x4] sm:$0xf]
      %v944 = vld [vmem:[%s4 + $0x8] sm:$0xf]
      %v945 = vld [vmem:[%s4 + $0xc] sm:$0xf]
      %v946 = vld [vmem:[%s4 + $0x10] sm:$0xf]
      %v947 = vld [vmem:[%s4 + $0x14] sm:$0xf]
      %v948 = vld [vmem:[%s4 + $0x18] sm:$0xf]
      %v949 = vld [vmem:[%s4 + $0x1c] sm:$0xf]
      %v950 = vld [vmem:[%s4 + $0x20] sm:$0xf]
      %v951 = vld [vmem:[%s4 + $0x24] sm:$0xf]
      %v952 = vld [vmem:[%s4 + $0x28] sm:$0xf]
      %v953 = vld [vmem:[%s4 + $0x2c] sm:$0xf]
      %v954 = vld [vmem:[%s4 + $0x30] sm:$0xf]
      %v955 = vld [vmem:[%s4 + $0x34] sm:$0xf]
      %v956 = vld [vmem:[%s4 + $0x38] sm:$0xf]
      %v957 = vld [vmem:[%s4 + $0x3c] sm:$0xf]
      %v958 = vld [vmem:[%s4 + $0x40] sm:$0xf]
      %v959 = vld [vmem:[%s4 + $0x44] sm:$0xf]
      %v960 = vld [vmem:[%s4 + $0x48] sm:$0xf]
      %v961 = vld [vmem:[%s4 + $0x4c] sm:$0xf]
      %v962 = vld [vmem:[%s5] sm:$0xf]
      %v963 = vld [vmem:[%s5 + $0x4] sm:$0xf]
      %v964 = vld [vmem:[%s5 + $0x8] sm:$0xf]
      %v965 = vld [vmem:[%s5 + $0xc] sm:$0xf]
      %v966 = vld [vmem:[%s5 + $0x10] sm:$0xf]
      %v967 = vld [vmem:[%s5 + $0x14] sm:$0xf]
      %v968 = vld [vmem:[%s5 + $0x18] sm:$0xf]
      %v969 = vld [vmem:[%s5 + $0x1c] sm:$0xf]
      %v970 = vld [vmem:[%s5 + $0x20] sm:$0xf]
      %v971 = vld [vmem:[%s5 + $0x24] sm:$0xf]
      %v972 = vld [vmem:[%s5 + $0x28] sm:$0xf]
      %v973 = vld [vmem:[%s5 + $0x2c] sm:$0xf]
      %v974 = vld [vmem:[%s5 + $0x30] sm:$0xf]
      %v975 = vld [vmem:[%s5 + $0x34] sm:$0xf]
      %v976 = vld [vmem:[%s5 + $0x38] sm:$0xf]
      %v977 = vld [vmem:[%s5 + $0x3c] sm:$0xf]
      %v978 = vld [vmem:[%s5 + $0x40] sm:$0xf]
      %v979 = vld [vmem:[%s5 + $0x44] sm:$0xf]
      %v980 = vld [vmem:[%s5 + $0x48] sm:$0xf]
      %v981 = vld [vmem:[%s5 + $0x4c] sm:$0xf]
      %v982 = vld [vmem:[%s5 + $0x50] sm:$0xf]
      %v983 = vld [vmem:[%s5 + $0x54] sm:$0xf]
      %v984 = vld [vmem:[%s5 + $0x58] sm:$0xf]
      %v985 = vld [vmem:[%s5 + $0x5c] sm:$0xf]
      %v986 = vld [vmem:[%s5 + $0x60] sm:$0xf]
      %v987 = vld [vmem:[%s5 + $0x64] sm:$0xf]
      %v988 = vld [vmem:[%s5 + $0x68] sm:$0xf]
      %v989 = vld [vmem:[%s5 + $0x6c] sm:$0xf]
      %v990 = vld [vmem:[%s5 + $0x70] sm:$0xf]
      %v991 = vld [vmem:[%s5 + $0x74] sm:$0xf]
      %v992 = vld [vmem:[%s5 + $0x78] sm:$0xf]
      %v993 = vld [vmem:[%s5 + $0x7c] sm:$0xf]
      %v994 = vld [vmem:[%s5 + $0x80] sm:$0xf]
      %v995 = vld [vmem:[%s5 + $0x84] sm:$0xf]
      %v996 = vld [vmem:[%s5 + $0x88] sm:$0xf]
      %v997 = vld [vmem:[%s5 + $0x8c] sm:$0xf]
      %v998 = vld [vmem:[%s5 + $0x90] sm:$0xf]
      %v999 = vld [vmem:[%s5 + $0x94] sm:$0xf]
      %v1000 = vld [vmem:[%s5 + $0x98] sm:$0xf]
      %v1001 = vld [vmem:[%s5 + $0x9c] sm:$0xf]
      %v1022 = vunpack.c.l.b16 %v942
      %v1023 = vunpack.c.l.b16 %v943
      %v1024 = vunpack.c.l.b16 %v944
      %v1025 = vunpack.c.l.b16 %v945
      %v1026 = vunpack.c.l.b16 %v946
      %v1027 = vunpack.c.l.b16 %v947
      %v1028 = vunpack.c.l.b16 %v948
      %v1029 = vunpack.c.l.b16 %v949
      %v1030 = vunpack.c.l.b16 %v950
      %v1031 = vunpack.c.l.b16 %v951
      %v1032 = vunpack.c.l.b16 %v952
      %v1033 = vunpack.c.l.b16 %v953
      %v1034 = vunpack.c.l.b16 %v954
      %v1035 = vunpack.c.l.b16 %v955
      %v1036 = vunpack.c.l.b16 %v956
      %v1037 = vunpack.c.l.b16 %v957
      %v1038 = vunpack.c.l.b16 %v958
      %v1039 = vunpack.c.l.b16 %v959
      %v1040 = vunpack.c.l.b16 %v960
      %v1041 = vunpack.c.l.b16 %v961
      %v1042 = vpack.c.b16 %v1023, %v1022
      %v1043 = vpack.c.b16 %v1025, %v1024
      %v1044 = vpack.c.b16 %v1027, %v1026
      %v1045 = vpack.c.b16 %v1029, %v1028
      %v1046 = vpack.c.b16 %v1031, %v1030
      %v1047 = vpack.c.b16 %v1033, %v1032
      %v1048 = vpack.c.b16 %v1035, %v1034
      %v1049 = vpack.c.b16 %v1037, %v1036
      %v1050 = vpack.c.b16 %v1039, %v1038
      %v1051 = vpack.c.b16 %v1041, %v1040
      %v1054 = vunpack.c.l.b16 %v934
      %v1055 = vunpack.c.l.b16 %v935
      %v1056 = vpack.c.b16 %v1055, %v1054
      %vm1058 = vcmask 130048
      %v1060 = vsel %vm1058, %v1042, 0
      %v1063 = vsel %vm1058, %v1043, 0
      %v1066 = vsel %vm1058, %v1044, 0
      %v1069 = vsel %vm1058, %v1045, 0
      %v1072 = vsel %vm1058, %v1046, 0
      %v1075 = vsel %vm1058, %v1047, 0
      %v1078 = vsel %vm1058, %v1048, 0
      %v1081 = vsel %vm1058, %v1049, 0
      %v1084 = vsel %vm1058, %v1050, 0
      %v1087 = vsel %vm1058, %v1051, 0
      %1089 = vmatpush.bf16.msra.mxu0 0
      %1090 = vmatpush.bf16.msra.mxu0 0
      %1091 = vmatpush.bf16.msra.mxu0 0
      %1092 = vmatpush.bf16.msra.mxu0 0
      %1093 = vmatpush.bf16.msra.mxu0 0
      %1094 = vmatpush.bf16.msra.mxu0 0
      %1095 = vmatpush.bf16.msra.mxu0 0
      %1096 = vmatpush.bf16.msra.mxu0 %v1056
      %1097 = vmatmul.bf16.gmra.mxu0 %v1060
      %v1098 = vpop.f32.mrf.mxu0
      %v1099 = vadd.f32 0.0, %v1098
      %v1100 = vpop.f32.mrf.mxu0
      %v1101 = vadd.f32 0.0, %v1100
      %1102 = vmatmul.bf16.gmra.mxu0 %v1063
      %v1103 = vpop.f32.mrf.mxu0
      %v1104 = vadd.f32 0.0, %v1103
      %v1105 = vpop.f32.mrf.mxu0
      %v1106 = vadd.f32 0.0, %v1105
      %1107 = vmatmul.bf16.gmra.mxu0 %v1066
      %v1108 = vpop.f32.mrf.mxu0
      %v1109 = vadd.f32 0.0, %v1108
      %v1110 = vpop.f32.mrf.mxu0
      %v1111 = vadd.f32 0.0, %v1110
      %1112 = vmatmul.bf16.gmra.mxu0 %v1069
      %v1113 = vpop.f32.mrf.mxu0
      %v1114 = vadd.f32 0.0, %v1113
      %v1115 = vpop.f32.mrf.mxu0
      %v1116 = vadd.f32 0.0, %v1115
      %1117 = vmatmul.bf16.gmra.mxu0 %v1072
      %v1118 = vpop.f32.mrf.mxu0
      %v1119 = vadd.f32 0.0, %v1118
      %v1120 = vpop.f32.mrf.mxu0
      %v1121 = vadd.f32 0.0, %v1120
      %1122 = vmatmul.bf16.gmra.mxu0 %v1075
      %v1123 = vpop.f32.mrf.mxu0
      %v1124 = vadd.f32 0.0, %v1123
      %v1125 = vpop.f32.mrf.mxu0
      %v1126 = vadd.f32 0.0, %v1125
      %1127 = vmatmul.bf16.gmra.mxu0 %v1078
      %v1128 = vpop.f32.mrf.mxu0
      %v1129 = vadd.f32 0.0, %v1128
      %v1130 = vpop.f32.mrf.mxu0
      %v1131 = vadd.f32 0.0, %v1130
      %1132 = vmatmul.bf16.gmra.mxu0 %v1081
      %v1133 = vpop.f32.mrf.mxu0
      %v1134 = vadd.f32 0.0, %v1133
      %v1135 = vpop.f32.mrf.mxu0
      %v1136 = vadd.f32 0.0, %v1135
      %1137 = vmatmul.bf16.gmra.mxu0 %v1084
      %v1138 = vpop.f32.mrf.mxu0
      %v1139 = vadd.f32 0.0, %v1138
      %v1140 = vpop.f32.mrf.mxu0
      %v1141 = vadd.f32 0.0, %v1140
      %1142 = vmatmul.bf16.gmra.mxu0 %v1087
      %v1143 = vpop.f32.mrf.mxu0
      %v1144 = vadd.f32 0.0, %v1143
      %v1145 = vpop.f32.mrf.mxu0
      %v1146 = vadd.f32 0.0, %v1145
      %1147 = vdwg.mxu0
      %v1148 = vpack.c.bf16 %v1099, %v1099
      %v1149 = vpack.c.bf16 %v1101, %v1101
      %v1150 = vpack.c.bf16 %v1104, %v1104
      %v1151 = vpack.c.bf16 %v1106, %v1106
      %v1152 = vpack.c.bf16 %v1109, %v1109
      %v1153 = vpack.c.bf16 %v1111, %v1111
      %v1154 = vpack.c.bf16 %v1114, %v1114
      %v1155 = vpack.c.bf16 %v1116, %v1116
      %v1156 = vpack.c.bf16 %v1119, %v1119
      %v1157 = vpack.c.bf16 %v1121, %v1121
      %v1158 = vpack.c.bf16 %v1124, %v1124
      %v1159 = vpack.c.bf16 %v1126, %v1126
      %v1160 = vpack.c.bf16 %v1129, %v1129
      %v1161 = vpack.c.bf16 %v1131, %v1131
      %v1162 = vpack.c.bf16 %v1134, %v1134
      %v1163 = vpack.c.bf16 %v1136, %v1136
      %v1164 = vpack.c.bf16 %v1139, %v1139
      %v1165 = vpack.c.bf16 %v1141, %v1141
      %v1166 = vpack.c.bf16 %v1144, %v1144
      %v1167 = vpack.c.bf16 %v1146, %v1146
      %v1172 = vunpack.c.l.b16 %v1148
      %v1173 = vunpack.c.l.b16 %v1149
      %v1174 = vunpack.c.l.b16 %v1150
      %v1175 = vunpack.c.l.b16 %v1151
      %v1176 = vpack.c.b16 %v1173, %v1172
      %v1177 = vpack.c.b16 %v1175, %v1174
      %v1182 = vunpack.c.l.b16 %v1152
      %v1183 = vunpack.c.l.b16 %v1153
      %v1184 = vunpack.c.l.b16 %v1154
      %v1185 = vunpack.c.l.b16 %v1155
      %v1186 = vpack.c.b16 %v1183, %v1182
      %v1187 = vpack.c.b16 %v1185, %v1184
      %1188 = vrot.lane.b32.xlu0 %v1186, 64
      %v1189 = vpop.permute.xlu0 %1188
      %1190 = vrot.lane.b32.xlu0 %v1187, 64
      %v1191 = vpop.permute.xlu0 %1190
      %v1196 = vunpack.c.l.b16 %v1156
      %v1197 = vunpack.c.l.b16 %v1157
      %v1198 = vunpack.c.l.b16 %v1158
      %v1199 = vunpack.c.l.b16 %v1159
      %v1200 = vpack.c.b16 %v1197, %v1196
      %v1201 = vpack.c.b16 %v1199, %v1198
      %v1206 = vunpack.c.l.b16 %v1160
      %v1207 = vunpack.c.l.b16 %v1161
      %v1208 = vunpack.c.l.b16 %v1162
      %v1209 = vunpack.c.l.b16 %v1163
      %v1210 = vpack.c.b16 %v1207, %v1206
      %v1211 = vpack.c.b16 %v1209, %v1208
      %1212 = vrot.lane.b32.xlu0 %v1210, 64
      %v1213 = vpop.permute.xlu0 %1212
      %1214 = vrot.lane.b32.xlu0 %v1211, 64
      %v1215 = vpop.permute.xlu0 %1214
      %v1220 = vunpack.c.l.b16 %v1164
      %v1221 = vunpack.c.l.b16 %v1165
      %v1222 = vunpack.c.l.b16 %v1166
      %v1223 = vunpack.c.l.b16 %v1167
      %v1224 = vpack.c.b16 %v1221, %v1220
      %v1225 = vpack.c.b16 %v1223, %v1222
      %v1228 = vsel %vm527, %v1176, %v1189
      %v1232 = vsel %vm527, %v1177, %v1191
      %v1236 = vsel %vm527, %v1200, %v1213
      %v1240 = vsel %vm527, %v1201, %v1215
      %v1244 = vunpack.c.l.b16 %v936
      %v1245 = vunpack.c.l.b16 %v937
      %v1246 = vpack.c.b16 %v1245, %v1244
      %1248 = vmatpush.bf16.msra.mxu0 0
      %1249 = vmatpush.bf16.msra.mxu0 0
      %1250 = vmatpush.bf16.msra.mxu0 0
      %1251 = vmatpush.bf16.msra.mxu0 0
      %1252 = vmatpush.bf16.msra.mxu0 0
      %1253 = vmatpush.bf16.msra.mxu0 0
      %1254 = vmatpush.bf16.msra.mxu0 0
      %1255 = vmatpush.bf16.msra.mxu0 %v1246
      %1256 = vmatmul.bf16.gmra.mxu0 %v1060
      %v1257 = vpop.f32.mrf.mxu0
      %v1258 = vadd.f32 0.0, %v1257
      %v1259 = vpop.f32.mrf.mxu0
      %v1260 = vadd.f32 0.0, %v1259
      %1261 = vmatmul.bf16.gmra.mxu0 %v1063
      %v1262 = vpop.f32.mrf.mxu0
      %v1263 = vadd.f32 0.0, %v1262
      %v1264 = vpop.f32.mrf.mxu0
      %v1265 = vadd.f32 0.0, %v1264
      %1266 = vmatmul.bf16.gmra.mxu0 %v1066
      %v1267 = vpop.f32.mrf.mxu0
      %v1268 = vadd.f32 0.0, %v1267
      %v1269 = vpop.f32.mrf.mxu0
      %v1270 = vadd.f32 0.0, %v1269
      %1271 = vmatmul.bf16.gmra.mxu0 %v1069
      %v1272 = vpop.f32.mrf.mxu0
      %v1273 = vadd.f32 0.0, %v1272
      %v1274 = vpop.f32.mrf.mxu0
      %v1275 = vadd.f32 0.0, %v1274
      %1276 = vmatmul.bf16.gmra.mxu0 %v1072
      %v1277 = vpop.f32.mrf.mxu0
      %v1278 = vadd.f32 0.0, %v1277
      %v1279 = vpop.f32.mrf.mxu0
      %v1280 = vadd.f32 0.0, %v1279
      %1281 = vmatmul.bf16.gmra.mxu0 %v1075
      %v1282 = vpop.f32.mrf.mxu0
      %v1283 = vadd.f32 0.0, %v1282
      %v1284 = vpop.f32.mrf.mxu0
      %v1285 = vadd.f32 0.0, %v1284
      %1286 = vmatmul.bf16.gmra.mxu0 %v1078
      %v1287 = vpop.f32.mrf.mxu0
      %v1288 = vadd.f32 0.0, %v1287
      %v1289 = vpop.f32.mrf.mxu0
      %v1290 = vadd.f32 0.0, %v1289
      %1291 = vmatmul.bf16.gmra.mxu0 %v1081
      %v1292 = vpop.f32.mrf.mxu0
      %v1293 = vadd.f32 0.0, %v1292
      %v1294 = vpop.f32.mrf.mxu0
      %v1295 = vadd.f32 0.0, %v1294
      %1296 = vmatmul.bf16.gmra.mxu0 %v1084
      %v1297 = vpop.f32.mrf.mxu0
      %v1298 = vadd.f32 0.0, %v1297
      %v1299 = vpop.f32.mrf.mxu0
      %v1300 = vadd.f32 0.0, %v1299
      %1301 = vmatmul.bf16.gmra.mxu0 %v1087
      %v1302 = vpop.f32.mrf.mxu0
      %v1303 = vadd.f32 0.0, %v1302
      %v1304 = vpop.f32.mrf.mxu0
      %v1305 = vadd.f32 0.0, %v1304
      %1306 = vdwg.mxu0
      %v1307 = vpack.c.bf16 %v1258, %v1258
      %v1308 = vpack.c.bf16 %v1260, %v1260
      %v1309 = vpack.c.bf16 %v1263, %v1263
      %v1310 = vpack.c.bf16 %v1265, %v1265
      %v1311 = vpack.c.bf16 %v1268, %v1268
      %v1312 = vpack.c.bf16 %v1270, %v1270
      %v1313 = vpack.c.bf16 %v1273, %v1273
      %v1314 = vpack.c.bf16 %v1275, %v1275
      %v1315 = vpack.c.bf16 %v1278, %v1278
      %v1316 = vpack.c.bf16 %v1280, %v1280
      %v1317 = vpack.c.bf16 %v1283, %v1283
      %v1318 = vpack.c.bf16 %v1285, %v1285
      %v1319 = vpack.c.bf16 %v1288, %v1288
      %v1320 = vpack.c.bf16 %v1290, %v1290
      %v1321 = vpack.c.bf16 %v1293, %v1293
      %v1322 = vpack.c.bf16 %v1295, %v1295
      %v1323 = vpack.c.bf16 %v1298, %v1298
      %v1324 = vpack.c.bf16 %v1300, %v1300
      %v1325 = vpack.c.bf16 %v1303, %v1303
      %v1326 = vpack.c.bf16 %v1305, %v1305
      %v1331 = vunpack.c.l.b16 %v1307
      %v1332 = vunpack.c.l.b16 %v1308
      %v1333 = vunpack.c.l.b16 %v1309
      %v1334 = vunpack.c.l.b16 %v1310
      %v1335 = vpack.c.b16 %v1332, %v1331
      %v1336 = vpack.c.b16 %v1334, %v1333
      %v1341 = vunpack.c.l.b16 %v1311
      %v1342 = vunpack.c.l.b16 %v1312
      %v1343 = vunpack.c.l.b16 %v1313
      %v1344 = vunpack.c.l.b16 %v1314
      %v1345 = vpack.c.b16 %v1342, %v1341
      %v1346 = vpack.c.b16 %v1344, %v1343
      %1347 = vrot.lane.b32.xlu0 %v1345, 64
      %v1348 = vpop.permute.xlu0 %1347
      %1349 = vrot.lane.b32.xlu0 %v1346, 64
      %v1350 = vpop.permute.xlu0 %1349
      %v1355 = vunpack.c.l.b16 %v1315
      %v1356 = vunpack.c.l.b16 %v1316
      %v1357 = vunpack.c.l.b16 %v1317
      %v1358 = vunpack.c.l.b16 %v1318
      %v1359 = vpack.c.b16 %v1356, %v1355
      %v1360 = vpack.c.b16 %v1358, %v1357
      %v1365 = vunpack.c.l.b16 %v1319
      %v1366 = vunpack.c.l.b16 %v1320
      %v1367 = vunpack.c.l.b16 %v1321
      %v1368 = vunpack.c.l.b16 %v1322
      %v1369 = vpack.c.b16 %v1366, %v1365
      %v1370 = vpack.c.b16 %v1368, %v1367
      %1371 = vrot.lane.b32.xlu0 %v1369, 64
      %v1372 = vpop.permute.xlu0 %1371
      %1373 = vrot.lane.b32.xlu0 %v1370, 64
      %v1374 = vpop.permute.xlu0 %1373
      %v1379 = vunpack.c.l.b16 %v1323
      %v1380 = vunpack.c.l.b16 %v1324
      %v1381 = vunpack.c.l.b16 %v1325
      %v1382 = vunpack.c.l.b16 %v1326
      %v1383 = vpack.c.b16 %v1380, %v1379
      %v1384 = vpack.c.b16 %v1382, %v1381
      %v1387 = vsel %vm527, %v1335, %v1348
      %v1391 = vsel %vm527, %v1336, %v1350
      %v1395 = vsel %vm527, %v1359, %v1372
      %v1399 = vsel %vm527, %v1360, %v1374
      %v1403 = vunpack.c.l.b16 %v938
      %v1404 = vunpack.c.l.b16 %v939
      %v1405 = vpack.c.b16 %v1404, %v1403
      %1407 = vmatpush.bf16.msra.mxu0 0
      %1408 = vmatpush.bf16.msra.mxu0 0
      %1409 = vmatpush.bf16.msra.mxu0 0
      %1410 = vmatpush.bf16.msra.mxu0 0
      %1411 = vmatpush.bf16.msra.mxu0 0
      %1412 = vmatpush.bf16.msra.mxu0 0
      %1413 = vmatpush.bf16.msra.mxu0 0
      %1414 = vmatpush.bf16.msra.mxu0 %v1405
      %1415 = vmatmul.bf16.gmra.mxu0 %v1060
      %v1416 = vpop.f32.mrf.mxu0
      %v1417 = vadd.f32 0.0, %v1416
      %v1418 = vpop.f32.mrf.mxu0
      %v1419 = vadd.f32 0.0, %v1418
      %1420 = vmatmul.bf16.gmra.mxu0 %v1063
      %v1421 = vpop.f32.mrf.mxu0
      %v1422 = vadd.f32 0.0, %v1421
      %v1423 = vpop.f32.mrf.mxu0
      %v1424 = vadd.f32 0.0, %v1423
      %1425 = vmatmul.bf16.gmra.mxu0 %v1066
      %v1426 = vpop.f32.mrf.mxu0
      %v1427 = vadd.f32 0.0, %v1426
      %v1428 = vpop.f32.mrf.mxu0
      %v1429 = vadd.f32 0.0, %v1428
      %1430 = vmatmul.bf16.gmra.mxu0 %v1069
      %v1431 = vpop.f32.mrf.mxu0
      %v1432 = vadd.f32 0.0, %v1431
      %v1433 = vpop.f32.mrf.mxu0
      %v1434 = vadd.f32 0.0, %v1433
      %1435 = vmatmul.bf16.gmra.mxu0 %v1072
      %v1436 = vpop.f32.mrf.mxu0
      %v1437 = vadd.f32 0.0, %v1436
      %v1438 = vpop.f32.mrf.mxu0
      %v1439 = vadd.f32 0.0, %v1438
      %1440 = vmatmul.bf16.gmra.mxu0 %v1075
      %v1441 = vpop.f32.mrf.mxu0
      %v1442 = vadd.f32 0.0, %v1441
      %v1443 = vpop.f32.mrf.mxu0
      %v1444 = vadd.f32 0.0, %v1443
      %1445 = vmatmul.bf16.gmra.mxu0 %v1078
      %v1446 = vpop.f32.mrf.mxu0
      %v1447 = vadd.f32 0.0, %v1446
      %v1448 = vpop.f32.mrf.mxu0
      %v1449 = vadd.f32 0.0, %v1448
      %1450 = vmatmul.bf16.gmra.mxu0 %v1081
      %v1451 = vpop.f32.mrf.mxu0
      %v1452 = vadd.f32 0.0, %v1451
      %v1453 = vpop.f32.mrf.mxu0
      %v1454 = vadd.f32 0.0, %v1453
      %1455 = vmatmul.bf16.gmra.mxu0 %v1084
      %v1456 = vpop.f32.mrf.mxu0
      %v1457 = vadd.f32 0.0, %v1456
      %v1458 = vpop.f32.mrf.mxu0
      %v1459 = vadd.f32 0.0, %v1458
      %1460 = vmatmul.bf16.gmra.mxu0 %v1087
      %v1461 = vpop.f32.mrf.mxu0
      %v1462 = vadd.f32 0.0, %v1461
      %v1463 = vpop.f32.mrf.mxu0
      %v1464 = vadd.f32 0.0, %v1463
      %1465 = vdwg.mxu0
      %v1466 = vpack.c.bf16 %v1417, %v1417
      %v1467 = vpack.c.bf16 %v1419, %v1419
      %v1468 = vpack.c.bf16 %v1422, %v1422
      %v1469 = vpack.c.bf16 %v1424, %v1424
      %v1470 = vpack.c.bf16 %v1427, %v1427
      %v1471 = vpack.c.bf16 %v1429, %v1429
      %v1472 = vpack.c.bf16 %v1432, %v1432
      %v1473 = vpack.c.bf16 %v1434, %v1434
      %v1474 = vpack.c.bf16 %v1437, %v1437
      %v1475 = vpack.c.bf16 %v1439, %v1439
      %v1476 = vpack.c.bf16 %v1442, %v1442
      %v1477 = vpack.c.bf16 %v1444, %v1444
      %v1478 = vpack.c.bf16 %v1447, %v1447
      %v1479 = vpack.c.bf16 %v1449, %v1449
      %v1480 = vpack.c.bf16 %v1452, %v1452
      %v1481 = vpack.c.bf16 %v1454, %v1454
      %v1482 = vpack.c.bf16 %v1457, %v1457
      %v1483 = vpack.c.bf16 %v1459, %v1459
      %v1484 = vpack.c.bf16 %v1462, %v1462
      %v1485 = vpack.c.bf16 %v1464, %v1464
      %v1490 = vunpack.c.l.b16 %v1466
      %v1491 = vunpack.c.l.b16 %v1467
      %v1492 = vunpack.c.l.b16 %v1468
      %v1493 = vunpack.c.l.b16 %v1469
      %v1494 = vpack.c.b16 %v1491, %v1490
      %v1495 = vpack.c.b16 %v1493, %v1492
      %v1500 = vunpack.c.l.b16 %v1470
      %v1501 = vunpack.c.l.b16 %v1471
      %v1502 = vunpack.c.l.b16 %v1472
      %v1503 = vunpack.c.l.b16 %v1473
      %v1504 = vpack.c.b16 %v1501, %v1500
      %v1505 = vpack.c.b16 %v1503, %v1502
      %1506 = vrot.lane.b32.xlu0 %v1504, 64
      %v1507 = vpop.permute.xlu0 %1506
      %1508 = vrot.lane.b32.xlu0 %v1505, 64
      %v1509 = vpop.permute.xlu0 %1508
      %v1514 = vunpack.c.l.b16 %v1474
      %v1515 = vunpack.c.l.b16 %v1475
      %v1516 = vunpack.c.l.b16 %v1476
      %v1517 = vunpack.c.l.b16 %v1477
      %v1518 = vpack.c.b16 %v1515, %v1514
      %v1519 = vpack.c.b16 %v1517, %v1516
      %v1524 = vunpack.c.l.b16 %v1478
      %v1525 = vunpack.c.l.b16 %v1479
      %v1526 = vunpack.c.l.b16 %v1480
      %v1527 = vunpack.c.l.b16 %v1481
      %v1528 = vpack.c.b16 %v1525, %v1524
      %v1529 = vpack.c.b16 %v1527, %v1526
      %1530 = vrot.lane.b32.xlu0 %v1528, 64
      %v1531 = vpop.permute.xlu0 %1530
      %1532 = vrot.lane.b32.xlu0 %v1529, 64
      %v1533 = vpop.permute.xlu0 %1532
      %v1538 = vunpack.c.l.b16 %v1482
      %v1539 = vunpack.c.l.b16 %v1483
      %v1540 = vunpack.c.l.b16 %v1484
      %v1541 = vunpack.c.l.b16 %v1485
      %v1542 = vpack.c.b16 %v1539, %v1538
      %v1543 = vpack.c.b16 %v1541, %v1540
      %v1546 = vsel %vm527, %v1494, %v1507
      %v1550 = vsel %vm527, %v1495, %v1509
      %v1554 = vsel %vm527, %v1518, %v1531
      %v1558 = vsel %vm527, %v1519, %v1533
      %v1562 = vunpack.c.l.b16 %v940
      %v1563 = vunpack.c.l.b16 %v941
      %v1564 = vpack.c.b16 %v1563, %v1562
      %1566 = vmatpush.bf16.msra.mxu0 0
      %1567 = vmatpush.bf16.msra.mxu0 0
      %1568 = vmatpush.bf16.msra.mxu0 0
      %1569 = vmatpush.bf16.msra.mxu0 0
      %1570 = vmatpush.bf16.msra.mxu0 0
      %1571 = vmatpush.bf16.msra.mxu0 0
      %1572 = vmatpush.bf16.msra.mxu0 0
      %1573 = vmatpush.bf16.msra.mxu0 %v1564
      %1574 = vmatmul.bf16.gmra.mxu0 %v1060
      %v1575 = vpop.f32.mrf.mxu0
      %v1576 = vadd.f32 0.0, %v1575
      %v1577 = vpop.f32.mrf.mxu0
      %v1578 = vadd.f32 0.0, %v1577
      %1579 = vmatmul.bf16.gmra.mxu0 %v1063
      %v1580 = vpop.f32.mrf.mxu0
      %v1581 = vadd.f32 0.0, %v1580
      %v1582 = vpop.f32.mrf.mxu0
      %v1583 = vadd.f32 0.0, %v1582
      %1584 = vmatmul.bf16.gmra.mxu0 %v1066
      %v1585 = vpop.f32.mrf.mxu0
      %v1586 = vadd.f32 0.0, %v1585
      %v1587 = vpop.f32.mrf.mxu0
      %v1588 = vadd.f32 0.0, %v1587
      %1589 = vmatmul.bf16.gmra.mxu0 %v1069
      %v1590 = vpop.f32.mrf.mxu0
      %v1591 = vadd.f32 0.0, %v1590
      %v1592 = vpop.f32.mrf.mxu0
      %v1593 = vadd.f32 0.0, %v1592
      %1594 = vmatmul.bf16.gmra.mxu0 %v1072
      %v1595 = vpop.f32.mrf.mxu0
      %v1596 = vadd.f32 0.0, %v1595
      %v1597 = vpop.f32.mrf.mxu0
      %v1598 = vadd.f32 0.0, %v1597
      %1599 = vmatmul.bf16.gmra.mxu0 %v1075
      %v1600 = vpop.f32.mrf.mxu0
      %v1601 = vadd.f32 0.0, %v1600
      %v1602 = vpop.f32.mrf.mxu0
      %v1603 = vadd.f32 0.0, %v1602
      %1604 = vmatmul.bf16.gmra.mxu0 %v1078
      %v1605 = vpop.f32.mrf.mxu0
      %v1606 = vadd.f32 0.0, %v1605
      %v1607 = vpop.f32.mrf.mxu0
      %v1608 = vadd.f32 0.0, %v1607
      %1609 = vmatmul.bf16.gmra.mxu0 %v1081
      %v1610 = vpop.f32.mrf.mxu0
      %v1611 = vadd.f32 0.0, %v1610
      %v1612 = vpop.f32.mrf.mxu0
      %v1613 = vadd.f32 0.0, %v1612
      %1614 = vmatmul.bf16.gmra.mxu0 %v1084
      %v1615 = vpop.f32.mrf.mxu0
      %v1616 = vadd.f32 0.0, %v1615
      %v1617 = vpop.f32.mrf.mxu0
      %v1618 = vadd.f32 0.0, %v1617
      %1619 = vmatmul.bf16.gmra.mxu0 %v1087
      %v1620 = vpop.f32.mrf.mxu0
      %v1621 = vadd.f32 0.0, %v1620
      %v1622 = vpop.f32.mrf.mxu0
      %v1623 = vadd.f32 0.0, %v1622
      %1624 = vdwg.mxu0
      %v1625 = vpack.c.bf16 %v1576, %v1576
      %v1626 = vpack.c.bf16 %v1578, %v1578
      %v1627 = vpack.c.bf16 %v1581, %v1581
      %v1628 = vpack.c.bf16 %v1583, %v1583
      %v1629 = vpack.c.bf16 %v1586, %v1586
      %v1630 = vpack.c.bf16 %v1588, %v1588
      %v1631 = vpack.c.bf16 %v1591, %v1591
      %v1632 = vpack.c.bf16 %v1593, %v1593
      %v1633 = vpack.c.bf16 %v1596, %v1596
      %v1634 = vpack.c.bf16 %v1598, %v1598
      %v1635 = vpack.c.bf16 %v1601, %v1601
      %v1636 = vpack.c.bf16 %v1603, %v1603
      %v1637 = vpack.c.bf16 %v1606, %v1606
      %v1638 = vpack.c.bf16 %v1608, %v1608
      %v1639 = vpack.c.bf16 %v1611, %v1611
      %v1640 = vpack.c.bf16 %v1613, %v1613
      %v1641 = vpack.c.bf16 %v1616, %v1616
      %v1642 = vpack.c.bf16 %v1618, %v1618
      %v1643 = vpack.c.bf16 %v1621, %v1621
      %v1644 = vpack.c.bf16 %v1623, %v1623
      %v1649 = vunpack.c.l.b16 %v1625
      %v1650 = vunpack.c.l.b16 %v1626
      %v1651 = vunpack.c.l.b16 %v1627
      %v1652 = vunpack.c.l.b16 %v1628
      %v1653 = vpack.c.b16 %v1650, %v1649
      %v1654 = vpack.c.b16 %v1652, %v1651
      %v1659 = vunpack.c.l.b16 %v1629
      %v1660 = vunpack.c.l.b16 %v1630
      %v1661 = vunpack.c.l.b16 %v1631
      %v1662 = vunpack.c.l.b16 %v1632
      %v1663 = vpack.c.b16 %v1660, %v1659
      %v1664 = vpack.c.b16 %v1662, %v1661
      %1665 = vrot.lane.b32.xlu0 %v1663, 64
      %v1666 = vpop.permute.xlu0 %1665
      %1667 = vrot.lane.b32.xlu0 %v1664, 64
      %v1668 = vpop.permute.xlu0 %1667
      %v1673 = vunpack.c.l.b16 %v1633
      %v1674 = vunpack.c.l.b16 %v1634
      %v1675 = vunpack.c.l.b16 %v1635
      %v1676 = vunpack.c.l.b16 %v1636
      %v1677 = vpack.c.b16 %v1674, %v1673
      %v1678 = vpack.c.b16 %v1676, %v1675
      %v1683 = vunpack.c.l.b16 %v1637
      %v1684 = vunpack.c.l.b16 %v1638
      %v1685 = vunpack.c.l.b16 %v1639
      %v1686 = vunpack.c.l.b16 %v1640
      %v1687 = vpack.c.b16 %v1684, %v1683
      %v1688 = vpack.c.b16 %v1686, %v1685
      %1689 = vrot.lane.b32.xlu0 %v1687, 64
      %v1690 = vpop.permute.xlu0 %1689
      %1691 = vrot.lane.b32.xlu0 %v1688, 64
      %v1692 = vpop.permute.xlu0 %1691
      %v1697 = vunpack.c.l.b16 %v1641
      %v1698 = vunpack.c.l.b16 %v1642
      %v1699 = vunpack.c.l.b16 %v1643
      %v1700 = vunpack.c.l.b16 %v1644
      %v1701 = vpack.c.b16 %v1698, %v1697
      %v1702 = vpack.c.b16 %v1700, %v1699
      %v1705 = vsel %vm527, %v1653, %v1666
      %v1709 = vsel %vm527, %v1654, %v1668
      %v1713 = vsel %vm527, %v1677, %v1690
      %v1717 = vsel %vm527, %v1678, %v1692
      %v1719 = vld [vmem:[%s6] sm:$0x1]
      %v1721 = vperm.slane %v1719, 0
      %v1763 = vunpack.c.l.b16 %v962
      %v1764 = vunpack.c.l.b16 %v963
      %v1765 = vunpack.c.l.b16 %v964
      %v1766 = vunpack.c.l.b16 %v965
      %v1767 = vunpack.c.l.b16 %v966
      %v1768 = vunpack.c.l.b16 %v967
      %v1769 = vunpack.c.l.b16 %v968
      %v1770 = vunpack.c.l.b16 %v969
      %v1771 = vunpack.c.l.b16 %v970
      %v1772 = vunpack.c.l.b16 %v971
      %v1773 = vunpack.c.l.b16 %v972
      %v1774 = vunpack.c.l.b16 %v973
      %v1775 = vunpack.c.l.b16 %v974
      %v1776 = vunpack.c.l.b16 %v975
      %v1777 = vunpack.c.l.b16 %v976
      %v1778 = vunpack.c.l.b16 %v977
      %v1779 = vunpack.c.l.b16 %v978
      %v1780 = vunpack.c.l.b16 %v979
      %v1781 = vunpack.c.l.b16 %v980
      %v1782 = vunpack.c.l.b16 %v981
      %v1783 = vunpack.c.l.b16 %v982
      %v1784 = vunpack.c.l.b16 %v983
      %v1785 = vunpack.c.l.b16 %v984
      %v1786 = vunpack.c.l.b16 %v985
      %v1787 = vunpack.c.l.b16 %v986
      %v1788 = vunpack.c.l.b16 %v987
      %v1789 = vunpack.c.l.b16 %v988
      %v1790 = vunpack.c.l.b16 %v989
      %v1791 = vunpack.c.l.b16 %v990
      %v1792 = vunpack.c.l.b16 %v991
      %v1793 = vunpack.c.l.b16 %v992
      %v1794 = vunpack.c.l.b16 %v993
      %v1795 = vunpack.c.l.b16 %v994
      %v1796 = vunpack.c.l.b16 %v995
      %v1797 = vunpack.c.l.b16 %v996
      %v1798 = vunpack.c.l.b16 %v997
      %v1799 = vunpack.c.l.b16 %v998
      %v1800 = vunpack.c.l.b16 %v999
      %v1801 = vunpack.c.l.b16 %v1000
      %v1802 = vunpack.c.l.b16 %v1001
      %v1803 = vpack.c.b16 %v1764, %v1763
      %v1804 = vpack.c.b16 %v1766, %v1765
      %v1805 = vpack.c.b16 %v1768, %v1767
      %v1806 = vpack.c.b16 %v1770, %v1769
      %v1807 = vpack.c.b16 %v1772, %v1771
      %v1808 = vpack.c.b16 %v1774, %v1773
      %v1809 = vpack.c.b16 %v1776, %v1775
      %v1810 = vpack.c.b16 %v1778, %v1777
      %v1811 = vpack.c.b16 %v1780, %v1779
      %v1812 = vpack.c.b16 %v1782, %v1781
      %v1813 = vpack.c.b16 %v1784, %v1783
      %v1814 = vpack.c.b16 %v1786, %v1785
      %v1815 = vpack.c.b16 %v1788, %v1787
      %v1816 = vpack.c.b16 %v1790, %v1789
      %v1817 = vpack.c.b16 %v1792, %v1791
      %v1818 = vpack.c.b16 %v1794, %v1793
      %v1819 = vpack.c.b16 %v1796, %v1795
      %v1820 = vpack.c.b16 %v1798, %v1797
      %v1821 = vpack.c.b16 %v1800, %v1799
      %v1822 = vpack.c.b16 %v1802, %v1801
      %v1844 = vsel %vm527, %v1224, 0
      %v1847 = vsel %vm527, %v1225, 0
      %v1850 = vsel %vm527, %v1383, 0
      %v1853 = vsel %vm527, %v1384, 0
      %v1856 = vsel %vm527, %v1542, 0
      %v1859 = vsel %vm527, %v1543, 0
      %v1862 = vsel %vm527, %v1701, 0
      %v1865 = vsel %vm527, %v1702, 0
      %1867 = vmatpush.bf16.msra.mxu0 %v1810
      %1868 = vmatpush.bf16.msra.mxu0 %v1809
      %1869 = vmatpush.bf16.msra.mxu0 %v1808
      %1870 = vmatpush.bf16.msra.mxu0 %v1807
      %1871 = vmatpush.bf16.msra.mxu0 %v1806
      %1872 = vmatpush.bf16.msra.mxu0 %v1805
      %1873 = vmatpush.bf16.msra.mxu0 %v1804
      %1874 = vmatpush.bf16.msra.mxu0 %v1803
      %1875 = vmatmul.bf16.gmra.mxu0 %v1228
      %v1876 = vpop.f32.mrf.mxu0
      %v1877 = vadd.f32 %v1721, %v1876
      %v1878 = vpop.f32.mrf.mxu0
      %v1879 = vadd.f32 %v1721, %v1878
      %1880 = vmatmul.bf16.gmra.mxu0 %v1232
      %v1881 = vpop.f32.mrf.mxu0
      %v1882 = vadd.f32 %v1721, %v1881
      %v1883 = vpop.f32.mrf.mxu0
      %v1884 = vadd.f32 %v1721, %v1883
      %1885 = vmatmul.bf16.gmra.mxu0 %v1387
      %v1886 = vpop.f32.mrf.mxu0
      %v1887 = vadd.f32 %v1721, %v1886
      %v1888 = vpop.f32.mrf.mxu0
      %v1889 = vadd.f32 %v1721, %v1888
      %1890 = vmatmul.bf16.gmra.mxu0 %v1391
      %v1891 = vpop.f32.mrf.mxu0
      %v1892 = vadd.f32 %v1721, %v1891
      %v1893 = vpop.f32.mrf.mxu0
      %v1894 = vadd.f32 %v1721, %v1893
      %1895 = vmatmul.bf16.gmra.mxu0 %v1546
      %v1896 = vpop.f32.mrf.mxu0
      %v1897 = vadd.f32 %v1721, %v1896
      %v1898 = vpop.f32.mrf.mxu0
      %v1899 = vadd.f32 %v1721, %v1898
      %1900 = vmatmul.bf16.gmra.mxu0 %v1550
      %v1901 = vpop.f32.mrf.mxu0
      %v1902 = vadd.f32 %v1721, %v1901
      %v1903 = vpop.f32.mrf.mxu0
      %v1904 = vadd.f32 %v1721, %v1903
      %1905 = vmatmul.bf16.gmra.mxu0 %v1705
      %v1906 = vpop.f32.mrf.mxu0
      %v1907 = vadd.f32 %v1721, %v1906
      %v1908 = vpop.f32.mrf.mxu0
      %v1909 = vadd.f32 %v1721, %v1908
      %1910 = vmatmul.bf16.gmra.mxu0 %v1709
      %v1911 = vpop.f32.mrf.mxu0
      %v1912 = vadd.f32 %v1721, %v1911
      %v1913 = vpop.f32.mrf.mxu0
      %v1914 = vadd.f32 %v1721, %v1913
      %1915 = vdwg.mxu0
      %1916 = vmatpush.bf16.msra.mxu0 %v1818
      %1917 = vmatpush.bf16.msra.mxu0 %v1817
      %1918 = vmatpush.bf16.msra.mxu0 %v1816
      %1919 = vmatpush.bf16.msra.mxu0 %v1815
      %1920 = vmatpush.bf16.msra.mxu0 %v1814
      %1921 = vmatpush.bf16.msra.mxu0 %v1813
      %1922 = vmatpush.bf16.msra.mxu0 %v1812
      %1923 = vmatpush.bf16.msra.mxu0 %v1811
      %1924 = vmatmul.bf16.gmra.mxu0 %v1236
      %v1925 = vpop.f32.mrf.mxu0
      %v1926 = vadd.f32 %v1877, %v1925
      %v1927 = vpop.f32.mrf.mxu0
      %v1928 = vadd.f32 %v1879, %v1927
      %1929 = vmatmul.bf16.gmra.mxu0 %v1240
      %v1930 = vpop.f32.mrf.mxu0
      %v1931 = vadd.f32 %v1882, %v1930
      %v1932 = vpop.f32.mrf.mxu0
      %v1933 = vadd.f32 %v1884, %v1932
      %1934 = vmatmul.bf16.gmra.mxu0 %v1395
      %v1935 = vpop.f32.mrf.mxu0
      %v1936 = vadd.f32 %v1887, %v1935
      %v1937 = vpop.f32.mrf.mxu0
      %v1938 = vadd.f32 %v1889, %v1937
      %1939 = vmatmul.bf16.gmra.mxu0 %v1399
      %v1940 = vpop.f32.mrf.mxu0
      %v1941 = vadd.f32 %v1892, %v1940
      %v1942 = vpop.f32.mrf.mxu0
      %v1943 = vadd.f32 %v1894, %v1942
      %1944 = vmatmul.bf16.gmra.mxu0 %v1554
      %v1945 = vpop.f32.mrf.mxu0
      %v1946 = vadd.f32 %v1897, %v1945
      %v1947 = vpop.f32.mrf.mxu0
      %v1948 = vadd.f32 %v1899, %v1947
      %1949 = vmatmul.bf16.gmra.mxu0 %v1558
      %v1950 = vpop.f32.mrf.mxu0
      %v1951 = vadd.f32 %v1902, %v1950
      %v1952 = vpop.f32.mrf.mxu0
      %v1953 = vadd.f32 %v1904, %v1952
      %1954 = vmatmul.bf16.gmra.mxu0 %v1713
      %v1955 = vpop.f32.mrf.mxu0
      %v1956 = vadd.f32 %v1907, %v1955
      %v1957 = vpop.f32.mrf.mxu0
      %v1958 = vadd.f32 %v1909, %v1957
      %1959 = vmatmul.bf16.gmra.mxu0 %v1717
      %v1960 = vpop.f32.mrf.mxu0
      %v1961 = vadd.f32 %v1912, %v1960
      %v1962 = vpop.f32.mrf.mxu0
      %v1963 = vadd.f32 %v1914, %v1962
      %1964 = vdwg.mxu0
      %1965 = vmatpush.bf16.msra.mxu0 0
      %1966 = vmatpush.bf16.msra.mxu0 0
      %1967 = vmatpush.bf16.msra.mxu0 0
      %1968 = vmatpush.bf16.msra.mxu0 0
      %1969 = vmatpush.bf16.msra.mxu0 %v1822
      %1970 = vmatpush.bf16.msra.mxu0 %v1821
      %1971 = vmatpush.bf16.msra.mxu0 %v1820
      %1972 = vmatpush.bf16.msra.mxu0 %v1819
      %1973 = vmatmul.bf16.gmra.mxu0 %v1844
      %v1974 = vpop.f32.mrf.mxu0
      %v1975 = vadd.f32 %v1926, %v1974
      %v1976 = vpop.f32.mrf.mxu0
      %v1977 = vadd.f32 %v1928, %v1976
      %1978 = vmatmul.bf16.gmra.mxu0 %v1847
      %v1979 = vpop.f32.mrf.mxu0
      %v1980 = vadd.f32 %v1931, %v1979
      %v1981 = vpop.f32.mrf.mxu0
      %v1982 = vadd.f32 %v1933, %v1981
      %1983 = vmatmul.bf16.gmra.mxu0 %v1850
      %v1984 = vpop.f32.mrf.mxu0
      %v1985 = vadd.f32 %v1936, %v1984
      %v1986 = vpop.f32.mrf.mxu0
      %v1987 = vadd.f32 %v1938, %v1986
      %1988 = vmatmul.bf16.gmra.mxu0 %v1853
      %v1989 = vpop.f32.mrf.mxu0
      %v1990 = vadd.f32 %v1941, %v1989
      %v1991 = vpop.f32.mrf.mxu0
      %v1992 = vadd.f32 %v1943, %v1991
      %1993 = vmatmul.bf16.gmra.mxu0 %v1856
      %v1994 = vpop.f32.mrf.mxu0
      %v1995 = vadd.f32 %v1946, %v1994
      %v1996 = vpop.f32.mrf.mxu0
      %v1997 = vadd.f32 %v1948, %v1996
      %1998 = vmatmul.bf16.gmra.mxu0 %v1859
      %v1999 = vpop.f32.mrf.mxu0
      %v2000 = vadd.f32 %v1951, %v1999
      %v2001 = vpop.f32.mrf.mxu0
      %v2002 = vadd.f32 %v1953, %v2001
      %2003 = vmatmul.bf16.gmra.mxu0 %v1862
      %v2004 = vpop.f32.mrf.mxu0
      %v2005 = vadd.f32 %v1956, %v2004
      %v2006 = vpop.f32.mrf.mxu0
      %v2007 = vadd.f32 %v1958, %v2006
      %2008 = vmatmul.bf16.gmra.mxu0 %v1865
      %v2009 = vpop.f32.mrf.mxu0
      %v2010 = vadd.f32 %v1961, %v2009
      %v2011 = vpop.f32.mrf.mxu0
      %v2012 = vadd.f32 %v1963, %v2011
      %2013 = vdwg.mxu0
      %v2014 = vmax.f32 %v1975, 0.0
      %v2015 = vmax.f32 %v1977, 0.0
      %v2016 = vmax.f32 %v1980, 0.0
      %v2017 = vmax.f32 %v1982, 0.0
      %v2018 = vmax.f32 %v1985, 0.0
      %v2019 = vmax.f32 %v1987, 0.0
      %v2020 = vmax.f32 %v1990, 0.0
      %v2021 = vmax.f32 %v1992, 0.0
      %v2022 = vmax.f32 %v1995, 0.0
      %v2023 = vmax.f32 %v1997, 0.0
      %v2024 = vmax.f32 %v2000, 0.0
      %v2025 = vmax.f32 %v2002, 0.0
      %v2026 = vmax.f32 %v2005, 0.0
      %v2027 = vmax.f32 %v2007, 0.0
      %v2028 = vmax.f32 %v2010, 0.0
      %v2029 = vmax.f32 %v2012, 0.0
      %v2030 = vpack.c.bf16 %v2014, %v2014
      %v2031 = vpack.c.bf16 %v2015, %v2015
      %v2032 = vpack.c.bf16 %v2016, %v2016
      %v2033 = vpack.c.bf16 %v2017, %v2017
      %v2034 = vpack.c.bf16 %v2018, %v2018
      %v2035 = vpack.c.bf16 %v2019, %v2019
      %v2036 = vpack.c.bf16 %v2020, %v2020
      %v2037 = vpack.c.bf16 %v2021, %v2021
      %v2038 = vpack.c.bf16 %v2022, %v2022
      %v2039 = vpack.c.bf16 %v2023, %v2023
      %v2040 = vpack.c.bf16 %v2024, %v2024
      %v2041 = vpack.c.bf16 %v2025, %v2025
      %v2042 = vpack.c.bf16 %v2026, %v2026
      %v2043 = vpack.c.bf16 %v2027, %v2027
      %v2044 = vpack.c.bf16 %v2028, %v2028
      %v2045 = vpack.c.bf16 %v2029, %v2029
      %v2046 = vld [vmem:[%s7] sm:$0xf]
      %v2047 = vld [vmem:[%s7 + $0x4] sm:$0xf]
      %v2048 = vld [vmem:[%s7 + $0x8] sm:$0xf]
      %v2049 = vld [vmem:[%s7 + $0xc] sm:$0xf]
      %v2050 = vld [vmem:[%s7 + $0x10] sm:$0xf]
      %v2051 = vld [vmem:[%s7 + $0x14] sm:$0xf]
      %v2052 = vld [vmem:[%s7 + $0x18] sm:$0xf]
      %v2053 = vld [vmem:[%s7 + $0x1c] sm:$0xf]
      %v2054 = vld [vmem:[%s7 + $0x20] sm:$0xf]
      %v2055 = vld [vmem:[%s7 + $0x24] sm:$0xf]
      %v2056 = vld [vmem:[%s7 + $0x28] sm:$0xf]
      %v2057 = vld [vmem:[%s7 + $0x2c] sm:$0xf]
      %v2058 = vld [vmem:[%s8] sm:$0xff]
      %v2059 = vld [vmem:[%s8 + $0x8] sm:$0xff]
      %v2060 = vld [vmem:[%s8 + $0x10] sm:$0xff]
      %v2061 = vld [vmem:[%s8 + $0x18] sm:$0xff]
      %v2062 = vld [vmem:[%s8 + $0x20] sm:$0xff]
      %v2063 = vld [vmem:[%s8 + $0x28] sm:$0xff]
      %v2064 = vld [vmem:[%s8 + $0x30] sm:$0xff]
      %v2065 = vld [vmem:[%s8 + $0x38] sm:$0xff]
      %v2066 = vld [vmem:[%s8 + $0x40] sm:$0xff]
      %v2067 = vld [vmem:[%s8 + $0x48] sm:$0xff]
      %v2068 = vld [vmem:[%s8 + $0x50] sm:$0xff]
      %v2069 = vld [vmem:[%s8 + $0x58] sm:$0xff]
      %v2070 = vld [vmem:[%s8 + $0x60] sm:$0xff]
      %v2071 = vld [vmem:[%s8 + $0x68] sm:$0xff]
      %v2072 = vld [vmem:[%s8 + $0x70] sm:$0xff]
      %v2073 = vld [vmem:[%s8 + $0x78] sm:$0xff]
      %v2074 = vld [vmem:[%s8 + $0x80] sm:$0xff]
      %v2075 = vld [vmem:[%s8 + $0x88] sm:$0xff]
      %v2076 = vld [vmem:[%s8 + $0x90] sm:$0xff]
      %v2077 = vld [vmem:[%s8 + $0x98] sm:$0xff]
      %v2078 = vld [vmem:[%s8 + $0xa0] sm:$0xff]
      %v2079 = vld [vmem:[%s8 + $0xa8] sm:$0xff]
      %v2080 = vld [vmem:[%s8 + $0xb0] sm:$0xff]
      %v2081 = vld [vmem:[%s8 + $0xb8] sm:$0xff]
      %v2082 = vld [vmem:[%s8 + $0xc0] sm:$0xff]
      %v2083 = vld [vmem:[%s8 + $0xc8] sm:$0xff]
      %v2084 = vld [vmem:[%s8 + $0xd0] sm:$0xff]
      %v2085 = vld [vmem:[%s8 + $0xd8] sm:$0xff]
      %v2086 = vld [vmem:[%s8 + $0xe0] sm:$0xff]
      %v2087 = vld [vmem:[%s8 + $0xe8] sm:$0xff]
      %v2088 = vld [vmem:[%s8 + $0xf0] sm:$0xff]
      %v2089 = vld [vmem:[%s8 + $0xf8] sm:$0xff]
      %v2090 = vld [vmem:[%s8 + $0x100] sm:$0xff]
      %v2091 = vld [vmem:[%s8 + $0x108] sm:$0xff]
      %v2092 = vld [vmem:[%s8 + $0x110] sm:$0xff]
      %v2093 = vld [vmem:[%s8 + $0x118] sm:$0xff]
      %v2094 = vld [vmem:[%s8 + $0x120] sm:$0xff]
      %v2095 = vld [vmem:[%s8 + $0x128] sm:$0xff]
      %v2096 = vld [vmem:[%s8 + $0x130] sm:$0xff]
      %v2097 = vld [vmem:[%s8 + $0x138] sm:$0xff]
      %v2098 = vld [vmem:[%s8 + $0x140] sm:$0xff]
      %v2099 = vld [vmem:[%s8 + $0x148] sm:$0xff]
      %v2100 = vld [vmem:[%s8 + $0x150] sm:$0xff]
      %v2101 = vld [vmem:[%s8 + $0x158] sm:$0xff]
      %v2102 = vld [vmem:[%s8 + $0x160] sm:$0xff]
      %v2103 = vld [vmem:[%s8 + $0x168] sm:$0xff]
      %v2104 = vld [vmem:[%s8 + $0x170] sm:$0xff]
      %v2105 = vld [vmem:[%s8 + $0x178] sm:$0xff]
      %v2118 = vunpack.c.l.b16 %v2046
      %v2119 = vunpack.c.l.b16 %v2047
      %v2120 = vunpack.c.l.b16 %v2048
      %v2121 = vunpack.c.l.b16 %v2049
      %v2122 = vunpack.c.l.b16 %v2050
      %v2123 = vunpack.c.l.b16 %v2051
      %v2124 = vunpack.c.l.b16 %v2052
      %v2125 = vunpack.c.l.b16 %v2053
      %v2126 = vunpack.c.l.b16 %v2054
      %v2127 = vunpack.c.l.b16 %v2055
      %v2128 = vunpack.c.l.b16 %v2056
      %v2129 = vunpack.c.l.b16 %v2057
      %v2130 = vpack.c.b16 %v2119, %v2118
      %v2131 = vpack.c.b16 %v2121, %v2120
      %v2132 = vpack.c.b16 %v2123, %v2122
      %v2133 = vpack.c.b16 %v2125, %v2124
      %v2134 = vpack.c.b16 %v2127, %v2126
      %v2135 = vpack.c.b16 %v2129, %v2128
      %v2140 = vunpack.c.l.b16 %v2030
      %v2141 = vunpack.c.l.b16 %v2031
      %v2142 = vunpack.c.l.b16 %v2032
      %v2143 = vunpack.c.l.b16 %v2033
      %v2144 = vpack.c.b16 %v2141, %v2140
      %v2145 = vpack.c.b16 %v2143, %v2142
      %v2149 = vsel %vm523, %v2130, 0
      %v2152 = vsel %vm523, %v2131, 0
      %v2155 = vsel %vm523, %v2132, 0
      %v2158 = vsel %vm523, %v2133, 0
      %v2161 = vsel %vm523, %v2134, 0
      %v2164 = vsel %vm523, %v2135, 0
      %2166 = vmatpush.bf16.msra.mxu0 0
      %2167 = vmatpush.bf16.msra.mxu0 0
      %2168 = vmatpush.bf16.msra.mxu0 0
      %2169 = vmatpush.bf16.msra.mxu0 0
      %2170 = vmatpush.bf16.msra.mxu0 0
      %2171 = vmatpush.bf16.msra.mxu0 0
      %2172 = vmatpush.bf16.msra.mxu0 %v2145
      %2173 = vmatpush.bf16.msra.mxu0 %v2144
      %2174 = vmatmul.bf16.gmra.mxu0 %v2149
      %v2175 = vpop.f32.mrf.mxu0
      %v2176 = vadd.f32 0.0, %v2175
      %v2177 = vpop.f32.mrf.mxu0
      %v2178 = vadd.f32 0.0, %v2177
      %2179 = vmatmul.bf16.gmra.mxu0 %v2152
      %v2180 = vpop.f32.mrf.mxu0
      %v2181 = vadd.f32 0.0, %v2180
      %v2182 = vpop.f32.mrf.mxu0
      %v2183 = vadd.f32 0.0, %v2182
      %2184 = vmatmul.bf16.gmra.mxu0 %v2155
      %v2185 = vpop.f32.mrf.mxu0
      %v2186 = vadd.f32 0.0, %v2185
      %v2187 = vpop.f32.mrf.mxu0
      %v2188 = vadd.f32 0.0, %v2187
      %2189 = vmatmul.bf16.gmra.mxu0 %v2158
      %v2190 = vpop.f32.mrf.mxu0
      %v2191 = vadd.f32 0.0, %v2190
      %v2192 = vpop.f32.mrf.mxu0
      %v2193 = vadd.f32 0.0, %v2192
      %2194 = vmatmul.bf16.gmra.mxu0 %v2161
      %v2195 = vpop.f32.mrf.mxu0
      %v2196 = vadd.f32 0.0, %v2195
      %v2197 = vpop.f32.mrf.mxu0
      %v2198 = vadd.f32 0.0, %v2197
      %2199 = vmatmul.bf16.gmra.mxu0 %v2164
      %v2200 = vpop.f32.mrf.mxu0
      %v2201 = vadd.f32 0.0, %v2200
      %v2202 = vpop.f32.mrf.mxu0
      %v2203 = vadd.f32 0.0, %v2202
      %2204 = vdwg.mxu0
      %v2205 = vpack.c.bf16 %v2176, %v2176
      %v2206 = vpack.c.bf16 %v2178, %v2178
      %v2207 = vpack.c.bf16 %v2181, %v2181
      %v2208 = vpack.c.bf16 %v2183, %v2183
      %v2209 = vpack.c.bf16 %v2186, %v2186
      %v2210 = vpack.c.bf16 %v2188, %v2188
      %v2211 = vpack.c.bf16 %v2191, %v2191
      %v2212 = vpack.c.bf16 %v2193, %v2193
      %v2213 = vpack.c.bf16 %v2196, %v2196
      %v2214 = vpack.c.bf16 %v2198, %v2198
      %v2215 = vpack.c.bf16 %v2201, %v2201
      %v2216 = vpack.c.bf16 %v2203, %v2203
      %v2221 = vunpack.c.l.b16 %v2205
      %v2222 = vunpack.c.l.b16 %v2206
      %v2223 = vunpack.c.l.b16 %v2207
      %v2224 = vunpack.c.l.b16 %v2208
      %v2225 = vpack.c.b16 %v2222, %v2221
      %v2226 = vpack.c.b16 %v2224, %v2223
      %v2233 = vunpack.c.l.b16 %v2209
      %v2234 = vunpack.c.l.b16 %v2210
      %v2235 = vunpack.c.l.b16 %v2211
      %v2236 = vunpack.c.l.b16 %v2212
      %v2237 = vpack.c.b16 %v2234, %v2233
      %v2238 = vpack.c.b16 %v2236, %v2235
      %v2245 = vunpack.c.l.b16 %v2213
      %v2246 = vunpack.c.l.b16 %v2214
      %v2247 = vunpack.c.l.b16 %v2215
      %v2248 = vunpack.c.l.b16 %v2216
      %v2249 = vpack.c.b16 %v2246, %v2245
      %v2250 = vpack.c.b16 %v2248, %v2247
      %v2257 = vunpack.c.l.b16 %v2034
      %v2258 = vunpack.c.l.b16 %v2035
      %v2259 = vunpack.c.l.b16 %v2036
      %v2260 = vunpack.c.l.b16 %v2037
      %v2261 = vpack.c.b16 %v2258, %v2257
      %v2262 = vpack.c.b16 %v2260, %v2259
      %2265 = vmatpush.bf16.msra.mxu0 0
      %2266 = vmatpush.bf16.msra.mxu0 0
      %2267 = vmatpush.bf16.msra.mxu0 0
      %2268 = vmatpush.bf16.msra.mxu0 0
      %2269 = vmatpush.bf16.msra.mxu0 0
      %2270 = vmatpush.bf16.msra.mxu0 0
      %2271 = vmatpush.bf16.msra.mxu0 %v2262
      %2272 = vmatpush.bf16.msra.mxu0 %v2261
      %2273 = vmatmul.bf16.gmra.mxu0 %v2149
      %v2274 = vpop.f32.mrf.mxu0
      %v2275 = vadd.f32 0.0, %v2274
      %v2276 = vpop.f32.mrf.mxu0
      %v2277 = vadd.f32 0.0, %v2276
      %2278 = vmatmul.bf16.gmra.mxu0 %v2152
      %v2279 = vpop.f32.mrf.mxu0
      %v2280 = vadd.f32 0.0, %v2279
      %v2281 = vpop.f32.mrf.mxu0
      %v2282 = vadd.f32 0.0, %v2281
      %2283 = vmatmul.bf16.gmra.mxu0 %v2155
      %v2284 = vpop.f32.mrf.mxu0
      %v2285 = vadd.f32 0.0, %v2284
      %v2286 = vpop.f32.mrf.mxu0
      %v2287 = vadd.f32 0.0, %v2286
      %2288 = vmatmul.bf16.gmra.mxu0 %v2158
      %v2289 = vpop.f32.mrf.mxu0
      %v2290 = vadd.f32 0.0, %v2289
      %v2291 = vpop.f32.mrf.mxu0
      %v2292 = vadd.f32 0.0, %v2291
      %2293 = vmatmul.bf16.gmra.mxu0 %v2161
      %v2294 = vpop.f32.mrf.mxu0
      %v2295 = vadd.f32 0.0, %v2294
      %v2296 = vpop.f32.mrf.mxu0
      %v2297 = vadd.f32 0.0, %v2296
      %2298 = vmatmul.bf16.gmra.mxu0 %v2164
      %v2299 = vpop.f32.mrf.mxu0
      %v2300 = vadd.f32 0.0, %v2299
      %v2301 = vpop.f32.mrf.mxu0
      %v2302 = vadd.f32 0.0, %v2301
      %2303 = vdwg.mxu0
      %v2304 = vpack.c.bf16 %v2275, %v2275
      %v2305 = vpack.c.bf16 %v2277, %v2277
      %v2306 = vpack.c.bf16 %v2280, %v2280
      %v2307 = vpack.c.bf16 %v2282, %v2282
      %v2308 = vpack.c.bf16 %v2285, %v2285
      %v2309 = vpack.c.bf16 %v2287, %v2287
      %v2310 = vpack.c.bf16 %v2290, %v2290
      %v2311 = vpack.c.bf16 %v2292, %v2292
      %v2312 = vpack.c.bf16 %v2295, %v2295
      %v2313 = vpack.c.bf16 %v2297, %v2297
      %v2314 = vpack.c.bf16 %v2300, %v2300
      %v2315 = vpack.c.bf16 %v2302, %v2302
      %v2320 = vunpack.c.l.b16 %v2304
      %v2321 = vunpack.c.l.b16 %v2305
      %v2322 = vunpack.c.l.b16 %v2306
      %v2323 = vunpack.c.l.b16 %v2307
      %v2324 = vpack.c.b16 %v2321, %v2320
      %v2325 = vpack.c.b16 %v2323, %v2322
      %v2332 = vunpack.c.l.b16 %v2308
      %v2333 = vunpack.c.l.b16 %v2309
      %v2334 = vunpack.c.l.b16 %v2310
      %v2335 = vunpack.c.l.b16 %v2311
      %v2336 = vpack.c.b16 %v2333, %v2332
      %v2337 = vpack.c.b16 %v2335, %v2334
      %v2344 = vunpack.c.l.b16 %v2312
      %v2345 = vunpack.c.l.b16 %v2313
      %v2346 = vunpack.c.l.b16 %v2314
      %v2347 = vunpack.c.l.b16 %v2315
      %v2348 = vpack.c.b16 %v2345, %v2344
      %v2349 = vpack.c.b16 %v2347, %v2346
      %v2356 = vunpack.c.l.b16 %v2038
      %v2357 = vunpack.c.l.b16 %v2039
      %v2358 = vunpack.c.l.b16 %v2040
      %v2359 = vunpack.c.l.b16 %v2041
      %v2360 = vpack.c.b16 %v2357, %v2356
      %v2361 = vpack.c.b16 %v2359, %v2358
      %2364 = vmatpush.bf16.msra.mxu0 0
      %2365 = vmatpush.bf16.msra.mxu0 0
      %2366 = vmatpush.bf16.msra.mxu0 0
      %2367 = vmatpush.bf16.msra.mxu0 0
      %2368 = vmatpush.bf16.msra.mxu0 0
      %2369 = vmatpush.bf16.msra.mxu0 0
      %2370 = vmatpush.bf16.msra.mxu0 %v2361
      %2371 = vmatpush.bf16.msra.mxu0 %v2360
      %2372 = vmatmul.bf16.gmra.mxu0 %v2149
      %v2373 = vpop.f32.mrf.mxu0
      %v2374 = vadd.f32 0.0, %v2373
      %v2375 = vpop.f32.mrf.mxu0
      %v2376 = vadd.f32 0.0, %v2375
      %2377 = vmatmul.bf16.gmra.mxu0 %v2152
      %v2378 = vpop.f32.mrf.mxu0
      %v2379 = vadd.f32 0.0, %v2378
      %v2380 = vpop.f32.mrf.mxu0
      %v2381 = vadd.f32 0.0, %v2380
      %2382 = vmatmul.bf16.gmra.mxu0 %v2155
      %v2383 = vpop.f32.mrf.mxu0
      %v2384 = vadd.f32 0.0, %v2383
      %v2385 = vpop.f32.mrf.mxu0
      %v2386 = vadd.f32 0.0, %v2385
      %2387 = vmatmul.bf16.gmra.mxu0 %v2158
      %v2388 = vpop.f32.mrf.mxu0
      %v2389 = vadd.f32 0.0, %v2388
      %v2390 = vpop.f32.mrf.mxu0
      %v2391 = vadd.f32 0.0, %v2390
      %2392 = vmatmul.bf16.gmra.mxu0 %v2161
      %v2393 = vpop.f32.mrf.mxu0
      %v2394 = vadd.f32 0.0, %v2393
      %v2395 = vpop.f32.mrf.mxu0
      %v2396 = vadd.f32 0.0, %v2395
      %2397 = vmatmul.bf16.gmra.mxu0 %v2164
      %v2398 = vpop.f32.mrf.mxu0
      %v2399 = vadd.f32 0.0, %v2398
      %v2400 = vpop.f32.mrf.mxu0
      %v2401 = vadd.f32 0.0, %v2400
      %2402 = vdwg.mxu0
      %v2403 = vpack.c.bf16 %v2374, %v2374
      %v2404 = vpack.c.bf16 %v2376, %v2376
      %v2405 = vpack.c.bf16 %v2379, %v2379
      %v2406 = vpack.c.bf16 %v2381, %v2381
      %v2407 = vpack.c.bf16 %v2384, %v2384
      %v2408 = vpack.c.bf16 %v2386, %v2386
      %v2409 = vpack.c.bf16 %v2389, %v2389
      %v2410 = vpack.c.bf16 %v2391, %v2391
      %v2411 = vpack.c.bf16 %v2394, %v2394
      %v2412 = vpack.c.bf16 %v2396, %v2396
      %v2413 = vpack.c.bf16 %v2399, %v2399
      %v2414 = vpack.c.bf16 %v2401, %v2401
      %v2419 = vunpack.c.l.b16 %v2403
      %v2420 = vunpack.c.l.b16 %v2404
      %v2421 = vunpack.c.l.b16 %v2405
      %v2422 = vunpack.c.l.b16 %v2406
      %v2423 = vpack.c.b16 %v2420, %v2419
      %v2424 = vpack.c.b16 %v2422, %v2421
      %v2431 = vunpack.c.l.b16 %v2407
      %v2432 = vunpack.c.l.b16 %v2408
      %v2433 = vunpack.c.l.b16 %v2409
      %v2434 = vunpack.c.l.b16 %v2410
      %v2435 = vpack.c.b16 %v2432, %v2431
      %v2436 = vpack.c.b16 %v2434, %v2433
      %v2443 = vunpack.c.l.b16 %v2411
      %v2444 = vunpack.c.l.b16 %v2412
      %v2445 = vunpack.c.l.b16 %v2413
      %v2446 = vunpack.c.l.b16 %v2414
      %v2447 = vpack.c.b16 %v2444, %v2443
      %v2448 = vpack.c.b16 %v2446, %v2445
      %v2455 = vunpack.c.l.b16 %v2042
      %v2456 = vunpack.c.l.b16 %v2043
      %v2457 = vunpack.c.l.b16 %v2044
      %v2458 = vunpack.c.l.b16 %v2045
      %v2459 = vpack.c.b16 %v2456, %v2455
      %v2460 = vpack.c.b16 %v2458, %v2457
      %2463 = vmatpush.bf16.msra.mxu0 0
      %2464 = vmatpush.bf16.msra.mxu0 0
      %2465 = vmatpush.bf16.msra.mxu0 0
      %2466 = vmatpush.bf16.msra.mxu0 0
      %2467 = vmatpush.bf16.msra.mxu0 0
      %2468 = vmatpush.bf16.msra.mxu0 0
      %2469 = vmatpush.bf16.msra.mxu0 %v2460
      %2470 = vmatpush.bf16.msra.mxu0 %v2459
      %2471 = vmatmul.bf16.gmra.mxu0 %v2149
      %v2472 = vpop.f32.mrf.mxu0
      %v2473 = vadd.f32 0.0, %v2472
      %v2474 = vpop.f32.mrf.mxu0
      %v2475 = vadd.f32 0.0, %v2474
      %2476 = vmatmul.bf16.gmra.mxu0 %v2152
      %v2477 = vpop.f32.mrf.mxu0
      %v2478 = vadd.f32 0.0, %v2477
      %v2479 = vpop.f32.mrf.mxu0
      %v2480 = vadd.f32 0.0, %v2479
      %2481 = vmatmul.bf16.gmra.mxu0 %v2155
      %v2482 = vpop.f32.mrf.mxu0
      %v2483 = vadd.f32 0.0, %v2482
      %v2484 = vpop.f32.mrf.mxu0
      %v2485 = vadd.f32 0.0, %v2484
      %2486 = vmatmul.bf16.gmra.mxu0 %v2158
      %v2487 = vpop.f32.mrf.mxu0
      %v2488 = vadd.f32 0.0, %v2487
      %v2489 = vpop.f32.mrf.mxu0
      %v2490 = vadd.f32 0.0, %v2489
      %2491 = vmatmul.bf16.gmra.mxu0 %v2161
      %v2492 = vpop.f32.mrf.mxu0
      %v2493 = vadd.f32 0.0, %v2492
      %v2494 = vpop.f32.mrf.mxu0
      %v2495 = vadd.f32 0.0, %v2494
      %2496 = vmatmul.bf16.gmra.mxu0 %v2164
      %v2497 = vpop.f32.mrf.mxu0
      %v2498 = vadd.f32 0.0, %v2497
      %v2499 = vpop.f32.mrf.mxu0
      %v2500 = vadd.f32 0.0, %v2499
      %2501 = vdwg.mxu0
      %v2502 = vpack.c.bf16 %v2473, %v2473
      %v2503 = vpack.c.bf16 %v2475, %v2475
      %v2504 = vpack.c.bf16 %v2478, %v2478
      %v2505 = vpack.c.bf16 %v2480, %v2480
      %v2506 = vpack.c.bf16 %v2483, %v2483
      %v2507 = vpack.c.bf16 %v2485, %v2485
      %v2508 = vpack.c.bf16 %v2488, %v2488
      %v2509 = vpack.c.bf16 %v2490, %v2490
      %v2510 = vpack.c.bf16 %v2493, %v2493
      %v2511 = vpack.c.bf16 %v2495, %v2495
      %v2512 = vpack.c.bf16 %v2498, %v2498
      %v2513 = vpack.c.bf16 %v2500, %v2500
      %v2518 = vunpack.c.l.b16 %v2502
      %v2519 = vunpack.c.l.b16 %v2503
      %v2520 = vunpack.c.l.b16 %v2504
      %v2521 = vunpack.c.l.b16 %v2505
      %v2522 = vpack.c.b16 %v2519, %v2518
      %v2523 = vpack.c.b16 %v2521, %v2520
      %v2530 = vunpack.c.l.b16 %v2506
      %v2531 = vunpack.c.l.b16 %v2507
      %v2532 = vunpack.c.l.b16 %v2508
      %v2533 = vunpack.c.l.b16 %v2509
      %v2534 = vpack.c.b16 %v2531, %v2530
      %v2535 = vpack.c.b16 %v2533, %v2532
      %v2542 = vunpack.c.l.b16 %v2510
      %v2543 = vunpack.c.l.b16 %v2511
      %v2544 = vunpack.c.l.b16 %v2512
      %v2545 = vunpack.c.l.b16 %v2513
      %v2546 = vpack.c.b16 %v2543, %v2542
      %v2547 = vpack.c.b16 %v2545, %v2544
      %v2550 = vld [vmem:[%s9] sm:$0x3]
      %v2552 = vperm.slane %v2550, 0
      %v2553 = vperm.slane %v2550, 1
      %v2604 = vunpack.c.l.b16 %v2058
      %v2605 = vunpack.c.h.b16 %v2058
      %v2606 = vunpack.c.l.b16 %v2059
      %v2607 = vunpack.c.h.b16 %v2059
      %v2608 = vunpack.c.l.b16 %v2060
      %v2609 = vunpack.c.h.b16 %v2060
      %v2610 = vunpack.c.l.b16 %v2061
      %v2611 = vunpack.c.h.b16 %v2061
      %v2612 = vunpack.c.l.b16 %v2062
      %v2613 = vunpack.c.h.b16 %v2062
      %v2614 = vunpack.c.l.b16 %v2063
      %v2615 = vunpack.c.h.b16 %v2063
      %v2616 = vunpack.c.l.b16 %v2064
      %v2617 = vunpack.c.h.b16 %v2064
      %v2618 = vunpack.c.l.b16 %v2065
      %v2619 = vunpack.c.h.b16 %v2065
      %v2620 = vunpack.c.l.b16 %v2066
      %v2621 = vunpack.c.h.b16 %v2066
      %v2622 = vunpack.c.l.b16 %v2067
      %v2623 = vunpack.c.h.b16 %v2067
      %v2624 = vunpack.c.l.b16 %v2068
      %v2625 = vunpack.c.h.b16 %v2068
      %v2626 = vunpack.c.l.b16 %v2069
      %v2627 = vunpack.c.h.b16 %v2069
      %v2628 = vunpack.c.l.b16 %v2070
      %v2629 = vunpack.c.h.b16 %v2070
      %v2630 = vunpack.c.l.b16 %v2071
      %v2631 = vunpack.c.h.b16 %v2071
      %v2632 = vunpack.c.l.b16 %v2072
      %v2633 = vunpack.c.h.b16 %v2072
      %v2634 = vunpack.c.l.b16 %v2073
      %v2635 = vunpack.c.h.b16 %v2073
      %v2636 = vunpack.c.l.b16 %v2074
      %v2637 = vunpack.c.h.b16 %v2074
      %v2638 = vunpack.c.l.b16 %v2075
      %v2639 = vunpack.c.h.b16 %v2075
      %v2640 = vunpack.c.l.b16 %v2076
      %v2641 = vunpack.c.h.b16 %v2076
      %v2642 = vunpack.c.l.b16 %v2077
      %v2643 = vunpack.c.h.b16 %v2077
      %v2644 = vunpack.c.l.b16 %v2078
      %v2645 = vunpack.c.h.b16 %v2078
      %v2646 = vunpack.c.l.b16 %v2079
      %v2647 = vunpack.c.h.b16 %v2079
      %v2648 = vunpack.c.l.b16 %v2080
      %v2649 = vunpack.c.h.b16 %v2080
      %v2650 = vunpack.c.l.b16 %v2081
      %v2651 = vunpack.c.h.b16 %v2081
      %v2652 = vunpack.c.l.b16 %v2082
      %v2653 = vunpack.c.h.b16 %v2082
      %v2654 = vunpack.c.l.b16 %v2083
      %v2655 = vunpack.c.h.b16 %v2083
      %v2656 = vunpack.c.l.b16 %v2084
      %v2657 = vunpack.c.h.b16 %v2084
      %v2658 = vunpack.c.l.b16 %v2085
      %v2659 = vunpack.c.h.b16 %v2085
      %v2660 = vunpack.c.l.b16 %v2086
      %v2661 = vunpack.c.h.b16 %v2086
      %v2662 = vunpack.c.l.b16 %v2087
      %v2663 = vunpack.c.h.b16 %v2087
      %v2664 = vunpack.c.l.b16 %v2088
      %v2665 = vunpack.c.h.b16 %v2088
      %v2666 = vunpack.c.l.b16 %v2089
      %v2667 = vunpack.c.h.b16 %v2089
      %v2668 = vunpack.c.l.b16 %v2090
      %v2669 = vunpack.c.h.b16 %v2090
      %v2670 = vunpack.c.l.b16 %v2091
      %v2671 = vunpack.c.h.b16 %v2091
      %v2672 = vunpack.c.l.b16 %v2092
      %v2673 = vunpack.c.h.b16 %v2092
      %v2674 = vunpack.c.l.b16 %v2093
      %v2675 = vunpack.c.h.b16 %v2093
      %v2676 = vunpack.c.l.b16 %v2094
      %v2677 = vunpack.c.h.b16 %v2094
      %v2678 = vunpack.c.l.b16 %v2095
      %v2679 = vunpack.c.h.b16 %v2095
      %v2680 = vunpack.c.l.b16 %v2096
      %v2681 = vunpack.c.h.b16 %v2096
      %v2682 = vunpack.c.l.b16 %v2097
      %v2683 = vunpack.c.h.b16 %v2097
      %v2684 = vunpack.c.l.b16 %v2098
      %v2685 = vunpack.c.h.b16 %v2098
      %v2686 = vunpack.c.l.b16 %v2099
      %v2687 = vunpack.c.h.b16 %v2099
      %v2688 = vunpack.c.l.b16 %v2100
      %v2689 = vunpack.c.h.b16 %v2100
      %v2690 = vunpack.c.l.b16 %v2101
      %v2691 = vunpack.c.h.b16 %v2101
      %v2692 = vunpack.c.l.b16 %v2102
      %v2693 = vunpack.c.h.b16 %v2102
      %v2694 = vunpack.c.l.b16 %v2103
      %v2695 = vunpack.c.h.b16 %v2103
      %v2696 = vunpack.c.l.b16 %v2104
      %v2697 = vunpack.c.h.b16 %v2104
      %v2698 = vunpack.c.l.b16 %v2105
      %v2699 = vunpack.c.h.b16 %v2105
      %v2700 = vpack.c.b16 %v2606, %v2604
      %v2701 = vpack.c.b16 %v2607, %v2605
      %v2702 = vpack.c.b16 %v2610, %v2608
      %v2703 = vpack.c.b16 %v2611, %v2609
      %v2704 = vpack.c.b16 %v2614, %v2612
      %v2705 = vpack.c.b16 %v2615, %v2613
      %v2706 = vpack.c.b16 %v2618, %v2616
      %v2707 = vpack.c.b16 %v2619, %v2617
      %v2708 = vpack.c.b16 %v2622, %v2620
      %v2709 = vpack.c.b16 %v2623, %v2621
      %v2710 = vpack.c.b16 %v2626, %v2624
      %v2711 = vpack.c.b16 %v2627, %v2625
      %v2712 = vpack.c.b16 %v2630, %v2628
      %v2713 = vpack.c.b16 %v2631, %v2629
      %v2714 = vpack.c.b16 %v2634, %v2632
      %v2715 = vpack.c.b16 %v2635, %v2633
      %v2716 = vpack.c.b16 %v2638, %v2636
      %v2717 = vpack.c.b16 %v2639, %v2637
      %v2718 = vpack.c.b16 %v2642, %v2640
      %v2719 = vpack.c.b16 %v2643, %v2641
      %v2720 = vpack.c.b16 %v2646, %v2644
      %v2721 = vpack.c.b16 %v2647, %v2645
      %v2722 = vpack.c.b16 %v2650, %v2648
      %v2723 = vpack.c.b16 %v2651, %v2649
      %v2724 = vpack.c.b16 %v2654, %v2652
      %v2725 = vpack.c.b16 %v2655, %v2653
      %v2726 = vpack.c.b16 %v2658, %v2656
      %v2727 = vpack.c.b16 %v2659, %v2657
      %v2728 = vpack.c.b16 %v2662, %v2660
      %v2729 = vpack.c.b16 %v2663, %v2661
      %v2730 = vpack.c.b16 %v2666, %v2664
      %v2731 = vpack.c.b16 %v2667, %v2665
      %v2732 = vpack.c.b16 %v2670, %v2668
      %v2733 = vpack.c.b16 %v2671, %v2669
      %v2734 = vpack.c.b16 %v2674, %v2672
      %v2735 = vpack.c.b16 %v2675, %v2673
      %v2736 = vpack.c.b16 %v2678, %v2676
      %v2737 = vpack.c.b16 %v2679, %v2677
      %v2738 = vpack.c.b16 %v2682, %v2680
      %v2739 = vpack.c.b16 %v2683, %v2681
      %v2740 = vpack.c.b16 %v2686, %v2684
      %v2741 = vpack.c.b16 %v2687, %v2685
      %v2742 = vpack.c.b16 %v2690, %v2688
      %v2743 = vpack.c.b16 %v2691, %v2689
      %v2744 = vpack.c.b16 %v2694, %v2692
      %v2745 = vpack.c.b16 %v2695, %v2693
      %v2746 = vpack.c.b16 %v2698, %v2696
      %v2747 = vpack.c.b16 %v2699, %v2697
      %2796 = vmatpush.bf16.msra.mxu0 %v2714
      %2797 = vmatpush.bf16.msra.mxu0 %v2712
      %2798 = vmatpush.bf16.msra.mxu0 %v2710
      %2799 = vmatpush.bf16.msra.mxu0 %v2708
      %2800 = vmatpush.bf16.msra.mxu0 %v2706
      %2801 = vmatpush.bf16.msra.mxu0 %v2704
      %2802 = vmatpush.bf16.msra.mxu0 %v2702
      %2803 = vmatpush.bf16.msra.mxu0 %v2700
      %2804 = vmatmul.bf16.gmra.mxu0 %v2225
      %v2805 = vpop.f32.mrf.mxu0
      %v2806 = vadd.f32 %v2552, %v2805
      %v2807 = vpop.f32.mrf.mxu0
      %v2808 = vadd.f32 %v2552, %v2807
      %2809 = vmatmul.bf16.gmra.mxu0 %v2226
      %v2810 = vpop.f32.mrf.mxu0
      %v2811 = vadd.f32 %v2552, %v2810
      %v2812 = vpop.f32.mrf.mxu0
      %v2813 = vadd.f32 %v2552, %v2812
      %2814 = vmatmul.bf16.gmra.mxu0 %v2324
      %v2815 = vpop.f32.mrf.mxu0
      %v2816 = vadd.f32 %v2552, %v2815
      %v2817 = vpop.f32.mrf.mxu0
      %v2818 = vadd.f32 %v2552, %v2817
      %2819 = vmatmul.bf16.gmra.mxu0 %v2325
      %v2820 = vpop.f32.mrf.mxu0
      %v2821 = vadd.f32 %v2552, %v2820
      %v2822 = vpop.f32.mrf.mxu0
      %v2823 = vadd.f32 %v2552, %v2822
      %2824 = vmatmul.bf16.gmra.mxu0 %v2423
      %v2825 = vpop.f32.mrf.mxu0
      %v2826 = vadd.f32 %v2552, %v2825
      %v2827 = vpop.f32.mrf.mxu0
      %v2828 = vadd.f32 %v2552, %v2827
      %2829 = vmatmul.bf16.gmra.mxu0 %v2424
      %v2830 = vpop.f32.mrf.mxu0
      %v2831 = vadd.f32 %v2552, %v2830
      %v2832 = vpop.f32.mrf.mxu0
      %v2833 = vadd.f32 %v2552, %v2832
      %2834 = vmatmul.bf16.gmra.mxu0 %v2522
      %v2835 = vpop.f32.mrf.mxu0
      %v2836 = vadd.f32 %v2552, %v2835
      %v2837 = vpop.f32.mrf.mxu0
      %v2838 = vadd.f32 %v2552, %v2837
      %2839 = vmatmul.bf16.gmra.mxu0 %v2523
      %v2840 = vpop.f32.mrf.mxu0
      %v2841 = vadd.f32 %v2552, %v2840
      %v2842 = vpop.f32.mrf.mxu0
      %v2843 = vadd.f32 %v2552, %v2842
      %2844 = vdwg.mxu0
      %2845 = vmatpush.bf16.msra.mxu0 %v2730
      %2846 = vmatpush.bf16.msra.mxu0 %v2728
      %2847 = vmatpush.bf16.msra.mxu0 %v2726
      %2848 = vmatpush.bf16.msra.mxu0 %v2724
      %2849 = vmatpush.bf16.msra.mxu0 %v2722
      %2850 = vmatpush.bf16.msra.mxu0 %v2720
      %2851 = vmatpush.bf16.msra.mxu0 %v2718
      %2852 = vmatpush.bf16.msra.mxu0 %v2716
      %2853 = vmatmul.bf16.gmra.mxu0 %v2237
      %v2854 = vpop.f32.mrf.mxu0
      %v2855 = vadd.f32 %v2806, %v2854
      %v2856 = vpop.f32.mrf.mxu0
      %v2857 = vadd.f32 %v2808, %v2856
      %2858 = vmatmul.bf16.gmra.mxu0 %v2238
      %v2859 = vpop.f32.mrf.mxu0
      %v2860 = vadd.f32 %v2811, %v2859
      %v2861 = vpop.f32.mrf.mxu0
      %v2862 = vadd.f32 %v2813, %v2861
      %2863 = vmatmul.bf16.gmra.mxu0 %v2336
      %v2864 = vpop.f32.mrf.mxu0
      %v2865 = vadd.f32 %v2816, %v2864
      %v2866 = vpop.f32.mrf.mxu0
      %v2867 = vadd.f32 %v2818, %v2866
      %2868 = vmatmul.bf16.gmra.mxu0 %v2337
      %v2869 = vpop.f32.mrf.mxu0
      %v2870 = vadd.f32 %v2821, %v2869
      %v2871 = vpop.f32.mrf.mxu0
      %v2872 = vadd.f32 %v2823, %v2871
      %2873 = vmatmul.bf16.gmra.mxu0 %v2435
      %v2874 = vpop.f32.mrf.mxu0
      %v2875 = vadd.f32 %v2826, %v2874
      %v2876 = vpop.f32.mrf.mxu0
      %v2877 = vadd.f32 %v2828, %v2876
      %2878 = vmatmul.bf16.gmra.mxu0 %v2436
      %v2879 = vpop.f32.mrf.mxu0
      %v2880 = vadd.f32 %v2831, %v2879
      %v2881 = vpop.f32.mrf.mxu0
      %v2882 = vadd.f32 %v2833, %v2881
      %2883 = vmatmul.bf16.gmra.mxu0 %v2534
      %v2884 = vpop.f32.mrf.mxu0
      %v2885 = vadd.f32 %v2836, %v2884
      %v2886 = vpop.f32.mrf.mxu0
      %v2887 = vadd.f32 %v2838, %v2886
      %2888 = vmatmul.bf16.gmra.mxu0 %v2535
      %v2889 = vpop.f32.mrf.mxu0
      %v2890 = vadd.f32 %v2841, %v2889
      %v2891 = vpop.f32.mrf.mxu0
      %v2892 = vadd.f32 %v2843, %v2891
      %2893 = vdwg.mxu0
      %2894 = vmatpush.bf16.msra.mxu0 %v2746
      %2895 = vmatpush.bf16.msra.mxu0 %v2744
      %2896 = vmatpush.bf16.msra.mxu0 %v2742
      %2897 = vmatpush.bf16.msra.mxu0 %v2740
      %2898 = vmatpush.bf16.msra.mxu0 %v2738
      %2899 = vmatpush.bf16.msra.mxu0 %v2736
      %2900 = vmatpush.bf16.msra.mxu0 %v2734
      %2901 = vmatpush.bf16.msra.mxu0 %v2732
      %2902 = vmatmul.bf16.gmra.mxu0 %v2249
      %v2903 = vpop.f32.mrf.mxu0
      %v2904 = vadd.f32 %v2855, %v2903
      %v2905 = vpop.f32.mrf.mxu0
      %v2906 = vadd.f32 %v2857, %v2905
      %2907 = vmatmul.bf16.gmra.mxu0 %v2250
      %v2908 = vpop.f32.mrf.mxu0
      %v2909 = vadd.f32 %v2860, %v2908
      %v2910 = vpop.f32.mrf.mxu0
      %v2911 = vadd.f32 %v2862, %v2910
      %2912 = vmatmul.bf16.gmra.mxu0 %v2348
      %v2913 = vpop.f32.mrf.mxu0
      %v2914 = vadd.f32 %v2865, %v2913
      %v2915 = vpop.f32.mrf.mxu0
      %v2916 = vadd.f32 %v2867, %v2915
      %2917 = vmatmul.bf16.gmra.mxu0 %v2349
      %v2918 = vpop.f32.mrf.mxu0
      %v2919 = vadd.f32 %v2870, %v2918
      %v2920 = vpop.f32.mrf.mxu0
      %v2921 = vadd.f32 %v2872, %v2920
      %2922 = vmatmul.bf16.gmra.mxu0 %v2447
      %v2923 = vpop.f32.mrf.mxu0
      %v2924 = vadd.f32 %v2875, %v2923
      %v2925 = vpop.f32.mrf.mxu0
      %v2926 = vadd.f32 %v2877, %v2925
      %2927 = vmatmul.bf16.gmra.mxu0 %v2448
      %v2928 = vpop.f32.mrf.mxu0
      %v2929 = vadd.f32 %v2880, %v2928
      %v2930 = vpop.f32.mrf.mxu0
      %v2931 = vadd.f32 %v2882, %v2930
      %2932 = vmatmul.bf16.gmra.mxu0 %v2546
      %v2933 = vpop.f32.mrf.mxu0
      %v2934 = vadd.f32 %v2885, %v2933
      %v2935 = vpop.f32.mrf.mxu0
      %v2936 = vadd.f32 %v2887, %v2935
      %2937 = vmatmul.bf16.gmra.mxu0 %v2547
      %v2938 = vpop.f32.mrf.mxu0
      %v2939 = vadd.f32 %v2890, %v2938
      %v2940 = vpop.f32.mrf.mxu0
      %v2941 = vadd.f32 %v2892, %v2940
      %2942 = vdwg.mxu0
      %2943 = vmatpush.bf16.msra.mxu0 %v2715
      %2944 = vmatpush.bf16.msra.mxu0 %v2713
      %2945 = vmatpush.bf16.msra.mxu0 %v2711
      %2946 = vmatpush.bf16.msra.mxu0 %v2709
      %2947 = vmatpush.bf16.msra.mxu0 %v2707
      %2948 = vmatpush.bf16.msra.mxu0 %v2705
      %2949 = vmatpush.bf16.msra.mxu0 %v2703
      %2950 = vmatpush.bf16.msra.mxu0 %v2701
      %2951 = vmatmul.bf16.gmra.mxu0 %v2225
      %v2952 = vpop.f32.mrf.mxu0
      %v2953 = vadd.f32 %v2553, %v2952
      %v2954 = vpop.f32.mrf.mxu0
      %v2955 = vadd.f32 %v2553, %v2954
      %2956 = vmatmul.bf16.gmra.mxu0 %v2226
      %v2957 = vpop.f32.mrf.mxu0
      %v2958 = vadd.f32 %v2553, %v2957
      %v2959 = vpop.f32.mrf.mxu0
      %v2960 = vadd.f32 %v2553, %v2959
      %2961 = vmatmul.bf16.gmra.mxu0 %v2324
      %v2962 = vpop.f32.mrf.mxu0
      %v2963 = vadd.f32 %v2553, %v2962
      %v2964 = vpop.f32.mrf.mxu0
      %v2965 = vadd.f32 %v2553, %v2964
      %2966 = vmatmul.bf16.gmra.mxu0 %v2325
      %v2967 = vpop.f32.mrf.mxu0
      %v2968 = vadd.f32 %v2553, %v2967
      %v2969 = vpop.f32.mrf.mxu0
      %v2970 = vadd.f32 %v2553, %v2969
      %2971 = vmatmul.bf16.gmra.mxu0 %v2423
      %v2972 = vpop.f32.mrf.mxu0
      %v2973 = vadd.f32 %v2553, %v2972
      %v2974 = vpop.f32.mrf.mxu0
      %v2975 = vadd.f32 %v2553, %v2974
      %2976 = vmatmul.bf16.gmra.mxu0 %v2424
      %v2977 = vpop.f32.mrf.mxu0
      %v2978 = vadd.f32 %v2553, %v2977
      %v2979 = vpop.f32.mrf.mxu0
      %v2980 = vadd.f32 %v2553, %v2979
      %2981 = vmatmul.bf16.gmra.mxu0 %v2522
      %v2982 = vpop.f32.mrf.mxu0
      %v2983 = vadd.f32 %v2553, %v2982
      %v2984 = vpop.f32.mrf.mxu0
      %v2985 = vadd.f32 %v2553, %v2984
      %2986 = vmatmul.bf16.gmra.mxu0 %v2523
      %v2987 = vpop.f32.mrf.mxu0
      %v2988 = vadd.f32 %v2553, %v2987
      %v2989 = vpop.f32.mrf.mxu0
      %v2990 = vadd.f32 %v2553, %v2989
      %2991 = vdwg.mxu0
      %2992 = vmatpush.bf16.msra.mxu0 %v2731
      %2993 = vmatpush.bf16.msra.mxu0 %v2729
      %2994 = vmatpush.bf16.msra.mxu0 %v2727
      %2995 = vmatpush.bf16.msra.mxu0 %v2725
      %2996 = vmatpush.bf16.msra.mxu0 %v2723
      %2997 = vmatpush.bf16.msra.mxu0 %v2721
      %2998 = vmatpush.bf16.msra.mxu0 %v2719
      %2999 = vmatpush.bf16.msra.mxu0 %v2717
      %3000 = vmatmul.bf16.gmra.mxu0 %v2237
      %v3001 = vpop.f32.mrf.mxu0
      %v3002 = vadd.f32 %v2953, %v3001
      %v3003 = vpop.f32.mrf.mxu0
      %v3004 = vadd.f32 %v2955, %v3003
      %3005 = vmatmul.bf16.gmra.mxu0 %v2238
      %v3006 = vpop.f32.mrf.mxu0
      %v3007 = vadd.f32 %v2958, %v3006
      %v3008 = vpop.f32.mrf.mxu0
      %v3009 = vadd.f32 %v2960, %v3008
      %3010 = vmatmul.bf16.gmra.mxu0 %v2336
      %v3011 = vpop.f32.mrf.mxu0
      %v3012 = vadd.f32 %v2963, %v3011
      %v3013 = vpop.f32.mrf.mxu0
      %v3014 = vadd.f32 %v2965, %v3013
      %3015 = vmatmul.bf16.gmra.mxu0 %v2337
      %v3016 = vpop.f32.mrf.mxu0
      %v3017 = vadd.f32 %v2968, %v3016
      %v3018 = vpop.f32.mrf.mxu0
      %v3019 = vadd.f32 %v2970, %v3018
      %3020 = vmatmul.bf16.gmra.mxu0 %v2435
      %v3021 = vpop.f32.mrf.mxu0
      %v3022 = vadd.f32 %v2973, %v3021
      %v3023 = vpop.f32.mrf.mxu0
      %v3024 = vadd.f32 %v2975, %v3023
      %3025 = vmatmul.bf16.gmra.mxu0 %v2436
      %v3026 = vpop.f32.mrf.mxu0
      %v3027 = vadd.f32 %v2978, %v3026
      %v3028 = vpop.f32.mrf.mxu0
      %v3029 = vadd.f32 %v2980, %v3028
      %3030 = vmatmul.bf16.gmra.mxu0 %v2534
      %v3031 = vpop.f32.mrf.mxu0
      %v3032 = vadd.f32 %v2983, %v3031
      %v3033 = vpop.f32.mrf.mxu0
      %v3034 = vadd.f32 %v2985, %v3033
      %3035 = vmatmul.bf16.gmra.mxu0 %v2535
      %v3036 = vpop.f32.mrf.mxu0
      %v3037 = vadd.f32 %v2988, %v3036
      %v3038 = vpop.f32.mrf.mxu0
      %v3039 = vadd.f32 %v2990, %v3038
      %3040 = vdwg.mxu0
      %3041 = vmatpush.bf16.msra.mxu0 %v2747
      %3042 = vmatpush.bf16.msra.mxu0 %v2745
      %3043 = vmatpush.bf16.msra.mxu0 %v2743
      %3044 = vmatpush.bf16.msra.mxu0 %v2741
      %3045 = vmatpush.bf16.msra.mxu0 %v2739
      %3046 = vmatpush.bf16.msra.mxu0 %v2737
      %3047 = vmatpush.bf16.msra.mxu0 %v2735
      %3048 = vmatpush.bf16.msra.mxu0 %v2733
      %3049 = vmatmul.bf16.gmra.mxu0 %v2249
      %v3050 = vpop.f32.mrf.mxu0
      %v3051 = vadd.f32 %v3002, %v3050
      %v3052 = vpop.f32.mrf.mxu0
      %v3053 = vadd.f32 %v3004, %v3052
      %3054 = vmatmul.bf16.gmra.mxu0 %v2250
      %v3055 = vpop.f32.mrf.mxu0
      %v3056 = vadd.f32 %v3007, %v3055
      %v3057 = vpop.f32.mrf.mxu0
      %v3058 = vadd.f32 %v3009, %v3057
      %3059 = vmatmul.bf16.gmra.mxu0 %v2348
      %v3060 = vpop.f32.mrf.mxu0
      %v3061 = vadd.f32 %v3012, %v3060
      %v3062 = vpop.f32.mrf.mxu0
      %v3063 = vadd.f32 %v3014, %v3062
      %3064 = vmatmul.bf16.gmra.mxu0 %v2349
      %v3065 = vpop.f32.mrf.mxu0
      %v3066 = vadd.f32 %v3017, %v3065
      %v3067 = vpop.f32.mrf.mxu0
      %v3068 = vadd.f32 %v3019, %v3067
      %3069 = vmatmul.bf16.gmra.mxu0 %v2447
      %v3070 = vpop.f32.mrf.mxu0
      %v3071 = vadd.f32 %v3022, %v3070
      %v3072 = vpop.f32.mrf.mxu0
      %v3073 = vadd.f32 %v3024, %v3072
      %3074 = vmatmul.bf16.gmra.mxu0 %v2448
      %v3075 = vpop.f32.mrf.mxu0
      %v3076 = vadd.f32 %v3027, %v3075
      %v3077 = vpop.f32.mrf.mxu0
      %v3078 = vadd.f32 %v3029, %v3077
      %3079 = vmatmul.bf16.gmra.mxu0 %v2546
      %v3080 = vpop.f32.mrf.mxu0
      %v3081 = vadd.f32 %v3032, %v3080
      %v3082 = vpop.f32.mrf.mxu0
      %v3083 = vadd.f32 %v3034, %v3082
      %3084 = vmatmul.bf16.gmra.mxu0 %v2547
      %v3085 = vpop.f32.mrf.mxu0
      %v3086 = vadd.f32 %v3037, %v3085
      %v3087 = vpop.f32.mrf.mxu0
      %v3088 = vadd.f32 %v3039, %v3087
      %3089 = vdwg.mxu0
      %v3090 = vmax.f32 %v2904, 0.0
      %v3091 = vmax.f32 %v3051, 0.0
      %v3092 = vmax.f32 %v2906, 0.0
      %v3093 = vmax.f32 %v3053, 0.0
      %v3094 = vmax.f32 %v2909, 0.0
      %v3095 = vmax.f32 %v3056, 0.0
      %v3096 = vmax.f32 %v2911, 0.0
      %v3097 = vmax.f32 %v3058, 0.0
      %v3098 = vmax.f32 %v2914, 0.0
      %v3099 = vmax.f32 %v3061, 0.0
      %v3100 = vmax.f32 %v2916, 0.0
      %v3101 = vmax.f32 %v3063, 0.0
      %v3102 = vmax.f32 %v2919, 0.0
      %v3103 = vmax.f32 %v3066, 0.0
      %v3104 = vmax.f32 %v2921, 0.0
      %v3105 = vmax.f32 %v3068, 0.0
      %v3106 = vmax.f32 %v2924, 0.0
      %v3107 = vmax.f32 %v3071, 0.0
      %v3108 = vmax.f32 %v2926, 0.0
      %v3109 = vmax.f32 %v3073, 0.0
      %v3110 = vmax.f32 %v2929, 0.0
      %v3111 = vmax.f32 %v3076, 0.0
      %v3112 = vmax.f32 %v2931, 0.0
      %v3113 = vmax.f32 %v3078, 0.0
      %v3114 = vmax.f32 %v2934, 0.0
      %v3115 = vmax.f32 %v3081, 0.0
      %v3116 = vmax.f32 %v2936, 0.0
      %v3117 = vmax.f32 %v3083, 0.0
      %v3118 = vmax.f32 %v2939, 0.0
      %v3119 = vmax.f32 %v3086, 0.0
      %v3120 = vmax.f32 %v2941, 0.0
      %v3121 = vmax.f32 %v3088, 0.0
      %3122 = vst [vmem:[%s363] sm:$0xff] %v3090
      %3123 = vst [vmem:[%s363 + $0x8] sm:$0xff] %v3091
      %3124 = vst [vmem:[%s363 + $0x10] sm:$0xff] %v3092
      %3125 = vst [vmem:[%s363 + $0x18] sm:$0xff] %v3093
      %3126 = vst [vmem:[%s363 + $0x20] sm:$0xff] %v3094
      %3127 = vst [vmem:[%s363 + $0x28] sm:$0xff] %v3095
      %3128 = vst [vmem:[%s363 + $0x30] sm:$0xff] %v3096
      %3129 = vst [vmem:[%s363 + $0x38] sm:$0xff] %v3097
      %s3130 = scalar_lea.vmem %s363, 64
      %3131 = vst [vmem:[%s3130] sm:$0xff] %v3098
      %3132 = vst [vmem:[%s3130 + $0x8] sm:$0xff] %v3099
      %3133 = vst [vmem:[%s3130 + $0x10] sm:$0xff] %v3100
      %3134 = vst [vmem:[%s3130 + $0x18] sm:$0xff] %v3101
      %3135 = vst [vmem:[%s3130 + $0x20] sm:$0xff] %v3102
      %3136 = vst [vmem:[%s3130 + $0x28] sm:$0xff] %v3103
      %3137 = vst [vmem:[%s3130 + $0x30] sm:$0xff] %v3104
      %3138 = vst [vmem:[%s3130 + $0x38] sm:$0xff] %v3105
      %s3139 = scalar_lea.vmem %s363, 128
      %3140 = vst [vmem:[%s3139] sm:$0xff] %v3106
      %3141 = vst [vmem:[%s3139 + $0x8] sm:$0xff] %v3107
      %3142 = vst [vmem:[%s3139 + $0x10] sm:$0xff] %v3108
      %3143 = vst [vmem:[%s3139 + $0x18] sm:$0xff] %v3109
      %3144 = vst [vmem:[%s3139 + $0x20] sm:$0xff] %v3110
      %3145 = vst [vmem:[%s3139 + $0x28] sm:$0xff] %v3111
      %3146 = vst [vmem:[%s3139 + $0x30] sm:$0xff] %v3112
      %3147 = vst [vmem:[%s3139 + $0x38] sm:$0xff] %v3113
      %s3148 = scalar_lea.vmem %s363, 192
      %3149 = vst [vmem:[%s3148] sm:$0xff] %v3114
      %3150 = vst [vmem:[%s3148 + $0x8] sm:$0xff] %v3115
      %3151 = vst [vmem:[%s3148 + $0x10] sm:$0xff] %v3116
      %3152 = vst [vmem:[%s3148 + $0x18] sm:$0xff] %v3117
      %3153 = vst [vmem:[%s3148 + $0x20] sm:$0xff] %v3118
      %3154 = vst [vmem:[%s3148 + $0x28] sm:$0xff] %v3119
      %3155 = vst [vmem:[%s3148 + $0x30] sm:$0xff] %v3120
      %3156 = vst [vmem:[%s3148 + $0x38] sm:$0xff] %v3121
      %s3157 = smul.u32 4, %s21
      %p3158 = scmp.lt.s32.totalorder %s3157, 7
      %s3159 = scalar_select %p3158, %s3157, 7
      %s3160 = smul.addr %s3159, 8
      %s3161 = smul.addr %s3160, 8
      %s3162 = scalar_lea.vmem %s10, %s3161
      // Predicated region
      $region61: #{apply.1} parent=59 // pred_check
        %p3163 = pneg %p254
      $region62: #{apply.1} parent=59 // pred_check_branch
        %3165 = sbr.rel (%p3163) target = $region64
      $region63: #{apply.1} parent=59 // pred_region
        %s3166 = smul.u32 4, %s21
      $region64: #{apply.1} parent=59 // pred_fallthru
        _
    $region60: #{apply.1} parent=5 // pred_fallthru
      _
    %p3167 = scmp.le.s32.totalorder 2, %s16
    // Predicated region
    $region65: #{apply.1} parent=5 // pred_check
      %p3168 = pneg %p3167
    $region66: #{apply.1} parent=5 // pred_check_branch
      %3170 = sbr.rel (%p3168) target = $region68
    $region67: #{apply.1} parent=5 // pred_region
      %s3171 = ssub.s32 %s16, 2
      // Predicated region
      $region69: #{apply.1} parent=67 // pred_check
        %p3172 = pneg %p260
      $region70: #{apply.1} parent=67 // pred_check_branch
        %3174 = sbr.rel (%p3172) target = $region72
      $region71: #{apply.1} parent=67 // pred_region
        %s3175 = smul.u32 4, %s22
        %p3176 = scmp.lt.s32.totalorder %s3175, 7
        %s3177 = scalar_select %p3176, %s3175, 7
        %s3178 = smul.addr %s3177, 8
        %s3179 = smul.addr %s3178, 8
        %s3180 = scalar_lea.vmem %s10, %s3179
      $region72: #{apply.1} parent=67 // pred_fallthru
        _
    $region68: #{apply.1} parent=5 // pred_fallthru
      _
  $region6: #{apply.1} parent=0 // loop_footer
    %s20 = sadd.s32 1, %s16
  $region7: #{apply.1} parent=0 // loop_footer_branch
    %15 = sbr.rel target = $region3
  $region8: #{apply.1} parent=0 // loop_exit
    _

</llo_original>
